<compile_context>
chip_gen: v6e
topology: v6e:2x2x1
jax: 0.10.0
libtpu: 0.0.40
codegen_flags: <defaults>
</compile_context>

<pallas_src>
import functools

import jax
import jax.numpy as jnp
from jax.experimental import pallas as pl
from jax.experimental.pallas import tpu as pltpu


def _round_up(x, m):
    return (x + m - 1) // m * m


def _make_residual_block_kernel(n_stages, C, D, H, W, Mp, compute_dtype):
    K = 27 * C
    # Tap order (kd-major, then kh, then kw) must match the stacked-weight
    # packing in the wrapper.  `off` is the neighbour offset in the UNPADDED
    # fused index d*H*W + h*W + w.
    taps = []
    for kd in range(3):
        for kh in range(3):
            for kw in range(3):
                taps.append((kd, kh, kw, (kd - 1) * H * W + (kh - 1) * W + (kw - 1)))

    def kernel(x_ref, w_ref, b_ref, mrow_ref, o_ref, stk_ref, act_ref):
        # x_ref:    (1, C, Mp) f32            unpadded fused input (read once)
        # w_ref:    (n_stages, C, K)          stacked weights, compute_dtype (resident)
        # b_ref:    (n_stages, C, 1) f32      biases (resident)
        # mrow_ref: (8, Mp) f32               boundary rows [d>=1, d<=D-2, h>=1,
        #                                      h<=H-2, w>=1, w<=W-2, 1, 1] (resident)
        # o_ref:    (1, C, Mp) f32            interior-only output
        # stk_ref:  (K, Mp) compute_dtype     VMEM scratch: stacked im2col RHS
        # act_ref:  (C, Mp) f32               VMEM scratch: inter-stage activation
        x = x_ref[0]                      # (C, Mp) f32 -- exact residual source
        mrows = mrow_ref[...]             # (8, Mp) f32

        y = None
        for s in range(n_stages):
            src = x if s == 0 else act_ref[...]          # f32, lives in vregs
            # Build the stacked (27*C, Mp) RHS: one XLU roll + (<=2) mask-row
            # multiplies per tap.  Out-of-volume neighbours are zeroed by the
            # mask, which implements the conv's zero padding without ever
            # materializing a padded volume.
            for t, (kd, kh, kw, off) in enumerate(taps):
                blk = src if off == 0 else pltpu.roll(src, (-off) % Mp, axis=1)
                m = None
                for k, lo_row, hi_row in ((kd, 0, 1), (kh, 2, 3), (kw, 4, 5)):
                    if k == 1:
                        continue            # centre along this axis: always valid
                    row = mrows[lo_row:lo_row + 1, :] if k == 0 else \
                          mrows[hi_row:hi_row + 1, :]
                    m = row if m is None else m * row
                if m is not None:
                    blk = blk * m
                # MXU operands are cast to compute_dtype only here.
                stk_ref[t * C:(t + 1) * C, :] = blk.astype(stk_ref.dtype)

            # One MXU matmul per stage: (C, 27*C) x (27*C, Mp), f32 accumulate.
            y = jnp.dot(w_ref[s], stk_ref[...],
                        preferred_element_type=jnp.float32)
            y = y + b_ref[s]                               # (C,1) lane-broadcast
            if s < n_stages - 1:
                act_ref[...] = jnp.maximum(y, 0.0)         # stays f32 in VMEM

        # Residual add with the original (never-cast) f32 input, final ReLU,
        # single lane-dense f32 store of the interior-only output.
        o_ref[0] = jnp.maximum(y + x, 0.0).astype(o_ref.dtype)

    return kernel


@functools.partial(jax.jit, static_argnames=("compute_dtype",))
def residual_conv_block_forward(x_ncdhw, params, *, compute_dtype=jnp.bfloat16):
    """ResidualConvBlock(n_stages, C, C, normalization='none').forward.

    x_ncdhw: (N, C, D, H, W) float32 (PyTorch NCDHW layout)
    params:  list of (weight (3,3,3,Cin,Cout) "DHWIO", bias (Cout,)) per stage
    """
    N, C, D, H, W = x_ncdhw.shape
    n_stages = len(params)
    assert n_stages >= 1
    for (w, b) in params:
        assert w.shape == (3, 3, 3, C, C) and b.shape == (C,), (
            "residual add requires n_filters_in == n_filters_out")

    M = D * H * W
    Mp = _round_up(M, 128)            # lane-align the fused spatial axis
    K = 27 * C

    # Free (bitcast) reshape of the contiguous NCDHW input; zero-pad the fused
    # axis only when it is not already a multiple of 128 (the demo shapes are).
    xf = x_ncdhw.reshape(N, C, M).astype(jnp.float32)
    if Mp != M:
        xf = jnp.pad(xf, ((0, 0), (0, 0), (0, Mp - M)))

    # Stacked per-stage weights: row t*C+cin of the RHS holds tap t / channel
    # cin, so W_stacked[cout, t*C+cin] = w[kd,kh,kw,cin,cout].
    w_all = jnp.stack([
        w.reshape(27, C, C).transpose(2, 0, 1).reshape(C, K) for w, _ in params
    ]).astype(compute_dtype)                                  # (n_stages, C, K)
    b_all = jnp.stack([b for _, b in params]).astype(jnp.float32)
    b_all = b_all.reshape(n_stages, C, 1)

    # Six boundary-validity rows over the unpadded fused volume (two padding
    # rows of ones for sublane alignment).  Input-independent -> constant
    # folded at compile time, resident in VMEM.
    dd = jax.lax.broadcasted_iota(jnp.int32, (D, H, W), 0)
    hh = jax.lax.broadcasted_iota(jnp.int32, (D, H, W), 1)
    ww = jax.lax.broadcasted_iota(jnp.int32, (D, H, W), 2)
    rows = jnp.stack([dd >= 1, dd <= D - 2, hh >= 1, hh <= H - 2,
                      ww >= 1, ww <= W - 2,
                      jnp.ones((D, H, W), bool), jnp.ones((D, H, W), bool)])
    rows = rows.reshape(8, M).astype(jnp.float32)
    if Mp != M:
        rows = jnp.pad(rows, ((0, 0), (0, Mp - M)))

    kernel = _make_residual_block_kernel(n_stages, C, D, H, W, Mp, compute_dtype)

    out = pl.pallas_call(
        kernel,
        out_shape=jax.ShapeDtypeStruct((N, C, Mp), jnp.float32),
        grid_spec=pltpu.PrefetchScalarGridSpec(
            num_scalar_prefetch=0,
            grid=(N,),
            in_specs=[
                pl.BlockSpec((1, C, Mp), lambda n: (n, 0, 0)),
                pl.BlockSpec((n_stages, C, K), lambda n: (0, 0, 0)),
                pl.BlockSpec((n_stages, C, 1), lambda n: (0, 0, 0)),
                pl.BlockSpec((8, Mp), lambda n: (0, 0)),
            ],
            out_specs=pl.BlockSpec((1, C, Mp), lambda n: (n, 0, 0)),
            scratch_shapes=[pltpu.VMEM((K, Mp), compute_dtype),
                            pltpu.VMEM((C, Mp), jnp.float32)],
        ),
        compiler_params=pltpu.CompilerParams(
            dimension_semantics=("parallel",),   # batch sharded over v7x's 2 TCs
            vmem_limit_bytes=32 * 1024 * 1024),  # cap only; demo working set ~1 MiB
    )(xf, w_all, b_all, rows)

    if Mp != M:
        out = out[:, :, :M]
    return out.reshape(N, C, D, H, W)


def init_residual_conv_block_params(key, n_stages, n_filters_in, n_filters_out):
    """Deterministic params mirroring nn.Conv3d(cin, cout, 3, padding=1)."""
    assert n_filters_in == n_filters_out, "residual add needs matching channels"
    params = []
    cin = n_filters_in
    for s in range(n_stages):
        kw_, kb_ = jax.random.split(jax.random.fold_in(key, s))
        fan_in = cin * 27
        bound = 1.0 / (fan_in ** 0.5)          # PyTorch default uniform bound
        w = jax.random.uniform(kw_, (3, 3, 3, cin, n_filters_out),
                               jnp.float32, -bound, bound)
        b = jax.random.uniform(kb_, (n_filters_out,), jnp.float32, -bound, bound)
        params.append((w, b))
        cin = n_filters_out
    return params


def _reference_forward(x_ncdhw, params):
    n_stages = len(params)
    y = x_ncdhw
    for s, (w, b) in enumerate(params):
        y = jax.lax.conv_general_dilated(
            y, w, window_strides=(1, 1, 1), padding=((1, 1),) * 3,
            dimension_numbers=("NCDHW", "DHWIO", "NCDHW"),
            precision=jax.lax.Precision.HIGHEST)
        y = y + b.reshape(1, -1, 1, 1, 1)
        if s != n_stages - 1:
            y = jnp.maximum(y, 0.0)
    return jnp.maximum(y + x_ncdhw, 0.0)


if __name__ == "__main__":
    key = jax.random.PRNGKey(0)
    n_stages, C = 2, 8
    N, D, H, W = 4, 8, 8, 8                   # N=4 -> >=2 grid steps per core

    kx, kp = jax.random.split(key)
    x = jax.random.normal(kx, (N, C, D, H, W), jnp.float32)   # PyTorch NCDHW
    params = init_residual_conv_block_params(kp, n_stages, C, C)

    ref = jax.block_until_ready(_reference_forward(x, params))

    # Default path: bf16 MXU operands (native on v6e/v7x), f32 everywhere else.
    out_bf16 = jax.block_until_ready(residual_conv_block_forward(x, params))
    assert out_bf16.shape == (N, C, D, H, W), out_bf16.shape
    assert bool(jnp.allclose(out_bf16, ref, atol=5e-2, rtol=5e-2)), float(
        jnp.max(jnp.abs(out_bf16 - ref)))

    # Exact path: f32 operands, checked against the HIGHEST-precision reference.
    out_f32 = jax.block_until_ready(
        residual_conv_block_forward(x, params, compute_dtype=jnp.float32))
    assert bool(jnp.allclose(out_f32, ref, atol=2e-3, rtol=1e-2)), float(
        jnp.max(jnp.abs(out_f32 - ref)))

    print("KERNEL_OK")
</pallas_src>

<mosaic_0001>
module attributes {stable_mosaic.version = 11 : i64} {
  func.func @kernel(%arg0: i32, %arg1: memref<1x8x512xf32, #tpu.memory_space<vmem>>, %arg2: memref<2x8x216xbf16, #tpu.memory_space<vmem>>, %arg3: memref<2x8x1xf32, #tpu.memory_space<vmem>>, %arg4: memref<8x512xf32, #tpu.memory_space<vmem>>, %arg5: memref<1x8x512xf32, #tpu.memory_space<vmem>>, %arg6: memref<216x512xbf16, #tpu.memory_space<vmem>>, %arg7: memref<8x512xf32, #tpu.memory_space<vmem>>) attributes {dimension_semantics = [#tpu.dimension_semantics<parallel>], iteration_bounds = array<i64: 4>, scalar_prefetch = 0 : i64, scratch_operands = 2 : i64, tpu.core_type = #tpu.core_type<tc>, window_params = [{transform_indices = @transform_0, window_bounds = array<i64: 1, 8, 512>}, {pipeline_mode = #tpu.pipeline_mode<synchronous>, transform_indices = @transform_1, window_bounds = array<i64: 2, 8, 216>}, {pipeline_mode = #tpu.pipeline_mode<synchronous>, transform_indices = @transform_2, window_bounds = array<i64: 2, 8, 1>}, {pipeline_mode = #tpu.pipeline_mode<synchronous>, transform_indices = @transform_3, window_bounds = array<i64: 8, 512>}, {transform_indices = @transform_4, window_bounds = array<i64: 1, 8, 512>}]} {
    %c0 = arith.constant 0 : index
    %c0_0 = arith.constant 0 : index
    %c0_1 = arith.constant 0 : index
    %0 = vector.load %arg1[%c0, %c0_0, %c0_1] : memref<1x8x512xf32, #tpu.memory_space<vmem>>, vector<1x8x512xf32>
    %1 = vector.shape_cast %0 : vector<1x8x512xf32> to vector<8x512xf32>
    %c0_2 = arith.constant 0 : index
    %c0_3 = arith.constant 0 : index
    %2 = vector.load %arg4[%c0_2, %c0_3] : memref<8x512xf32, #tpu.memory_space<vmem>>, vector<8x512xf32>
    %c73_i32 = arith.constant 73 : i32
    %3 = tpu.dynamic_rotate %1 by %c73_i32 dim 1 : vector<8x512xf32>, i32 -> vector<8x512xf32>
    %4 = vector.extract_strided_slice %2 {offsets = [0, 0], sizes = [1, 512], strides = [1, 1]} : vector<8x512xf32> to vector<1x512xf32>
    %5 = vector.extract_strided_slice %2 {offsets = [2, 0], sizes = [1, 512], strides = [1, 1]} : vector<8x512xf32> to vector<1x512xf32>
    %6 = arith.mulf %4, %5 : vector<1x512xf32>
    %7 = vector.extract_strided_slice %2 {offsets = [4, 0], sizes = [1, 512], strides = [1, 1]} : vector<8x512xf32> to vector<1x512xf32>
    %8 = arith.mulf %6, %7 : vector<1x512xf32>
    %9 = vector.broadcast %8 : vector<1x512xf32> to vector<8x512xf32>
    %10 = arith.mulf %3, %9 : vector<8x512xf32>
    %11 = arith.truncf %10 : vector<8x512xf32> to vector<8x512xbf16>
    %c0_4 = arith.constant 0 : index
    %c0_5 = arith.constant 0 : index
    %12 = vector.load %arg6[%c0_4, %c0_5] : memref<216x512xbf16, #tpu.memory_space<vmem>>, vector<8x512xbf16>
    tpu.vector_store %arg6[%c0_4, %c0_5], %11 {strides = array<i32>} : memref<216x512xbf16, #tpu.memory_space<vmem>>, vector<8x512xbf16>,
    %c72_i32 = arith.constant 72 : i32
    %13 = tpu.dynamic_rotate %1 by %c72_i32 dim 1 : vector<8x512xf32>, i32 -> vector<8x512xf32>
    %14 = vector.extract_strided_slice %2 {offsets = [0, 0], sizes = [1, 512], strides = [1, 1]} : vector<8x512xf32> to vector<1x512xf32>
    %15 = vector.extract_strided_slice %2 {offsets = [2, 0], sizes = [1, 512], strides = [1, 1]} : vector<8x512xf32> to vector<1x512xf32>
    %16 = arith.mulf %14, %15 : vector<1x512xf32>
    %17 = vector.broadcast %16 : vector<1x512xf32> to vector<8x512xf32>
    %18 = arith.mulf %13, %17 : vector<8x512xf32>
    %19 = arith.truncf %18 : vector<8x512xf32> to vector<8x512xbf16>
    %c8 = arith.constant 8 : index
    %c0_6 = arith.constant 0 : index
    %20 = vector.load %arg6[%c8, %c0_6] : memref<216x512xbf16, #tpu.memory_space<vmem>>, vector<8x512xbf16>
    tpu.vector_store %arg6[%c8, %c0_6], %19 {strides = array<i32>} : memref<216x512xbf16, #tpu.memory_space<vmem>>, vector<8x512xbf16>,
    %c71_i32 = arith.constant 71 : i32
    %21 = tpu.dynamic_rotate %1 by %c71_i32 dim 1 : vector<8x512xf32>, i32 -> vector<8x512xf32>
    %22 = vector.extract_strided_slice %2 {offsets = [0, 0], sizes = [1, 512], strides = [1, 1]} : vector<8x512xf32> to vector<1x512xf32>
    %23 = vector.extract_strided_slice %2 {offsets = [2, 0], sizes = [1, 512], strides = [1, 1]} : vector<8x512xf32> to vector<1x512xf32>
    %24 = arith.mulf %22, %23 : vector<1x512xf32>
    %25 = vector.extract_strided_slice %2 {offsets = [5, 0], sizes = [1, 512], strides = [1, 1]} : vector<8x512xf32> to vector<1x512xf32>
    %26 = arith.mulf %24, %25 : vector<1x512xf32>
    %27 = vector.broadcast %26 : vector<1x512xf32> to vector<8x512xf32>
    %28 = arith.mulf %21, %27 : vector<8x512xf32>
    %29 = arith.truncf %28 : vector<8x512xf32> to vector<8x512xbf16>
    %c16 = arith.constant 16 : index
    %c0_7 = arith.constant 0 : index
    %30 = vector.load %arg6[%c16, %c0_7] : memref<216x512xbf16, #tpu.memory_space<vmem>>, vector<8x512xbf16>
    tpu.vector_store %arg6[%c16, %c0_7], %29 {strides = array<i32>} : memref<216x512xbf16, #tpu.memory_space<vmem>>, vector<8x512xbf16>,
    %c65_i32 = arith.constant 65 : i32
    %31 = tpu.dynamic_rotate %1 by %c65_i32 dim 1 : vector<8x512xf32>, i32 -> vector<8x512xf32>
    %32 = vector.extract_strided_slice %2 {offsets = [0, 0], sizes = [1, 512], strides = [1, 1]} : vector<8x512xf32> to vector<1x512xf32>
    %33 = vector.extract_strided_slice %2 {offsets = [4, 0], sizes = [1, 512], strides = [1, 1]} : vector<8x512xf32> to vector<1x512xf32>
    %34 = arith.mulf %32, %33 : vector<1x512xf32>
    %35 = vector.broadcast %34 : vector<1x512xf32> to vector<8x512xf32>
    %36 = arith.mulf %31, %35 : vector<8x512xf32>
    %37 = arith.truncf %36 : vector<8x512xf32> to vector<8x512xbf16>
    %c24 = arith.constant 24 : index
    %c0_8 = arith.constant 0 : index
    %38 = vector.load %arg6[%c24, %c0_8] : memref<216x512xbf16, #tpu.memory_space<vmem>>, vector<8x512xbf16>
    tpu.vector_store %arg6[%c24, %c0_8], %37 {strides = array<i32>} : memref<216x512xbf16, #tpu.memory_space<vmem>>, vector<8x512xbf16>,
    %c64_i32 = arith.constant 64 : i32
    %39 = tpu.dynamic_rotate %1 by %c64_i32 dim 1 : vector<8x512xf32>, i32 -> vector<8x512xf32>
    %40 = vector.extract_strided_slice %2 {offsets = [0, 0], sizes = [1, 512], strides = [1, 1]} : vector<8x512xf32> to vector<1x512xf32>
    %41 = vector.broadcast %40 : vector<1x512xf32> to vector<8x512xf32>
    %42 = arith.mulf %39, %41 : vector<8x512xf32>
    %43 = arith.truncf %42 : vector<8x512xf32> to vector<8x512xbf16>
    %c32 = arith.constant 32 : index
    %c0_9 = arith.constant 0 : index
    %44 = vector.load %arg6[%c32, %c0_9] : memref<216x512xbf16, #tpu.memory_space<vmem>>, vector<8x512xbf16>
    tpu.vector_store %arg6[%c32, %c0_9], %43 {strides = array<i32>} : memref<216x512xbf16, #tpu.memory_space<vmem>>, vector<8x512xbf16>,
    %c63_i32 = arith.constant 63 : i32
    %45 = tpu.dynamic_rotate %1 by %c63_i32 dim 1 : vector<8x512xf32>, i32 -> vector<8x512xf32>
    %46 = vector.extract_strided_slice %2 {offsets = [0, 0], sizes = [1, 512], strides = [1, 1]} : vector<8x512xf32> to vector<1x512xf32>
    %47 = vector.extract_strided_slice %2 {offsets = [5, 0], sizes = [1, 512], strides = [1, 1]} : vector<8x512xf32> to vector<1x512xf32>
    %48 = arith.mulf %46, %47 : vector<1x512xf32>
    %49 = vector.broadcast %48 : vector<1x512xf32> to vector<8x512xf32>
    %50 = arith.mulf %45, %49 : vector<8x512xf32>
    %51 = arith.truncf %50 : vector<8x512xf32> to vector<8x512xbf16>
    %c40 = arith.constant 40 : index
    %c0_10 = arith.constant 0 : index
    %52 = vector.load %arg6[%c40, %c0_10] : memref<216x512xbf16, #tpu.memory_space<vmem>>, vector<8x512xbf16>
    tpu.vector_store %arg6[%c40, %c0_10], %51 {strides = array<i32>} : memref<216x512xbf16, #tpu.memory_space<vmem>>, vector<8x512xbf16>,
    %c57_i32 = arith.constant 57 : i32
    %53 = tpu.dynamic_rotate %1 by %c57_i32 dim 1 : vector<8x512xf32>, i32 -> vector<8x512xf32>
    %54 = vector.extract_strided_slice %2 {offsets = [0, 0], sizes = [1, 512], strides = [1, 1]} : vector<8x512xf32> to vector<1x512xf32>
    %55 = vector.extract_strided_slice %2 {offsets = [3, 0], sizes = [1, 512], strides = [1, 1]} : vector<8x512xf32> to vector<1x512xf32>
    %56 = arith.mulf %54, %55 : vector<1x512xf32>
    %57 = vector.extract_strided_slice %2 {offsets = [4, 0], sizes = [1, 512], strides = [1, 1]} : vector<8x512xf32> to vector<1x512xf32>
    %58 = arith.mulf %56, %57 : vector<1x512xf32>
    %59 = vector.broadcast %58 : vector<1x512xf32> to vector<8x512xf32>
    %60 = arith.mulf %53, %59 : vector<8x512xf32>
    %61 = arith.truncf %60 : vector<8x512xf32> to vector<8x512xbf16>
    %c48 = arith.constant 48 : index
    %c0_11 = arith.constant 0 : index
    %62 = vector.load %arg6[%c48, %c0_11] : memref<216x512xbf16, #tpu.memory_space<vmem>>, vector<8x512xbf16>
    tpu.vector_store %arg6[%c48, %c0_11], %61 {strides = array<i32>} : memref<216x512xbf16, #tpu.memory_space<vmem>>, vector<8x512xbf16>,
    %c56_i32 = arith.constant 56 : i32
    %63 = tpu.dynamic_rotate %1 by %c56_i32 dim 1 : vector<8x512xf32>, i32 -> vector<8x512xf32>
    %64 = vector.extract_strided_slice %2 {offsets = [0, 0], sizes = [1, 512], strides = [1, 1]} : vector<8x512xf32> to vector<1x512xf32>
    %65 = vector.extract_strided_slice %2 {offsets = [3, 0], sizes = [1, 512], strides = [1, 1]} : vector<8x512xf32> to vector<1x512xf32>
    %66 = arith.mulf %64, %65 : vector<1x512xf32>
    %67 = vector.broadcast %66 : vector<1x512xf32> to vector<8x512xf32>
    %68 = arith.mulf %63, %67 : vector<8x512xf32>
    %69 = arith.truncf %68 : vector<8x512xf32> to vector<8x512xbf16>
    %c56 = arith.constant 56 : index
    %c0_12 = arith.constant 0 : index
    %70 = vector.load %arg6[%c56, %c0_12] : memref<216x512xbf16, #tpu.memory_space<vmem>>, vector<8x512xbf16>
    tpu.vector_store %arg6[%c56, %c0_12], %69 {strides = array<i32>} : memref<216x512xbf16, #tpu.memory_space<vmem>>, vector<8x512xbf16>,
    %c55_i32 = arith.constant 55 : i32
    %71 = tpu.dynamic_rotate %1 by %c55_i32 dim 1 : vector<8x512xf32>, i32 -> vector<8x512xf32>
    %72 = vector.extract_strided_slice %2 {offsets = [0, 0], sizes = [1, 512], strides = [1, 1]} : vector<8x512xf32> to vector<1x512xf32>
    %73 = vector.extract_strided_slice %2 {offsets = [3, 0], sizes = [1, 512], strides = [1, 1]} : vector<8x512xf32> to vector<1x512xf32>
    %74 = arith.mulf %72, %73 : vector<1x512xf32>
    %75 = vector.extract_strided_slice %2 {offsets = [5, 0], sizes = [1, 512], strides = [1, 1]} : vector<8x512xf32> to vector<1x512xf32>
    %76 = arith.mulf %74, %75 : vector<1x512xf32>
    %77 = vector.broadcast %76 : vector<1x512xf32> to vector<8x512xf32>
    %78 = arith.mulf %71, %77 : vector<8x512xf32>
    %79 = arith.truncf %78 : vector<8x512xf32> to vector<8x512xbf16>
    %c64 = arith.constant 64 : index
    %c0_13 = arith.constant 0 : index
    %80 = vector.load %arg6[%c64, %c0_13] : memref<216x512xbf16, #tpu.memory_space<vmem>>, vector<8x512xbf16>
    tpu.vector_store %arg6[%c64, %c0_13], %79 {strides = array<i32>} : memref<216x512xbf16, #tpu.memory_space<vmem>>, vector<8x512xbf16>,
    %c9_i32 = arith.constant 9 : i32
    %81 = tpu.dynamic_rotate %1 by %c9_i32 dim 1 : vector<8x512xf32>, i32 -> vector<8x512xf32>
    %82 = vector.extract_strided_slice %2 {offsets = [2, 0], sizes = [1, 512], strides = [1, 1]} : vector<8x512xf32> to vector<1x512xf32>
    %83 = vector.extract_strided_slice %2 {offsets = [4, 0], sizes = [1, 512], strides = [1, 1]} : vector<8x512xf32> to vector<1x512xf32>
    %84 = arith.mulf %82, %83 : vector<1x512xf32>
    %85 = vector.broadcast %84 : vector<1x512xf32> to vector<8x512xf32>
    %86 = arith.mulf %81, %85 : vector<8x512xf32>
    %87 = arith.truncf %86 : vector<8x512xf32> to vector<8x512xbf16>
    %c72 = arith.constant 72 : index
    %c0_14 = arith.constant 0 : index
    %88 = vector.load %arg6[%c72, %c0_14] : memref<216x512xbf16, #tpu.memory_space<vmem>>, vector<8x512xbf16>
    tpu.vector_store %arg6[%c72, %c0_14], %87 {strides = array<i32>} : memref<216x512xbf16, #tpu.memory_space<vmem>>, vector<8x512xbf16>,
    %c8_i32 = arith.constant 8 : i32
    %89 = tpu.dynamic_rotate %1 by %c8_i32 dim 1 : vector<8x512xf32>, i32 -> vector<8x512xf32>
    %90 = vector.extract_strided_slice %2 {offsets = [2, 0], sizes = [1, 512], strides = [1, 1]} : vector<8x512xf32> to vector<1x512xf32>
    %91 = vector.broadcast %90 : vector<1x512xf32> to vector<8x512xf32>
    %92 = arith.mulf %89, %91 : vector<8x512xf32>
    %93 = arith.truncf %92 : vector<8x512xf32> to vector<8x512xbf16>
    %c80 = arith.constant 80 : index
    %c0_15 = arith.constant 0 : index
    %94 = vector.load %arg6[%c80, %c0_15] : memref<216x512xbf16, #tpu.memory_space<vmem>>, vector<8x512xbf16>
    tpu.vector_store %arg6[%c80, %c0_15], %93 {strides = array<i32>} : memref<216x512xbf16, #tpu.memory_space<vmem>>, vector<8x512xbf16>,
    %c7_i32 = arith.constant 7 : i32
    %95 = tpu.dynamic_rotate %1 by %c7_i32 dim 1 : vector<8x512xf32>, i32 -> vector<8x512xf32>
    %96 = vector.extract_strided_slice %2 {offsets = [2, 0], sizes = [1, 512], strides = [1, 1]} : vector<8x512xf32> to vector<1x512xf32>
    %97 = vector.extract_strided_slice %2 {offsets = [5, 0], sizes = [1, 512], strides = [1, 1]} : vector<8x512xf32> to vector<1x512xf32>
    %98 = arith.mulf %96, %97 : vector<1x512xf32>
    %99 = vector.broadcast %98 : vector<1x512xf32> to vector<8x512xf32>
    %100 = arith.mulf %95, %99 : vector<8x512xf32>
    %101 = arith.truncf %100 : vector<8x512xf32> to vector<8x512xbf16>
    %c88 = arith.constant 88 : index
    %c0_16 = arith.constant 0 : index
    %102 = vector.load %arg6[%c88, %c0_16] : memref<216x512xbf16, #tpu.memory_space<vmem>>, vector<8x512xbf16>
    tpu.vector_store %arg6[%c88, %c0_16], %101 {strides = array<i32>} : memref<216x512xbf16, #tpu.memory_space<vmem>>, vector<8x512xbf16>,
    %c1_i32 = arith.constant 1 : i32
    %103 = tpu.dynamic_rotate %1 by %c1_i32 dim 1 : vector<8x512xf32>, i32 -> vector<8x512xf32>
    %104 = vector.extract_strided_slice %2 {offsets = [4, 0], sizes = [1, 512], strides = [1, 1]} : vector<8x512xf32> to vector<1x512xf32>
    %105 = vector.broadcast %104 : vector<1x512xf32> to vector<8x512xf32>
    %106 = arith.mulf %103, %105 : vector<8x512xf32>
    %107 = arith.truncf %106 : vector<8x512xf32> to vector<8x512xbf16>
    %c96 = arith.constant 96 : index
    %c0_17 = arith.constant 0 : index
    %108 = vector.load %arg6[%c96, %c0_17] : memref<216x512xbf16, #tpu.memory_space<vmem>>, vector<8x512xbf16>
    tpu.vector_store %arg6[%c96, %c0_17], %107 {strides = array<i32>} : memref<216x512xbf16, #tpu.memory_space<vmem>>, vector<8x512xbf16>,
    %109 = arith.truncf %1 : vector<8x512xf32> to vector<8x512xbf16>
    %c104 = arith.constant 104 : index
    %c0_18 = arith.constant 0 : index
    %110 = vector.load %arg6[%c104, %c0_18] : memref<216x512xbf16, #tpu.memory_space<vmem>>, vector<8x512xbf16>
    tpu.vector_store %arg6[%c104, %c0_18], %109 {strides = array<i32>} : memref<216x512xbf16, #tpu.memory_space<vmem>>, vector<8x512xbf16>,
    %c511_i32 = arith.constant 511 : i32
    %111 = tpu.dynamic_rotate %1 by %c511_i32 dim 1 : vector<8x512xf32>, i32 -> vector<8x512xf32>
    %112 = vector.extract_strided_slice %2 {offsets = [5, 0], sizes = [1, 512], strides = [1, 1]} : vector<8x512xf32> to vector<1x512xf32>
    %113 = vector.broadcast %112 : vector<1x512xf32> to vector<8x512xf32>
    %114 = arith.mulf %111, %113 : vector<8x512xf32>
    %115 = arith.truncf %114 : vector<8x512xf32> to vector<8x512xbf16>
    %c112 = arith.constant 112 : index
    %c0_19 = arith.constant 0 : index
    %116 = vector.load %arg6[%c112, %c0_19] : memref<216x512xbf16, #tpu.memory_space<vmem>>, vector<8x512xbf16>
    tpu.vector_store %arg6[%c112, %c0_19], %115 {strides = array<i32>} : memref<216x512xbf16, #tpu.memory_space<vmem>>, vector<8x512xbf16>,
    %c505_i32 = arith.constant 505 : i32
    %117 = tpu.dynamic_rotate %1 by %c505_i32 dim 1 : vector<8x512xf32>, i32 -> vector<8x512xf32>
    %118 = vector.extract_strided_slice %2 {offsets = [3, 0], sizes = [1, 512], strides = [1, 1]} : vector<8x512xf32> to vector<1x512xf32>
    %119 = vector.extract_strided_slice %2 {offsets = [4, 0], sizes = [1, 512], strides = [1, 1]} : vector<8x512xf32> to vector<1x512xf32>
    %120 = arith.mulf %118, %119 : vector<1x512xf32>
    %121 = vector.broadcast %120 : vector<1x512xf32> to vector<8x512xf32>
    %122 = arith.mulf %117, %121 : vector<8x512xf32>
    %123 = arith.truncf %122 : vector<8x512xf32> to vector<8x512xbf16>
    %c120 = arith.constant 120 : index
    %c0_20 = arith.constant 0 : index
    %124 = vector.load %arg6[%c120, %c0_20] : memref<216x512xbf16, #tpu.memory_space<vmem>>, vector<8x512xbf16>
    tpu.vector_store %arg6[%c120, %c0_20], %123 {strides = array<i32>} : memref<216x512xbf16, #tpu.memory_space<vmem>>, vector<8x512xbf16>,
    %c504_i32 = arith.constant 504 : i32
    %125 = tpu.dynamic_rotate %1 by %c504_i32 dim 1 : vector<8x512xf32>, i32 -> vector<8x512xf32>
    %126 = vector.extract_strided_slice %2 {offsets = [3, 0], sizes = [1, 512], strides = [1, 1]} : vector<8x512xf32> to vector<1x512xf32>
    %127 = vector.broadcast %126 : vector<1x512xf32> to vector<8x512xf32>
    %128 = arith.mulf %125, %127 : vector<8x512xf32>
    %129 = arith.truncf %128 : vector<8x512xf32> to vector<8x512xbf16>
    %c128 = arith.constant 128 : index
    %c0_21 = arith.constant 0 : index
    %130 = vector.load %arg6[%c128, %c0_21] : memref<216x512xbf16, #tpu.memory_space<vmem>>, vector<8x512xbf16>
    tpu.vector_store %arg6[%c128, %c0_21], %129 {strides = array<i32>} : memref<216x512xbf16, #tpu.memory_space<vmem>>, vector<8x512xbf16>,
    %c503_i32 = arith.constant 503 : i32
    %131 = tpu.dynamic_rotate %1 by %c503_i32 dim 1 : vector<8x512xf32>, i32 -> vector<8x512xf32>
    %132 = vector.extract_strided_slice %2 {offsets = [3, 0], sizes = [1, 512], strides = [1, 1]} : vector<8x512xf32> to vector<1x512xf32>
    %133 = vector.extract_strided_slice %2 {offsets = [5, 0], sizes = [1, 512], strides = [1, 1]} : vector<8x512xf32> to vector<1x512xf32>
    %134 = arith.mulf %132, %133 : vector<1x512xf32>
    %135 = vector.broadcast %134 : vector<1x512xf32> to vector<8x512xf32>
    %136 = arith.mulf %131, %135 : vector<8x512xf32>
    %137 = arith.truncf %136 : vector<8x512xf32> to vector<8x512xbf16>
    %c136 = arith.constant 136 : index
    %c0_22 = arith.constant 0 : index
    %138 = vector.load %arg6[%c136, %c0_22] : memref<216x512xbf16, #tpu.memory_space<vmem>>, vector<8x512xbf16>
    tpu.vector_store %arg6[%c136, %c0_22], %137 {strides = array<i32>} : memref<216x512xbf16, #tpu.memory_space<vmem>>, vector<8x512xbf16>,
    %c457_i32 = arith.constant 457 : i32
    %139 = tpu.dynamic_rotate %1 by %c457_i32 dim 1 : vector<8x512xf32>, i32 -> vector<8x512xf32>
    %140 = vector.extract_strided_slice %2 {offsets = [1, 0], sizes = [1, 512], strides = [1, 1]} : vector<8x512xf32> to vector<1x512xf32>
    %141 = vector.extract_strided_slice %2 {offsets = [2, 0], sizes = [1, 512], strides = [1, 1]} : vector<8x512xf32> to vector<1x512xf32>
    %142 = arith.mulf %140, %141 : vector<1x512xf32>
    %143 = vector.extract_strided_slice %2 {offsets = [4, 0], sizes = [1, 512], strides = [1, 1]} : vector<8x512xf32> to vector<1x512xf32>
    %144 = arith.mulf %142, %143 : vector<1x512xf32>
    %145 = vector.broadcast %144 : vector<1x512xf32> to vector<8x512xf32>
    %146 = arith.mulf %139, %145 : vector<8x512xf32>
    %147 = arith.truncf %146 : vector<8x512xf32> to vector<8x512xbf16>
    %c144 = arith.constant 144 : index
    %c0_23 = arith.constant 0 : index
    %148 = vector.load %arg6[%c144, %c0_23] : memref<216x512xbf16, #tpu.memory_space<vmem>>, vector<8x512xbf16>
    tpu.vector_store %arg6[%c144, %c0_23], %147 {strides = array<i32>} : memref<216x512xbf16, #tpu.memory_space<vmem>>, vector<8x512xbf16>,
    %c456_i32 = arith.constant 456 : i32
    %149 = tpu.dynamic_rotate %1 by %c456_i32 dim 1 : vector<8x512xf32>, i32 -> vector<8x512xf32>
    %150 = vector.extract_strided_slice %2 {offsets = [1, 0], sizes = [1, 512], strides = [1, 1]} : vector<8x512xf32> to vector<1x512xf32>
    %151 = vector.extract_strided_slice %2 {offsets = [2, 0], sizes = [1, 512], strides = [1, 1]} : vector<8x512xf32> to vector<1x512xf32>
    %152 = arith.mulf %150, %151 : vector<1x512xf32>
    %153 = vector.broadcast %152 : vector<1x512xf32> to vector<8x512xf32>
    %154 = arith.mulf %149, %153 : vector<8x512xf32>
    %155 = arith.truncf %154 : vector<8x512xf32> to vector<8x512xbf16>
    %c152 = arith.constant 152 : index
    %c0_24 = arith.constant 0 : index
    %156 = vector.load %arg6[%c152, %c0_24] : memref<216x512xbf16, #tpu.memory_space<vmem>>, vector<8x512xbf16>
    tpu.vector_store %arg6[%c152, %c0_24], %155 {strides = array<i32>} : memref<216x512xbf16, #tpu.memory_space<vmem>>, vector<8x512xbf16>,
    %c455_i32 = arith.constant 455 : i32
    %157 = tpu.dynamic_rotate %1 by %c455_i32 dim 1 : vector<8x512xf32>, i32 -> vector<8x512xf32>
    %158 = vector.extract_strided_slice %2 {offsets = [1, 0], sizes = [1, 512], strides = [1, 1]} : vector<8x512xf32> to vector<1x512xf32>
    %159 = vector.extract_strided_slice %2 {offsets = [2, 0], sizes = [1, 512], strides = [1, 1]} : vector<8x512xf32> to vector<1x512xf32>
    %160 = arith.mulf %158, %159 : vector<1x512xf32>
    %161 = vector.extract_strided_slice %2 {offsets = [5, 0], sizes = [1, 512], strides = [1, 1]} : vector<8x512xf32> to vector<1x512xf32>
    %162 = arith.mulf %160, %161 : vector<1x512xf32>
    %163 = vector.broadcast %162 : vector<1x512xf32> to vector<8x512xf32>
    %164 = arith.mulf %157, %163 : vector<8x512xf32>
    %165 = arith.truncf %164 : vector<8x512xf32> to vector<8x512xbf16>
    %c160 = arith.constant 160 : index
    %c0_25 = arith.constant 0 : index
    %166 = vector.load %arg6[%c160, %c0_25] : memref<216x512xbf16, #tpu.memory_space<vmem>>, vector<8x512xbf16>
    tpu.vector_store %arg6[%c160, %c0_25], %165 {strides = array<i32>} : memref<216x512xbf16, #tpu.memory_space<vmem>>, vector<8x512xbf16>,
    %c449_i32 = arith.constant 449 : i32
    %167 = tpu.dynamic_rotate %1 by %c449_i32 dim 1 : vector<8x512xf32>, i32 -> vector<8x512xf32>
    %168 = vector.extract_strided_slice %2 {offsets = [1, 0], sizes = [1, 512], strides = [1, 1]} : vector<8x512xf32> to vector<1x512xf32>
    %169 = vector.extract_strided_slice %2 {offsets = [4, 0], sizes = [1, 512], strides = [1, 1]} : vector<8x512xf32> to vector<1x512xf32>
    %170 = arith.mulf %168, %169 : vector<1x512xf32>
    %171 = vector.broadcast %170 : vector<1x512xf32> to vector<8x512xf32>
    %172 = arith.mulf %167, %171 : vector<8x512xf32>
    %173 = arith.truncf %172 : vector<8x512xf32> to vector<8x512xbf16>
    %c168 = arith.constant 168 : index
    %c0_26 = arith.constant 0 : index
    %174 = vector.load %arg6[%c168, %c0_26] : memref<216x512xbf16, #tpu.memory_space<vmem>>, vector<8x512xbf16>
    tpu.vector_store %arg6[%c168, %c0_26], %173 {strides = array<i32>} : memref<216x512xbf16, #tpu.memory_space<vmem>>, vector<8x512xbf16>,
    %c448_i32 = arith.constant 448 : i32
    %175 = tpu.dynamic_rotate %1 by %c448_i32 dim 1 : vector<8x512xf32>, i32 -> vector<8x512xf32>
    %176 = vector.extract_strided_slice %2 {offsets = [1, 0], sizes = [1, 512], strides = [1, 1]} : vector<8x512xf32> to vector<1x512xf32>
    %177 = vector.broadcast %176 : vector<1x512xf32> to vector<8x512xf32>
    %178 = arith.mulf %175, %177 : vector<8x512xf32>
    %179 = arith.truncf %178 : vector<8x512xf32> to vector<8x512xbf16>
    %c176 = arith.constant 176 : index
    %c0_27 = arith.constant 0 : index
    %180 = vector.load %arg6[%c176, %c0_27] : memref<216x512xbf16, #tpu.memory_space<vmem>>, vector<8x512xbf16>
    tpu.vector_store %arg6[%c176, %c0_27], %179 {strides = array<i32>} : memref<216x512xbf16, #tpu.memory_space<vmem>>, vector<8x512xbf16>,
    %c447_i32 = arith.constant 447 : i32
    %181 = tpu.dynamic_rotate %1 by %c447_i32 dim 1 : vector<8x512xf32>, i32 -> vector<8x512xf32>
    %182 = vector.extract_strided_slice %2 {offsets = [1, 0], sizes = [1, 512], strides = [1, 1]} : vector<8x512xf32> to vector<1x512xf32>
    %183 = vector.extract_strided_slice %2 {offsets = [5, 0], sizes = [1, 512], strides = [1, 1]} : vector<8x512xf32> to vector<1x512xf32>
    %184 = arith.mulf %182, %183 : vector<1x512xf32>
    %185 = vector.broadcast %184 : vector<1x512xf32> to vector<8x512xf32>
    %186 = arith.mulf %181, %185 : vector<8x512xf32>
    %187 = arith.truncf %186 : vector<8x512xf32> to vector<8x512xbf16>
    %c184 = arith.constant 184 : index
    %c0_28 = arith.constant 0 : index
    %188 = vector.load %arg6[%c184, %c0_28] : memref<216x512xbf16, #tpu.memory_space<vmem>>, vector<8x512xbf16>
    tpu.vector_store %arg6[%c184, %c0_28], %187 {strides = array<i32>} : memref<216x512xbf16, #tpu.memory_space<vmem>>, vector<8x512xbf16>,
    %c441_i32 = arith.constant 441 : i32
    %189 = tpu.dynamic_rotate %1 by %c441_i32 dim 1 : vector<8x512xf32>, i32 -> vector<8x512xf32>
    %190 = vector.extract_strided_slice %2 {offsets = [1, 0], sizes = [1, 512], strides = [1, 1]} : vector<8x512xf32> to vector<1x512xf32>
    %191 = vector.extract_strided_slice %2 {offsets = [3, 0], sizes = [1, 512], strides = [1, 1]} : vector<8x512xf32> to vector<1x512xf32>
    %192 = arith.mulf %190, %191 : vector<1x512xf32>
    %193 = vector.extract_strided_slice %2 {offsets = [4, 0], sizes = [1, 512], strides = [1, 1]} : vector<8x512xf32> to vector<1x512xf32>
    %194 = arith.mulf %192, %193 : vector<1x512xf32>
    %195 = vector.broadcast %194 : vector<1x512xf32> to vector<8x512xf32>
    %196 = arith.mulf %189, %195 : vector<8x512xf32>
    %197 = arith.truncf %196 : vector<8x512xf32> to vector<8x512xbf16>
    %c192 = arith.constant 192 : index
    %c0_29 = arith.constant 0 : index
    %198 = vector.load %arg6[%c192, %c0_29] : memref<216x512xbf16, #tpu.memory_space<vmem>>, vector<8x512xbf16>
    tpu.vector_store %arg6[%c192, %c0_29], %197 {strides = array<i32>} : memref<216x512xbf16, #tpu.memory_space<vmem>>, vector<8x512xbf16>,
    %c440_i32 = arith.constant 440 : i32
    %199 = tpu.dynamic_rotate %1 by %c440_i32 dim 1 : vector<8x512xf32>, i32 -> vector<8x512xf32>
    %200 = vector.extract_strided_slice %2 {offsets = [1, 0], sizes = [1, 512], strides = [1, 1]} : vector<8x512xf32> to vector<1x512xf32>
    %201 = vector.extract_strided_slice %2 {offsets = [3, 0], sizes = [1, 512], strides = [1, 1]} : vector<8x512xf32> to vector<1x512xf32>
    %202 = arith.mulf %200, %201 : vector<1x512xf32>
    %203 = vector.broadcast %202 : vector<1x512xf32> to vector<8x512xf32>
    %204 = arith.mulf %199, %203 : vector<8x512xf32>
    %205 = arith.truncf %204 : vector<8x512xf32> to vector<8x512xbf16>
    %c200 = arith.constant 200 : index
    %c0_30 = arith.constant 0 : index
    %206 = vector.load %arg6[%c200, %c0_30] : memref<216x512xbf16, #tpu.memory_space<vmem>>, vector<8x512xbf16>
    tpu.vector_store %arg6[%c200, %c0_30], %205 {strides = array<i32>} : memref<216x512xbf16, #tpu.memory_space<vmem>>, vector<8x512xbf16>,
    %c439_i32 = arith.constant 439 : i32
    %207 = tpu.dynamic_rotate %1 by %c439_i32 dim 1 : vector<8x512xf32>, i32 -> vector<8x512xf32>
    %208 = vector.extract_strided_slice %2 {offsets = [1, 0], sizes = [1, 512], strides = [1, 1]} : vector<8x512xf32> to vector<1x512xf32>
    %209 = vector.extract_strided_slice %2 {offsets = [3, 0], sizes = [1, 512], strides = [1, 1]} : vector<8x512xf32> to vector<1x512xf32>
    %210 = arith.mulf %208, %209 : vector<1x512xf32>
    %211 = vector.extract_strided_slice %2 {offsets = [5, 0], sizes = [1, 512], strides = [1, 1]} : vector<8x512xf32> to vector<1x512xf32>
    %212 = arith.mulf %210, %211 : vector<1x512xf32>
    %213 = vector.broadcast %212 : vector<1x512xf32> to vector<8x512xf32>
    %214 = arith.mulf %207, %213 : vector<8x512xf32>
    %215 = arith.truncf %214 : vector<8x512xf32> to vector<8x512xbf16>
    %c208 = arith.constant 208 : index
    %c0_31 = arith.constant 0 : index
    %216 = vector.load %arg6[%c208, %c0_31] : memref<216x512xbf16, #tpu.memory_space<vmem>>, vector<8x512xbf16>
    tpu.vector_store %arg6[%c208, %c0_31], %215 {strides = array<i32>} : memref<216x512xbf16, #tpu.memory_space<vmem>>, vector<8x512xbf16>,
    %c0_32 = arith.constant 0 : index
    %c0_33 = arith.constant 0 : index
    %c0_34 = arith.constant 0 : index
    %217 = vector.load %arg2[%c0_32, %c0_33, %c0_34] : memref<2x8x216xbf16, #tpu.memory_space<vmem>>, vector<1x8x216xbf16>
    %218 = vector.shape_cast %217 : vector<1x8x216xbf16> to vector<8x216xbf16>
    %c0_35 = arith.constant 0 : index
    %c0_36 = arith.constant 0 : index
    %219 = vector.load %arg6[%c0_35, %c0_36] : memref<216x512xbf16, #tpu.memory_space<vmem>>, vector<216x512xbf16>
    %cst = arith.constant dense<0.000000e+00> : vector<8x512xf32>
    %220 = tpu.matmul %218, %219, %cst {dimension_numbers = #tpu.dot_dimension_numbers<[1], [0], [0], [1], [0, 0, 1, 1], [], []>} : vector<8x216xbf16>, vector<216x512xbf16>, vector<8x512xf32> -> vector<8x512xf32>
    %c0_37 = arith.constant 0 : index
    %c0_38 = arith.constant 0 : index
    %c0_39 = arith.constant 0 : index
    %221 = vector.load %arg3[%c0_37, %c0_38, %c0_39] : memref<2x8x1xf32, #tpu.memory_space<vmem>>, vector<1x8x1xf32>
    %222 = vector.shape_cast %221 : vector<1x8x1xf32> to vector<8x1xf32>
    %223 = vector.broadcast %222 : vector<8x1xf32> to vector<8x512xf32>
    %224 = arith.addf %220, %223 : vector<8x512xf32>
    %cst_40 = arith.constant 0.000000e+00 : f32
    %225 = vector.broadcast %cst_40 : f32 to vector<8x512xf32>
    %226 = arith.maximumf %224, %225 : vector<8x512xf32>
    %c0_41 = arith.constant 0 : index
    %c0_42 = arith.constant 0 : index
    %227 = vector.load %arg7[%c0_41, %c0_42] : memref<8x512xf32, #tpu.memory_space<vmem>>, vector<8x512xf32>
    tpu.vector_store %arg7[%c0_41, %c0_42], %226 {strides = array<i32>} : memref<8x512xf32, #tpu.memory_space<vmem>>, vector<8x512xf32>,
    %c0_43 = arith.constant 0 : index
    %c0_44 = arith.constant 0 : index
    %228 = vector.load %arg7[%c0_43, %c0_44] : memref<8x512xf32, #tpu.memory_space<vmem>>, vector<8x512xf32>
    %c73_i32_45 = arith.constant 73 : i32
    %229 = tpu.dynamic_rotate %228 by %c73_i32_45 dim 1 : vector<8x512xf32>, i32 -> vector<8x512xf32>
    %230 = vector.extract_strided_slice %2 {offsets = [0, 0], sizes = [1, 512], strides = [1, 1]} : vector<8x512xf32> to vector<1x512xf32>
    %231 = vector.extract_strided_slice %2 {offsets = [2, 0], sizes = [1, 512], strides = [1, 1]} : vector<8x512xf32> to vector<1x512xf32>
    %232 = arith.mulf %230, %231 : vector<1x512xf32>
    %233 = vector.extract_strided_slice %2 {offsets = [4, 0], sizes = [1, 512], strides = [1, 1]} : vector<8x512xf32> to vector<1x512xf32>
    %234 = arith.mulf %232, %233 : vector<1x512xf32>
    %235 = vector.broadcast %234 : vector<1x512xf32> to vector<8x512xf32>
    %236 = arith.mulf %229, %235 : vector<8x512xf32>
    %237 = arith.truncf %236 : vector<8x512xf32> to vector<8x512xbf16>
    %c0_46 = arith.constant 0 : index
    %c0_47 = arith.constant 0 : index
    %238 = vector.load %arg6[%c0_46, %c0_47] : memref<216x512xbf16, #tpu.memory_space<vmem>>, vector<8x512xbf16>
    tpu.vector_store %arg6[%c0_46, %c0_47], %237 {strides = array<i32>} : memref<216x512xbf16, #tpu.memory_space<vmem>>, vector<8x512xbf16>,
    %c72_i32_48 = arith.constant 72 : i32
    %239 = tpu.dynamic_rotate %228 by %c72_i32_48 dim 1 : vector<8x512xf32>, i32 -> vector<8x512xf32>
    %240 = vector.extract_strided_slice %2 {offsets = [0, 0], sizes = [1, 512], strides = [1, 1]} : vector<8x512xf32> to vector<1x512xf32>
    %241 = vector.extract_strided_slice %2 {offsets = [2, 0], sizes = [1, 512], strides = [1, 1]} : vector<8x512xf32> to vector<1x512xf32>
    %242 = arith.mulf %240, %241 : vector<1x512xf32>
    %243 = vector.broadcast %242 : vector<1x512xf32> to vector<8x512xf32>
    %244 = arith.mulf %239, %243 : vector<8x512xf32>
    %245 = arith.truncf %244 : vector<8x512xf32> to vector<8x512xbf16>
    %c8_49 = arith.constant 8 : index
    %c0_50 = arith.constant 0 : index
    %246 = vector.load %arg6[%c8_49, %c0_50] : memref<216x512xbf16, #tpu.memory_space<vmem>>, vector<8x512xbf16>
    tpu.vector_store %arg6[%c8_49, %c0_50], %245 {strides = array<i32>} : memref<216x512xbf16, #tpu.memory_space<vmem>>, vector<8x512xbf16>,
    %c71_i32_51 = arith.constant 71 : i32
    %247 = tpu.dynamic_rotate %228 by %c71_i32_51 dim 1 : vector<8x512xf32>, i32 -> vector<8x512xf32>
    %248 = vector.extract_strided_slice %2 {offsets = [0, 0], sizes = [1, 512], strides = [1, 1]} : vector<8x512xf32> to vector<1x512xf32>
    %249 = vector.extract_strided_slice %2 {offsets = [2, 0], sizes = [1, 512], strides = [1, 1]} : vector<8x512xf32> to vector<1x512xf32>
    %250 = arith.mulf %248, %249 : vector<1x512xf32>
    %251 = vector.extract_strided_slice %2 {offsets = [5, 0], sizes = [1, 512], strides = [1, 1]} : vector<8x512xf32> to vector<1x512xf32>
    %252 = arith.mulf %250, %251 : vector<1x512xf32>
    %253 = vector.broadcast %252 : vector<1x512xf32> to vector<8x512xf32>
    %254 = arith.mulf %247, %253 : vector<8x512xf32>
    %255 = arith.truncf %254 : vector<8x512xf32> to vector<8x512xbf16>
    %c16_52 = arith.constant 16 : index
    %c0_53 = arith.constant 0 : index
    %256 = vector.load %arg6[%c16_52, %c0_53] : memref<216x512xbf16, #tpu.memory_space<vmem>>, vector<8x512xbf16>
    tpu.vector_store %arg6[%c16_52, %c0_53], %255 {strides = array<i32>} : memref<216x512xbf16, #tpu.memory_space<vmem>>, vector<8x512xbf16>,
    %c65_i32_54 = arith.constant 65 : i32
    %257 = tpu.dynamic_rotate %228 by %c65_i32_54 dim 1 : vector<8x512xf32>, i32 -> vector<8x512xf32>
    %258 = vector.extract_strided_slice %2 {offsets = [0, 0], sizes = [1, 512], strides = [1, 1]} : vector<8x512xf32> to vector<1x512xf32>
    %259 = vector.extract_strided_slice %2 {offsets = [4, 0], sizes = [1, 512], strides = [1, 1]} : vector<8x512xf32> to vector<1x512xf32>
    %260 = arith.mulf %258, %259 : vector<1x512xf32>
    %261 = vector.broadcast %260 : vector<1x512xf32> to vector<8x512xf32>
    %262 = arith.mulf %257, %261 : vector<8x512xf32>
    %263 = arith.truncf %262 : vector<8x512xf32> to vector<8x512xbf16>
    %c24_55 = arith.constant 24 : index
    %c0_56 = arith.constant 0 : index
    %264 = vector.load %arg6[%c24_55, %c0_56] : memref<216x512xbf16, #tpu.memory_space<vmem>>, vector<8x512xbf16>
    tpu.vector_store %arg6[%c24_55, %c0_56], %263 {strides = array<i32>} : memref<216x512xbf16, #tpu.memory_space<vmem>>, vector<8x512xbf16>,
    %c64_i32_57 = arith.constant 64 : i32
    %265 = tpu.dynamic_rotate %228 by %c64_i32_57 dim 1 : vector<8x512xf32>, i32 -> vector<8x512xf32>
    %266 = vector.extract_strided_slice %2 {offsets = [0, 0], sizes = [1, 512], strides = [1, 1]} : vector<8x512xf32> to vector<1x512xf32>
    %267 = vector.broadcast %266 : vector<1x512xf32> to vector<8x512xf32>
    %268 = arith.mulf %265, %267 : vector<8x512xf32>
    %269 = arith.truncf %268 : vector<8x512xf32> to vector<8x512xbf16>
    %c32_58 = arith.constant 32 : index
    %c0_59 = arith.constant 0 : index
    %270 = vector.load %arg6[%c32_58, %c0_59] : memref<216x512xbf16, #tpu.memory_space<vmem>>, vector<8x512xbf16>
    tpu.vector_store %arg6[%c32_58, %c0_59], %269 {strides = array<i32>} : memref<216x512xbf16, #tpu.memory_space<vmem>>, vector<8x512xbf16>,
    %c63_i32_60 = arith.constant 63 : i32
    %271 = tpu.dynamic_rotate %228 by %c63_i32_60 dim 1 : vector<8x512xf32>, i32 -> vector<8x512xf32>
    %272 = vector.extract_strided_slice %2 {offsets = [0, 0], sizes = [1, 512], strides = [1, 1]} : vector<8x512xf32> to vector<1x512xf32>
    %273 = vector.extract_strided_slice %2 {offsets = [5, 0], sizes = [1, 512], strides = [1, 1]} : vector<8x512xf32> to vector<1x512xf32>
    %274 = arith.mulf %272, %273 : vector<1x512xf32>
    %275 = vector.broadcast %274 : vector<1x512xf32> to vector<8x512xf32>
    %276 = arith.mulf %271, %275 : vector<8x512xf32>
    %277 = arith.truncf %276 : vector<8x512xf32> to vector<8x512xbf16>
    %c40_61 = arith.constant 40 : index
    %c0_62 = arith.constant 0 : index
    %278 = vector.load %arg6[%c40_61, %c0_62] : memref<216x512xbf16, #tpu.memory_space<vmem>>, vector<8x512xbf16>
    tpu.vector_store %arg6[%c40_61, %c0_62], %277 {strides = array<i32>} : memref<216x512xbf16, #tpu.memory_space<vmem>>, vector<8x512xbf16>,
    %c57_i32_63 = arith.constant 57 : i32
    %279 = tpu.dynamic_rotate %228 by %c57_i32_63 dim 1 : vector<8x512xf32>, i32 -> vector<8x512xf32>
    %280 = vector.extract_strided_slice %2 {offsets = [0, 0], sizes = [1, 512], strides = [1, 1]} : vector<8x512xf32> to vector<1x512xf32>
    %281 = vector.extract_strided_slice %2 {offsets = [3, 0], sizes = [1, 512], strides = [1, 1]} : vector<8x512xf32> to vector<1x512xf32>
    %282 = arith.mulf %280, %281 : vector<1x512xf32>
    %283 = vector.extract_strided_slice %2 {offsets = [4, 0], sizes = [1, 512], strides = [1, 1]} : vector<8x512xf32> to vector<1x512xf32>
    %284 = arith.mulf %282, %283 : vector<1x512xf32>
    %285 = vector.broadcast %284 : vector<1x512xf32> to vector<8x512xf32>
    %286 = arith.mulf %279, %285 : vector<8x512xf32>
    %287 = arith.truncf %286 : vector<8x512xf32> to vector<8x512xbf16>
    %c48_64 = arith.constant 48 : index
    %c0_65 = arith.constant 0 : index
    %288 = vector.load %arg6[%c48_64, %c0_65] : memref<216x512xbf16, #tpu.memory_space<vmem>>, vector<8x512xbf16>
    tpu.vector_store %arg6[%c48_64, %c0_65], %287 {strides = array<i32>} : memref<216x512xbf16, #tpu.memory_space<vmem>>, vector<8x512xbf16>,
    %c56_i32_66 = arith.constant 56 : i32
    %289 = tpu.dynamic_rotate %228 by %c56_i32_66 dim 1 : vector<8x512xf32>, i32 -> vector<8x512xf32>
    %290 = vector.extract_strided_slice %2 {offsets = [0, 0], sizes = [1, 512], strides = [1, 1]} : vector<8x512xf32> to vector<1x512xf32>
    %291 = vector.extract_strided_slice %2 {offsets = [3, 0], sizes = [1, 512], strides = [1, 1]} : vector<8x512xf32> to vector<1x512xf32>
    %292 = arith.mulf %290, %291 : vector<1x512xf32>
    %293 = vector.broadcast %292 : vector<1x512xf32> to vector<8x512xf32>
    %294 = arith.mulf %289, %293 : vector<8x512xf32>
    %295 = arith.truncf %294 : vector<8x512xf32> to vector<8x512xbf16>
    %c56_67 = arith.constant 56 : index
    %c0_68 = arith.constant 0 : index
    %296 = vector.load %arg6[%c56_67, %c0_68] : memref<216x512xbf16, #tpu.memory_space<vmem>>, vector<8x512xbf16>
    tpu.vector_store %arg6[%c56_67, %c0_68], %295 {strides = array<i32>} : memref<216x512xbf16, #tpu.memory_space<vmem>>, vector<8x512xbf16>,
    %c55_i32_69 = arith.constant 55 : i32
    %297 = tpu.dynamic_rotate %228 by %c55_i32_69 dim 1 : vector<8x512xf32>, i32 -> vector<8x512xf32>
    %298 = vector.extract_strided_slice %2 {offsets = [0, 0], sizes = [1, 512], strides = [1, 1]} : vector<8x512xf32> to vector<1x512xf32>
    %299 = vector.extract_strided_slice %2 {offsets = [3, 0], sizes = [1, 512], strides = [1, 1]} : vector<8x512xf32> to vector<1x512xf32>
    %300 = arith.mulf %298, %299 : vector<1x512xf32>
    %301 = vector.extract_strided_slice %2 {offsets = [5, 0], sizes = [1, 512], strides = [1, 1]} : vector<8x512xf32> to vector<1x512xf32>
    %302 = arith.mulf %300, %301 : vector<1x512xf32>
    %303 = vector.broadcast %302 : vector<1x512xf32> to vector<8x512xf32>
    %304 = arith.mulf %297, %303 : vector<8x512xf32>
    %305 = arith.truncf %304 : vector<8x512xf32> to vector<8x512xbf16>
    %c64_70 = arith.constant 64 : index
    %c0_71 = arith.constant 0 : index
    %306 = vector.load %arg6[%c64_70, %c0_71] : memref<216x512xbf16, #tpu.memory_space<vmem>>, vector<8x512xbf16>
    tpu.vector_store %arg6[%c64_70, %c0_71], %305 {strides = array<i32>} : memref<216x512xbf16, #tpu.memory_space<vmem>>, vector<8x512xbf16>,
    %c9_i32_72 = arith.constant 9 : i32
    %307 = tpu.dynamic_rotate %228 by %c9_i32_72 dim 1 : vector<8x512xf32>, i32 -> vector<8x512xf32>
    %308 = vector.extract_strided_slice %2 {offsets = [2, 0], sizes = [1, 512], strides = [1, 1]} : vector<8x512xf32> to vector<1x512xf32>
    %309 = vector.extract_strided_slice %2 {offsets = [4, 0], sizes = [1, 512], strides = [1, 1]} : vector<8x512xf32> to vector<1x512xf32>
    %310 = arith.mulf %308, %309 : vector<1x512xf32>
    %311 = vector.broadcast %310 : vector<1x512xf32> to vector<8x512xf32>
    %312 = arith.mulf %307, %311 : vector<8x512xf32>
    %313 = arith.truncf %312 : vector<8x512xf32> to vector<8x512xbf16>
    %c72_73 = arith.constant 72 : index
    %c0_74 = arith.constant 0 : index
    %314 = vector.load %arg6[%c72_73, %c0_74] : memref<216x512xbf16, #tpu.memory_space<vmem>>, vector<8x512xbf16>
    tpu.vector_store %arg6[%c72_73, %c0_74], %313 {strides = array<i32>} : memref<216x512xbf16, #tpu.memory_space<vmem>>, vector<8x512xbf16>,
    %c8_i32_75 = arith.constant 8 : i32
    %315 = tpu.dynamic_rotate %228 by %c8_i32_75 dim 1 : vector<8x512xf32>, i32 -> vector<8x512xf32>
    %316 = vector.extract_strided_slice %2 {offsets = [2, 0], sizes = [1, 512], strides = [1, 1]} : vector<8x512xf32> to vector<1x512xf32>
    %317 = vector.broadcast %316 : vector<1x512xf32> to vector<8x512xf32>
    %318 = arith.mulf %315, %317 : vector<8x512xf32>
    %319 = arith.truncf %318 : vector<8x512xf32> to vector<8x512xbf16>
    %c80_76 = arith.constant 80 : index
    %c0_77 = arith.constant 0 : index
    %320 = vector.load %arg6[%c80_76, %c0_77] : memref<216x512xbf16, #tpu.memory_space<vmem>>, vector<8x512xbf16>
    tpu.vector_store %arg6[%c80_76, %c0_77], %319 {strides = array<i32>} : memref<216x512xbf16, #tpu.memory_space<vmem>>, vector<8x512xbf16>,
    %c7_i32_78 = arith.constant 7 : i32
    %321 = tpu.dynamic_rotate %228 by %c7_i32_78 dim 1 : vector<8x512xf32>, i32 -> vector<8x512xf32>
    %322 = vector.extract_strided_slice %2 {offsets = [2, 0], sizes = [1, 512], strides = [1, 1]} : vector<8x512xf32> to vector<1x512xf32>
    %323 = vector.extract_strided_slice %2 {offsets = [5, 0], sizes = [1, 512], strides = [1, 1]} : vector<8x512xf32> to vector<1x512xf32>
    %324 = arith.mulf %322, %323 : vector<1x512xf32>
    %325 = vector.broadcast %324 : vector<1x512xf32> to vector<8x512xf32>
    %326 = arith.mulf %321, %325 : vector<8x512xf32>
    %327 = arith.truncf %326 : vector<8x512xf32> to vector<8x512xbf16>
    %c88_79 = arith.constant 88 : index
    %c0_80 = arith.constant 0 : index
    %328 = vector.load %arg6[%c88_79, %c0_80] : memref<216x512xbf16, #tpu.memory_space<vmem>>, vector<8x512xbf16>
    tpu.vector_store %arg6[%c88_79, %c0_80], %327 {strides = array<i32>} : memref<216x512xbf16, #tpu.memory_space<vmem>>, vector<8x512xbf16>,
    %c1_i32_81 = arith.constant 1 : i32
    %329 = tpu.dynamic_rotate %228 by %c1_i32_81 dim 1 : vector<8x512xf32>, i32 -> vector<8x512xf32>
    %330 = vector.extract_strided_slice %2 {offsets = [4, 0], sizes = [1, 512], strides = [1, 1]} : vector<8x512xf32> to vector<1x512xf32>
    %331 = vector.broadcast %330 : vector<1x512xf32> to vector<8x512xf32>
    %332 = arith.mulf %329, %331 : vector<8x512xf32>
    %333 = arith.truncf %332 : vector<8x512xf32> to vector<8x512xbf16>
    %c96_82 = arith.constant 96 : index
    %c0_83 = arith.constant 0 : index
    %334 = vector.load %arg6[%c96_82, %c0_83] : memref<216x512xbf16, #tpu.memory_space<vmem>>, vector<8x512xbf16>
    tpu.vector_store %arg6[%c96_82, %c0_83], %333 {strides = array<i32>} : memref<216x512xbf16, #tpu.memory_space<vmem>>, vector<8x512xbf16>,
    %335 = arith.truncf %228 : vector<8x512xf32> to vector<8x512xbf16>
    %c104_84 = arith.constant 104 : index
    %c0_85 = arith.constant 0 : index
    %336 = vector.load %arg6[%c104_84, %c0_85] : memref<216x512xbf16, #tpu.memory_space<vmem>>, vector<8x512xbf16>
    tpu.vector_store %arg6[%c104_84, %c0_85], %335 {strides = array<i32>} : memref<216x512xbf16, #tpu.memory_space<vmem>>, vector<8x512xbf16>,
    %c511_i32_86 = arith.constant 511 : i32
    %337 = tpu.dynamic_rotate %228 by %c511_i32_86 dim 1 : vector<8x512xf32>, i32 -> vector<8x512xf32>
    %338 = vector.extract_strided_slice %2 {offsets = [5, 0], sizes = [1, 512], strides = [1, 1]} : vector<8x512xf32> to vector<1x512xf32>
    %339 = vector.broadcast %338 : vector<1x512xf32> to vector<8x512xf32>
    %340 = arith.mulf %337, %339 : vector<8x512xf32>
    %341 = arith.truncf %340 : vector<8x512xf32> to vector<8x512xbf16>
    %c112_87 = arith.constant 112 : index
    %c0_88 = arith.constant 0 : index
    %342 = vector.load %arg6[%c112_87, %c0_88] : memref<216x512xbf16, #tpu.memory_space<vmem>>, vector<8x512xbf16>
    tpu.vector_store %arg6[%c112_87, %c0_88], %341 {strides = array<i32>} : memref<216x512xbf16, #tpu.memory_space<vmem>>, vector<8x512xbf16>,
    %c505_i32_89 = arith.constant 505 : i32
    %343 = tpu.dynamic_rotate %228 by %c505_i32_89 dim 1 : vector<8x512xf32>, i32 -> vector<8x512xf32>
    %344 = vector.extract_strided_slice %2 {offsets = [3, 0], sizes = [1, 512], strides = [1, 1]} : vector<8x512xf32> to vector<1x512xf32>
    %345 = vector.extract_strided_slice %2 {offsets = [4, 0], sizes = [1, 512], strides = [1, 1]} : vector<8x512xf32> to vector<1x512xf32>
    %346 = arith.mulf %344, %345 : vector<1x512xf32>
    %347 = vector.broadcast %346 : vector<1x512xf32> to vector<8x512xf32>
    %348 = arith.mulf %343, %347 : vector<8x512xf32>
    %349 = arith.truncf %348 : vector<8x512xf32> to vector<8x512xbf16>
    %c120_90 = arith.constant 120 : index
    %c0_91 = arith.constant 0 : index
    %350 = vector.load %arg6[%c120_90, %c0_91] : memref<216x512xbf16, #tpu.memory_space<vmem>>, vector<8x512xbf16>
    tpu.vector_store %arg6[%c120_90, %c0_91], %349 {strides = array<i32>} : memref<216x512xbf16, #tpu.memory_space<vmem>>, vector<8x512xbf16>,
    %c504_i32_92 = arith.constant 504 : i32
    %351 = tpu.dynamic_rotate %228 by %c504_i32_92 dim 1 : vector<8x512xf32>, i32 -> vector<8x512xf32>
    %352 = vector.extract_strided_slice %2 {offsets = [3, 0], sizes = [1, 512], strides = [1, 1]} : vector<8x512xf32> to vector<1x512xf32>
    %353 = vector.broadcast %352 : vector<1x512xf32> to vector<8x512xf32>
    %354 = arith.mulf %351, %353 : vector<8x512xf32>
    %355 = arith.truncf %354 : vector<8x512xf32> to vector<8x512xbf16>
    %c128_93 = arith.constant 128 : index
    %c0_94 = arith.constant 0 : index
    %356 = vector.load %arg6[%c128_93, %c0_94] : memref<216x512xbf16, #tpu.memory_space<vmem>>, vector<8x512xbf16>
    tpu.vector_store %arg6[%c128_93, %c0_94], %355 {strides = array<i32>} : memref<216x512xbf16, #tpu.memory_space<vmem>>, vector<8x512xbf16>,
    %c503_i32_95 = arith.constant 503 : i32
    %357 = tpu.dynamic_rotate %228 by %c503_i32_95 dim 1 : vector<8x512xf32>, i32 -> vector<8x512xf32>
    %358 = vector.extract_strided_slice %2 {offsets = [3, 0], sizes = [1, 512], strides = [1, 1]} : vector<8x512xf32> to vector<1x512xf32>
    %359 = vector.extract_strided_slice %2 {offsets = [5, 0], sizes = [1, 512], strides = [1, 1]} : vector<8x512xf32> to vector<1x512xf32>
    %360 = arith.mulf %358, %359 : vector<1x512xf32>
    %361 = vector.broadcast %360 : vector<1x512xf32> to vector<8x512xf32>
    %362 = arith.mulf %357, %361 : vector<8x512xf32>
    %363 = arith.truncf %362 : vector<8x512xf32> to vector<8x512xbf16>
    %c136_96 = arith.constant 136 : index
    %c0_97 = arith.constant 0 : index
    %364 = vector.load %arg6[%c136_96, %c0_97] : memref<216x512xbf16, #tpu.memory_space<vmem>>, vector<8x512xbf16>
    tpu.vector_store %arg6[%c136_96, %c0_97], %363 {strides = array<i32>} : memref<216x512xbf16, #tpu.memory_space<vmem>>, vector<8x512xbf16>,
    %c457_i32_98 = arith.constant 457 : i32
    %365 = tpu.dynamic_rotate %228 by %c457_i32_98 dim 1 : vector<8x512xf32>, i32 -> vector<8x512xf32>
    %366 = vector.extract_strided_slice %2 {offsets = [1, 0], sizes = [1, 512], strides = [1, 1]} : vector<8x512xf32> to vector<1x512xf32>
    %367 = vector.extract_strided_slice %2 {offsets = [2, 0], sizes = [1, 512], strides = [1, 1]} : vector<8x512xf32> to vector<1x512xf32>
    %368 = arith.mulf %366, %367 : vector<1x512xf32>
    %369 = vector.extract_strided_slice %2 {offsets = [4, 0], sizes = [1, 512], strides = [1, 1]} : vector<8x512xf32> to vector<1x512xf32>
    %370 = arith.mulf %368, %369 : vector<1x512xf32>
    %371 = vector.broadcast %370 : vector<1x512xf32> to vector<8x512xf32>
    %372 = arith.mulf %365, %371 : vector<8x512xf32>
    %373 = arith.truncf %372 : vector<8x512xf32> to vector<8x512xbf16>
    %c144_99 = arith.constant 144 : index
    %c0_100 = arith.constant 0 : index
    %374 = vector.load %arg6[%c144_99, %c0_100] : memref<216x512xbf16, #tpu.memory_space<vmem>>, vector<8x512xbf16>
    tpu.vector_store %arg6[%c144_99, %c0_100], %373 {strides = array<i32>} : memref<216x512xbf16, #tpu.memory_space<vmem>>, vector<8x512xbf16>,
    %c456_i32_101 = arith.constant 456 : i32
    %375 = tpu.dynamic_rotate %228 by %c456_i32_101 dim 1 : vector<8x512xf32>, i32 -> vector<8x512xf32>
    %376 = vector.extract_strided_slice %2 {offsets = [1, 0], sizes = [1, 512], strides = [1, 1]} : vector<8x512xf32> to vector<1x512xf32>
    %377 = vector.extract_strided_slice %2 {offsets = [2, 0], sizes = [1, 512], strides = [1, 1]} : vector<8x512xf32> to vector<1x512xf32>
    %378 = arith.mulf %376, %377 : vector<1x512xf32>
    %379 = vector.broadcast %378 : vector<1x512xf32> to vector<8x512xf32>
    %380 = arith.mulf %375, %379 : vector<8x512xf32>
    %381 = arith.truncf %380 : vector<8x512xf32> to vector<8x512xbf16>
    %c152_102 = arith.constant 152 : index
    %c0_103 = arith.constant 0 : index
    %382 = vector.load %arg6[%c152_102, %c0_103] : memref<216x512xbf16, #tpu.memory_space<vmem>>, vector<8x512xbf16>
    tpu.vector_store %arg6[%c152_102, %c0_103], %381 {strides = array<i32>} : memref<216x512xbf16, #tpu.memory_space<vmem>>, vector<8x512xbf16>,
    %c455_i32_104 = arith.constant 455 : i32
    %383 = tpu.dynamic_rotate %228 by %c455_i32_104 dim 1 : vector<8x512xf32>, i32 -> vector<8x512xf32>
    %384 = vector.extract_strided_slice %2 {offsets = [1, 0], sizes = [1, 512], strides = [1, 1]} : vector<8x512xf32> to vector<1x512xf32>
    %385 = vector.extract_strided_slice %2 {offsets = [2, 0], sizes = [1, 512], strides = [1, 1]} : vector<8x512xf32> to vector<1x512xf32>
    %386 = arith.mulf %384, %385 : vector<1x512xf32>
    %387 = vector.extract_strided_slice %2 {offsets = [5, 0], sizes = [1, 512], strides = [1, 1]} : vector<8x512xf32> to vector<1x512xf32>
    %388 = arith.mulf %386, %387 : vector<1x512xf32>
    %389 = vector.broadcast %388 : vector<1x512xf32> to vector<8x512xf32>
    %390 = arith.mulf %383, %389 : vector<8x512xf32>
    %391 = arith.truncf %390 : vector<8x512xf32> to vector<8x512xbf16>
    %c160_105 = arith.constant 160 : index
    %c0_106 = arith.constant 0 : index
    %392 = vector.load %arg6[%c160_105, %c0_106] : memref<216x512xbf16, #tpu.memory_space<vmem>>, vector<8x512xbf16>
    tpu.vector_store %arg6[%c160_105, %c0_106], %391 {strides = array<i32>} : memref<216x512xbf16, #tpu.memory_space<vmem>>, vector<8x512xbf16>,
    %c449_i32_107 = arith.constant 449 : i32
    %393 = tpu.dynamic_rotate %228 by %c449_i32_107 dim 1 : vector<8x512xf32>, i32 -> vector<8x512xf32>
    %394 = vector.extract_strided_slice %2 {offsets = [1, 0], sizes = [1, 512], strides = [1, 1]} : vector<8x512xf32> to vector<1x512xf32>
    %395 = vector.extract_strided_slice %2 {offsets = [4, 0], sizes = [1, 512], strides = [1, 1]} : vector<8x512xf32> to vector<1x512xf32>
    %396 = arith.mulf %394, %395 : vector<1x512xf32>
    %397 = vector.broadcast %396 : vector<1x512xf32> to vector<8x512xf32>
    %398 = arith.mulf %393, %397 : vector<8x512xf32>
    %399 = arith.truncf %398 : vector<8x512xf32> to vector<8x512xbf16>
    %c168_108 = arith.constant 168 : index
    %c0_109 = arith.constant 0 : index
    %400 = vector.load %arg6[%c168_108, %c0_109] : memref<216x512xbf16, #tpu.memory_space<vmem>>, vector<8x512xbf16>
    tpu.vector_store %arg6[%c168_108, %c0_109], %399 {strides = array<i32>} : memref<216x512xbf16, #tpu.memory_space<vmem>>, vector<8x512xbf16>,
    %c448_i32_110 = arith.constant 448 : i32
    %401 = tpu.dynamic_rotate %228 by %c448_i32_110 dim 1 : vector<8x512xf32>, i32 -> vector<8x512xf32>
    %402 = vector.extract_strided_slice %2 {offsets = [1, 0], sizes = [1, 512], strides = [1, 1]} : vector<8x512xf32> to vector<1x512xf32>
    %403 = vector.broadcast %402 : vector<1x512xf32> to vector<8x512xf32>
    %404 = arith.mulf %401, %403 : vector<8x512xf32>
    %405 = arith.truncf %404 : vector<8x512xf32> to vector<8x512xbf16>
    %c176_111 = arith.constant 176 : index
    %c0_112 = arith.constant 0 : index
    %406 = vector.load %arg6[%c176_111, %c0_112] : memref<216x512xbf16, #tpu.memory_space<vmem>>, vector<8x512xbf16>
    tpu.vector_store %arg6[%c176_111, %c0_112], %405 {strides = array<i32>} : memref<216x512xbf16, #tpu.memory_space<vmem>>, vector<8x512xbf16>,
    %c447_i32_113 = arith.constant 447 : i32
    %407 = tpu.dynamic_rotate %228 by %c447_i32_113 dim 1 : vector<8x512xf32>, i32 -> vector<8x512xf32>
    %408 = vector.extract_strided_slice %2 {offsets = [1, 0], sizes = [1, 512], strides = [1, 1]} : vector<8x512xf32> to vector<1x512xf32>
    %409 = vector.extract_strided_slice %2 {offsets = [5, 0], sizes = [1, 512], strides = [1, 1]} : vector<8x512xf32> to vector<1x512xf32>
    %410 = arith.mulf %408, %409 : vector<1x512xf32>
    %411 = vector.broadcast %410 : vector<1x512xf32> to vector<8x512xf32>
    %412 = arith.mulf %407, %411 : vector<8x512xf32>
    %413 = arith.truncf %412 : vector<8x512xf32> to vector<8x512xbf16>
    %c184_114 = arith.constant 184 : index
    %c0_115 = arith.constant 0 : index
    %414 = vector.load %arg6[%c184_114, %c0_115] : memref<216x512xbf16, #tpu.memory_space<vmem>>, vector<8x512xbf16>
    tpu.vector_store %arg6[%c184_114, %c0_115], %413 {strides = array<i32>} : memref<216x512xbf16, #tpu.memory_space<vmem>>, vector<8x512xbf16>,
    %c441_i32_116 = arith.constant 441 : i32
    %415 = tpu.dynamic_rotate %228 by %c441_i32_116 dim 1 : vector<8x512xf32>, i32 -> vector<8x512xf32>
    %416 = vector.extract_strided_slice %2 {offsets = [1, 0], sizes = [1, 512], strides = [1, 1]} : vector<8x512xf32> to vector<1x512xf32>
    %417 = vector.extract_strided_slice %2 {offsets = [3, 0], sizes = [1, 512], strides = [1, 1]} : vector<8x512xf32> to vector<1x512xf32>
    %418 = arith.mulf %416, %417 : vector<1x512xf32>
    %419 = vector.extract_strided_slice %2 {offsets = [4, 0], sizes = [1, 512], strides = [1, 1]} : vector<8x512xf32> to vector<1x512xf32>
    %420 = arith.mulf %418, %419 : vector<1x512xf32>
    %421 = vector.broadcast %420 : vector<1x512xf32> to vector<8x512xf32>
    %422 = arith.mulf %415, %421 : vector<8x512xf32>
    %423 = arith.truncf %422 : vector<8x512xf32> to vector<8x512xbf16>
    %c192_117 = arith.constant 192 : index
    %c0_118 = arith.constant 0 : index
    %424 = vector.load %arg6[%c192_117, %c0_118] : memref<216x512xbf16, #tpu.memory_space<vmem>>, vector<8x512xbf16>
    tpu.vector_store %arg6[%c192_117, %c0_118], %423 {strides = array<i32>} : memref<216x512xbf16, #tpu.memory_space<vmem>>, vector<8x512xbf16>,
    %c440_i32_119 = arith.constant 440 : i32
    %425 = tpu.dynamic_rotate %228 by %c440_i32_119 dim 1 : vector<8x512xf32>, i32 -> vector<8x512xf32>
    %426 = vector.extract_strided_slice %2 {offsets = [1, 0], sizes = [1, 512], strides = [1, 1]} : vector<8x512xf32> to vector<1x512xf32>
    %427 = vector.extract_strided_slice %2 {offsets = [3, 0], sizes = [1, 512], strides = [1, 1]} : vector<8x512xf32> to vector<1x512xf32>
    %428 = arith.mulf %426, %427 : vector<1x512xf32>
    %429 = vector.broadcast %428 : vector<1x512xf32> to vector<8x512xf32>
    %430 = arith.mulf %425, %429 : vector<8x512xf32>
    %431 = arith.truncf %430 : vector<8x512xf32> to vector<8x512xbf16>
    %c200_120 = arith.constant 200 : index
    %c0_121 = arith.constant 0 : index
    %432 = vector.load %arg6[%c200_120, %c0_121] : memref<216x512xbf16, #tpu.memory_space<vmem>>, vector<8x512xbf16>
    tpu.vector_store %arg6[%c200_120, %c0_121], %431 {strides = array<i32>} : memref<216x512xbf16, #tpu.memory_space<vmem>>, vector<8x512xbf16>,
    %c439_i32_122 = arith.constant 439 : i32
    %433 = tpu.dynamic_rotate %228 by %c439_i32_122 dim 1 : vector<8x512xf32>, i32 -> vector<8x512xf32>
    %434 = vector.extract_strided_slice %2 {offsets = [1, 0], sizes = [1, 512], strides = [1, 1]} : vector<8x512xf32> to vector<1x512xf32>
    %435 = vector.extract_strided_slice %2 {offsets = [3, 0], sizes = [1, 512], strides = [1, 1]} : vector<8x512xf32> to vector<1x512xf32>
    %436 = arith.mulf %434, %435 : vector<1x512xf32>
    %437 = vector.extract_strided_slice %2 {offsets = [5, 0], sizes = [1, 512], strides = [1, 1]} : vector<8x512xf32> to vector<1x512xf32>
    %438 = arith.mulf %436, %437 : vector<1x512xf32>
    %439 = vector.broadcast %438 : vector<1x512xf32> to vector<8x512xf32>
    %440 = arith.mulf %433, %439 : vector<8x512xf32>
    %441 = arith.truncf %440 : vector<8x512xf32> to vector<8x512xbf16>
    %c208_123 = arith.constant 208 : index
    %c0_124 = arith.constant 0 : index
    %442 = vector.load %arg6[%c208_123, %c0_124] : memref<216x512xbf16, #tpu.memory_space<vmem>>, vector<8x512xbf16>
    tpu.vector_store %arg6[%c208_123, %c0_124], %441 {strides = array<i32>} : memref<216x512xbf16, #tpu.memory_space<vmem>>, vector<8x512xbf16>,
    %c1 = arith.constant 1 : index
    %c0_125 = arith.constant 0 : index
    %c0_126 = arith.constant 0 : index
    %443 = vector.load %arg2[%c1, %c0_125, %c0_126] : memref<2x8x216xbf16, #tpu.memory_space<vmem>>, vector<1x8x216xbf16>
    %444 = vector.shape_cast %443 : vector<1x8x216xbf16> to vector<8x216xbf16>
    %c0_127 = arith.constant 0 : index
    %c0_128 = arith.constant 0 : index
    %445 = vector.load %arg6[%c0_127, %c0_128] : memref<216x512xbf16, #tpu.memory_space<vmem>>, vector<216x512xbf16>
    %cst_129 = arith.constant dense<0.000000e+00> : vector<8x512xf32>
    %446 = tpu.matmul %444, %445, %cst_129 {dimension_numbers = #tpu.dot_dimension_numbers<[1], [0], [0], [1], [0, 0, 1, 1], [], []>} : vector<8x216xbf16>, vector<216x512xbf16>, vector<8x512xf32> -> vector<8x512xf32>
    %c1_130 = arith.constant 1 : index
    %c0_131 = arith.constant 0 : index
    %c0_132 = arith.constant 0 : index
    %447 = vector.load %arg3[%c1_130, %c0_131, %c0_132] : memref<2x8x1xf32, #tpu.memory_space<vmem>>, vector<1x8x1xf32>
    %448 = vector.shape_cast %447 : vector<1x8x1xf32> to vector<8x1xf32>
    %449 = vector.broadcast %448 : vector<8x1xf32> to vector<8x512xf32>
    %450 = arith.addf %446, %449 : vector<8x512xf32>
    %451 = arith.addf %450, %1 : vector<8x512xf32>
    %cst_133 = arith.constant 0.000000e+00 : f32
    %452 = vector.broadcast %cst_133 : f32 to vector<8x512xf32>
    %453 = arith.maximumf %451, %452 : vector<8x512xf32>
    %c0_134 = arith.constant 0 : index
    %c0_135 = arith.constant 0 : index
    %c0_136 = arith.constant 0 : index
    %454 = vector.load %arg5[%c0_134, %c0_135, %c0_136] : memref<1x8x512xf32, #tpu.memory_space<vmem>>, vector<1x8x512xf32>
    %455 = vector.shape_cast %454 : vector<1x8x512xf32> to vector<8x512xf32>
    %456 = vector.shape_cast %453 : vector<8x512xf32> to vector<1x8x512xf32>
    tpu.vector_store %arg5[%c0_134, %c0_135, %c0_136], %456 {strides = array<i32>} : memref<1x8x512xf32, #tpu.memory_space<vmem>>, vector<1x8x512xf32>,
    return
  }
  func.func @transform_0(%arg0: i32) -> (i32, i32, i32) {
    %c0_i32 = arith.constant 0 : i32
    %c0_i32_0 = arith.constant 0 : i32
    %c0_i32_1 = arith.constant 0 : i32
    return %arg0, %c0_i32, %c0_i32_0 : i32, i32, i32
  }
  func.func @transform_1(%arg0: i32) -> (i32, i32, i32) {
    %c0_i32 = arith.constant 0 : i32
    %c0_i32_0 = arith.constant 0 : i32
    %c0_i32_1 = arith.constant 0 : i32
    %c0_i32_2 = arith.constant 0 : i32
    return %c0_i32, %c0_i32_0, %c0_i32_1 : i32, i32, i32
  }
  func.func @transform_2(%arg0: i32) -> (i32, i32, i32) {
    %c0_i32 = arith.constant 0 : i32
    %c0_i32_0 = arith.constant 0 : i32
    %c0_i32_1 = arith.constant 0 : i32
    %c0_i32_2 = arith.constant 0 : i32
    return %c0_i32, %c0_i32_0, %c0_i32_1 : i32, i32, i32
  }
  func.func @transform_3(%arg0: i32) -> (i32, i32) {
    %c0_i32 = arith.constant 0 : i32
    %c0_i32_0 = arith.constant 0 : i32
    %c0_i32_1 = arith.constant 0 : i32
    return %c0_i32, %c0_i32_0 : i32, i32
  }
  func.func @transform_4(%arg0: i32) -> (i32, i32, i32) {
    %c0_i32 = arith.constant 0 : i32
    %c0_i32_0 = arith.constant 0 : i32
    %c0_i32_1 = arith.constant 0 : i32
    return %arg0, %c0_i32, %c0_i32_0 : i32, i32, i32
  }
}

</mosaic_0001>

<llo_original>
// kernel: residual_conv_block_forward.1
$region0: #{residual_conv_block_forward.1}
  #allocation0 [shape = 'u32[]', space=smem, size = 0x4, offset = 0x4, fixed_abs, tag = 'smem constant byte address 0x4 - core index']
  #allocation1 [shape = 'u32[144,128]{1,0:T(1,128)}', space=vmem, size = 0x12000, scoped, tag = 'internal scratch']
  #allocation2 [shape = 'bf16[216,512]{1,0:T(8,128)(2,1)}', space=vmem, size = 0x36000, scoped, tag = 'scratch operand']
  #allocation3 [shape = 'f32[8,512]{1,0:T(8,128)}', space=vmem, size = 0x4000, scoped, tag = 'scratch operand']
  %s0 = inlined_call_operand.vmem [shape: f32[4,8,512], index: 0, kind: input, shape index: {}]
  %s1 = inlined_call_operand.vmem [shape: bf16[2,8,216], index: 1, kind: input, shape index: {}]
  %s2 = inlined_call_operand.vmem [shape: f32[2,8,1], index: 2, kind: input, shape index: {}]
  %s3 = inlined_call_operand.vmem [shape: f32[8,512], index: 3, kind: input, shape index: {}]
  %s4 = inlined_call_operand.vmem [shape: f32[4,8,512], index: 4, kind: output, shape index: {}]
  %s5 = sld [smem:[#allocation0]]
  $region49: #{residual_conv_block_forward.1} parent=0
    _
  %s7 = ssub.s32 1, %s5
  %s8 = scalar_select 0, %s7, %s5
  loop: start=0, step=1, limit=6
  $region2: #{residual_conv_block_forward.1} parent=0 // loop_pre_header
    _
  $region3: #{residual_conv_block_forward.1} parent=0 // loop_header
    %s10 = sphi 0, %s14
    %p11 = scmp.ge.s32.totalorder %s10, 6
    %s20 = sphi 0, %s22
    %s23 = sphi 0, %s20
    %s24 = sphi 0, %s23
    %s40 = sphi 0, %s24
    %s44 = sphi 0, %s44
    %s46 = sphi 0, %s44
    %s47 = sphi 0, %s46
    %s61 = sphi 0, %s47
    %s65 = sphi 0, %s65
    %s67 = sphi 0, %s65
    %s68 = sphi 0, %s67
    %s82 = sphi 0, %s68
    %s86 = sphi 0, %s86
    %s88 = sphi 0, %s86
    %s89 = sphi 0, %s88
    %s103 = sphi 0, %s89
    %s109 = sphi 0, %s111
    %s112 = sphi 0, %s109
    %s113 = sphi 0, %s112
    %s129 = sphi 0, %s113
  $region4: #{residual_conv_block_forward.1} parent=0 // loop_header_branch
    %13 = sbr.rel (%p11) target = $region8
  $region5: #{residual_conv_block_forward.1} parent=0 // loop_body
    %s15 = ssub.s32 %s10, 1
    %s16 = ssub.s32 %s10, 2
    %s17 = sadd.s32 %s10, 1
    %s18 = ssub.s32 %s10, %s17
    %p19 = scmp.eq.s32.totalorder %s18, 0
    %s21 = sadd.s32 %s20, 1
    %s22 = scalar_select %p19, %s20, %s21
    %p25 = pneg %p19
    %p26 = scmp.eq.s32.totalorder %s10, 3
    %p27 = por %p25, %p26
    %p28 = scmp.ne.s32.totalorder %s20, %s23
    %p29 = scmp.eq.s32.totalorder %s10, 0
    %p30 = por %p28, %p29
    %p31 = scmp.ne.s32.totalorder %s20, %s23
    %p32 = scmp.eq.s32.totalorder %s15, 3
    %p33 = por %p31, %p32
    %p34 = scmp.ne.s32.totalorder %s23, %s24
    %p35 = scmp.eq.s32.totalorder %s15, 0
    %p36 = por %p34, %p35
    %p37 = scmp.ne.s32.totalorder %s23, %s24
    %p38 = scmp.eq.s32.totalorder %s16, 3
    %p39 = por %p37, %p38
    %p41 = scmp.ne.s32.totalorder %s24, %s40
    %p42 = scmp.eq.s32.totalorder %s16, 0
    %p43 = por %p41, %p42
    %s45 = sadd.s32 %s44, 1
    %p48 = scmp.eq.s32.totalorder %s10, 3
    %p49 = scmp.ne.s32.totalorder %s44, %s46
    %p50 = scmp.eq.s32.totalorder %s10, 0
    %p51 = por %p49, %p50
    %p52 = scmp.ne.s32.totalorder %s44, %s46
    %p53 = scmp.eq.s32.totalorder %s15, 3
    %p54 = por %p52, %p53
    %p55 = scmp.ne.s32.totalorder %s46, %s47
    %p56 = scmp.eq.s32.totalorder %s15, 0
    %p57 = por %p55, %p56
    %p58 = scmp.ne.s32.totalorder %s46, %s47
    %p59 = scmp.eq.s32.totalorder %s16, 3
    %p60 = por %p58, %p59
    %p62 = scmp.ne.s32.totalorder %s47, %s61
    %p63 = scmp.eq.s32.totalorder %s16, 0
    %p64 = por %p62, %p63
    %s66 = sadd.s32 %s65, 1
    %p69 = scmp.eq.s32.totalorder %s10, 3
    %p70 = scmp.ne.s32.totalorder %s65, %s67
    %p71 = scmp.eq.s32.totalorder %s10, 0
    %p72 = por %p70, %p71
    %p73 = scmp.ne.s32.totalorder %s65, %s67
    %p74 = scmp.eq.s32.totalorder %s15, 3
    %p75 = por %p73, %p74
    %p76 = scmp.ne.s32.totalorder %s67, %s68
    %p77 = scmp.eq.s32.totalorder %s15, 0
    %p78 = por %p76, %p77
    %p79 = scmp.ne.s32.totalorder %s67, %s68
    %p80 = scmp.eq.s32.totalorder %s16, 3
    %p81 = por %p79, %p80
    %p83 = scmp.ne.s32.totalorder %s68, %s82
    %p84 = scmp.eq.s32.totalorder %s16, 0
    %p85 = por %p83, %p84
    %s87 = sadd.s32 %s86, 1
    %p90 = scmp.eq.s32.totalorder %s10, 3
    %p91 = scmp.ne.s32.totalorder %s86, %s88
    %p92 = scmp.eq.s32.totalorder %s10, 0
    %p93 = por %p91, %p92
    %p94 = scmp.ne.s32.totalorder %s86, %s88
    %p95 = scmp.eq.s32.totalorder %s15, 3
    %p96 = por %p94, %p95
    %p97 = scmp.ne.s32.totalorder %s88, %s89
    %p98 = scmp.eq.s32.totalorder %s15, 0
    %p99 = por %p97, %p98
    %p100 = scmp.ne.s32.totalorder %s88, %s89
    %p101 = scmp.eq.s32.totalorder %s16, 3
    %p102 = por %p100, %p101
    %p104 = scmp.ne.s32.totalorder %s89, %s103
    %p105 = scmp.eq.s32.totalorder %s16, 0
    %p106 = por %p104, %p105
    %s107 = ssub.s32 %s10, %s17
    %p108 = scmp.eq.s32.totalorder %s107, 0
    %s110 = sadd.s32 %s109, 1
    %s111 = scalar_select %p108, %s109, %s110
    %p114 = pneg %p108
    %p115 = scmp.eq.s32.totalorder %s10, 3
    %p116 = por %p114, %p115
    %p117 = scmp.ne.s32.totalorder %s109, %s112
    %p118 = scmp.eq.s32.totalorder %s10, 0
    %p119 = por %p117, %p118
    %p120 = scmp.ne.s32.totalorder %s109, %s112
    %p121 = scmp.eq.s32.totalorder %s15, 3
    %p122 = por %p120, %p121
    %p123 = scmp.ne.s32.totalorder %s112, %s113
    %p124 = scmp.eq.s32.totalorder %s15, 0
    %p125 = por %p123, %p124
    %p126 = scmp.ne.s32.totalorder %s112, %s113
    %p127 = scmp.eq.s32.totalorder %s16, 3
    %p128 = por %p126, %p127
    %p130 = scmp.ne.s32.totalorder %s113, %s129
    %p131 = scmp.eq.s32.totalorder %s16, 0
    %p132 = por %p130, %p131
    %p133 = scmp.le.s32.totalorder 1, %s10
    %p134 = scmp.lt.s32.totalorder %s10, 5
    %p135 = pnand %p133, %p134
    %p136 = pneg %p135
    // Predicated region
    $region9: #{residual_conv_block_forward.1} parent=5 // pred_check
      _
    $region10: #{residual_conv_block_forward.1} parent=5 // pred_check_branch
      %138 = sbr.rel (%p135) target = $region12
    $region11: #{residual_conv_block_forward.1} parent=5 // pred_region
      %s139 = ssub.s32 %s10, 1
      // Predicated region
      $region13: #{residual_conv_block_forward.1} parent=11 // pred_check
        %p140 = pneg %p57
      $region14: #{residual_conv_block_forward.1} parent=11 // pred_check_branch
        %142 = sbr.rel (%p140) target = $region16
      $region15: #{residual_conv_block_forward.1} parent=11 // pred_region
        _
      $region16: #{residual_conv_block_forward.1} parent=11 // pred_fallthru
        _
      // Predicated region
      $region17: #{residual_conv_block_forward.1} parent=11 // pred_check
        %p143 = pneg %p78
      $region18: #{residual_conv_block_forward.1} parent=11 // pred_check_branch
        %145 = sbr.rel (%p143) target = $region20
      $region19: #{residual_conv_block_forward.1} parent=11 // pred_region
        _
      $region20: #{residual_conv_block_forward.1} parent=11 // pred_fallthru
        _
      // Predicated region
      $region21: #{residual_conv_block_forward.1} parent=11 // pred_check
        %p146 = pneg %p99
      $region22: #{residual_conv_block_forward.1} parent=11 // pred_check_branch
        %148 = sbr.rel (%p146) target = $region24
      $region23: #{residual_conv_block_forward.1} parent=11 // pred_region
        _
      $region24: #{residual_conv_block_forward.1} parent=11 // pred_fallthru
        _
    $region12: #{residual_conv_block_forward.1} parent=5 // pred_fallthru
      _
    %p149 = scmp.lt.s32.totalorder %s10, 4
    // Predicated region
    $region25: #{residual_conv_block_forward.1} parent=5 // pred_check
      %p150 = pneg %p149
    $region26: #{residual_conv_block_forward.1} parent=5 // pred_check_branch
      %152 = sbr.rel (%p150) target = $region28
    $region27: #{residual_conv_block_forward.1} parent=5 // pred_region
      // Predicated region
      $region29: #{residual_conv_block_forward.1} parent=27 // pred_check
        %p153 = pneg %p30
      $region30: #{residual_conv_block_forward.1} parent=27 // pred_check_branch
        %155 = sbr.rel (%p153) target = $region32
      $region31: #{residual_conv_block_forward.1} parent=27 // pred_region
        %p156 = scmp.lt.s32.totalorder %s10, 3
        %s157 = scalar_select %p156, %s10, 3
        %s158 = smul.addr %s157, 4
        %s159 = smul.addr %s158, 8
        %s160 = scalar_lea.vmem %s0, %s159
      $region32: #{residual_conv_block_forward.1} parent=27 // pred_fallthru
        _
    $region28: #{residual_conv_block_forward.1} parent=5 // pred_fallthru
      _
    %p161 = scmp.le.s32.totalorder 1, %s10
    %p162 = scmp.lt.s32.totalorder %s10, 5
    %p163 = pnand %p161, %p162
    %p164 = pneg %p163
    // Predicated region
    $region33: #{residual_conv_block_forward.1} parent=5 // pred_check
      _
    $region34: #{residual_conv_block_forward.1} parent=5 // pred_check_branch
      %166 = sbr.rel (%p163) target = $region36
    $region35: #{residual_conv_block_forward.1} parent=5 // pred_region
      %s167 = ssub.s32 %s10, 1
      %p168 = scmp.lt.s32.totalorder %s15, 3
      %s169 = scalar_select %p168, %s15, 3
      %s170 = smul.addr %s169, 4
      %s171 = smul.addr %s170, 8
      %s172 = scalar_lea.vmem %s0, %s171
      %p173 = pneg %p36
      %p174 = pneg %p33
      %p175 = pneg %p57
      %p176 = pneg %p54
      %p177 = pneg %p78
      %p178 = pneg %p75
      %p179 = pneg %p99
      %p180 = pneg %p96
      %p181 = pneg %p125
      %p182 = pneg %p122
      %p183 = scmp.lt.s32.totalorder %s15, 3
      %s184 = scalar_select %p183, %s15, 3
      %s185 = smul.addr %s184, 4
      %s186 = smul.addr %s185, 8
      %s187 = scalar_lea.vmem %s4, %s186
      %p188 = scmp.lt.s32.totalorder %s15, 3
      %s189 = scalar_select %p188, %s15, 3
      %s190 = smul.addr %s189, 4
      %s191 = smul.addr %s190, 8
      %s192 = scalar_lea.vmem %s0, %s191
      %p193 = scmp.lt.s32.totalorder %s15, 3
      %s194 = scalar_select %p193, %s15, 3
      %s195 = smul.addr %s194, 4
      %s196 = smul.addr %s195, 8
      %s197 = scalar_lea.vmem %s4, %s196
      %v199 = vld [vmem:[%s192] sm:$0xff]
      %v200 = vld [vmem:[%s192 + $0x8] sm:$0xff]
      %v201 = vld [vmem:[%s192 + $0x10] sm:$0xff]
      %v202 = vld [vmem:[%s192 + $0x18] sm:$0xff]
      %v203 = vld [vmem:[%s3] sm:$0xff]
      %v204 = vld [vmem:[%s3 + $0x8] sm:$0xff]
      %v205 = vld [vmem:[%s3 + $0x10] sm:$0xff]
      %v206 = vld [vmem:[%s3 + $0x18] sm:$0xff]
      %207 = vrot.lane.b32.xlu0 %v199, 73
      %v208 = vpop.permute.xlu0 %207
      %209 = vrot.lane.b32.xlu0 %v200, 73
      %v210 = vpop.permute.xlu0 %209
      %211 = vrot.lane.b32.xlu0 %v201, 73
      %v212 = vpop.permute.xlu0 %211
      %213 = vrot.lane.b32.xlu0 %v202, 73
      %v214 = vpop.permute.xlu0 %213
      %v215 = vlaneseq
      %v216 = vand.u32 %v215, 127
      %vm217 = vcmp.lt.s32.totalorder %v216, 73
      %v218 = vsel %vm217, %v212, %v214
      %v219 = vsel %vm217, %v210, %v212
      %v220 = vsel %vm217, %v208, %v210
      %v221 = vsel %vm217, %v214, %v208
      %v226 = vrot.slane %v203, 2
      %v227 = vrot.slane %v204, 2
      %v228 = vrot.slane %v205, 2
      %v229 = vrot.slane %v206, 2
      %v234 = vmul.f32 %v203, %v226
      %v235 = vmul.f32 %v204, %v227
      %v236 = vmul.f32 %v205, %v228
      %v237 = vmul.f32 %v206, %v229
      %v238 = vrot.slane %v203, 4
      %v239 = vrot.slane %v204, 4
      %v240 = vrot.slane %v205, 4
      %v241 = vrot.slane %v206, 4
      %v246 = vmul.f32 %v234, %v238
      %v247 = vmul.f32 %v235, %v239
      %v248 = vmul.f32 %v236, %v240
      %v249 = vmul.f32 %v237, %v241
      %v250 = vlaneseq
      %v251 = vshrl.u32 %v250, 7
      %v252 = vsub.s32 0, %v251
      %v253 = vrot.slane %v246, %v252
      %v254 = vlaneseq
      %v255 = vshrl.u32 %v254, 7
      %v256 = vsub.s32 0, %v255
      %v257 = vrot.slane %v247, %v256
      %v258 = vlaneseq
      %v259 = vshrl.u32 %v258, 7
      %v260 = vsub.s32 0, %v259
      %v261 = vrot.slane %v248, %v260
      %v262 = vlaneseq
      %v263 = vshrl.u32 %v262, 7
      %v264 = vsub.s32 0, %v263
      %v265 = vrot.slane %v249, %v264
      %v266 = vmul.f32 %v221, %v253
      %v267 = vmul.f32 %v220, %v257
      %v268 = vmul.f32 %v219, %v261
      %v269 = vmul.f32 %v218, %v265
      %v270 = vpack.c.bf16 %v266, %v266
      %v271 = vpack.c.bf16 %v267, %v267
      %v272 = vpack.c.bf16 %v268, %v268
      %v273 = vpack.c.bf16 %v269, %v269
      %v278 = vunpack.c.l.b16 %v270
      %v279 = vunpack.c.l.b16 %v271
      %v280 = vunpack.c.l.b16 %v272
      %v281 = vunpack.c.l.b16 %v273
      %v282 = vpack.c.b16 %v279, %v278
      %v283 = vpack.c.b16 %v281, %v280
      %286 = vst [vmem:[#allocation2] sm:$0xff] %v282
      %287 = vst [vmem:[#allocation2 + $0x8] sm:$0xff] %v283
      %288 = vrot.lane.b32.xlu0 %v199, 72
      %v289 = vpop.permute.xlu0 %288
      %290 = vrot.lane.b32.xlu0 %v200, 72
      %v291 = vpop.permute.xlu0 %290
      %292 = vrot.lane.b32.xlu0 %v201, 72
      %v293 = vpop.permute.xlu0 %292
      %294 = vrot.lane.b32.xlu0 %v202, 72
      %v295 = vpop.permute.xlu0 %294
      %vm296 = vcmp.lt.s32.totalorder %v216, 72
      %v297 = vsel %vm296, %v293, %v295
      %v298 = vsel %vm296, %v291, %v293
      %v299 = vsel %vm296, %v289, %v291
      %v300 = vsel %vm296, %v295, %v289
      %v301 = vlaneseq
      %v302 = vshrl.u32 %v301, 7
      %v303 = vsub.s32 0, %v302
      %v304 = vrot.slane %v234, %v303
      %v305 = vlaneseq
      %v306 = vshrl.u32 %v305, 7
      %v307 = vsub.s32 0, %v306
      %v308 = vrot.slane %v235, %v307
      %v309 = vlaneseq
      %v310 = vshrl.u32 %v309, 7
      %v311 = vsub.s32 0, %v310
      %v312 = vrot.slane %v236, %v311
      %v313 = vlaneseq
      %v314 = vshrl.u32 %v313, 7
      %v315 = vsub.s32 0, %v314
      %v316 = vrot.slane %v237, %v315
      %v317 = vmul.f32 %v300, %v304
      %v318 = vmul.f32 %v299, %v308
      %v319 = vmul.f32 %v298, %v312
      %v320 = vmul.f32 %v297, %v316
      %v321 = vpack.c.bf16 %v317, %v317
      %v322 = vpack.c.bf16 %v318, %v318
      %v323 = vpack.c.bf16 %v319, %v319
      %v324 = vpack.c.bf16 %v320, %v320
      %v329 = vunpack.c.l.b16 %v321
      %v330 = vunpack.c.l.b16 %v322
      %v331 = vunpack.c.l.b16 %v323
      %v332 = vunpack.c.l.b16 %v324
      %v333 = vpack.c.b16 %v330, %v329
      %v334 = vpack.c.b16 %v332, %v331
      %337 = vst [vmem:[#allocation2 + $0x10] sm:$0xff] %v333
      %338 = vst [vmem:[#allocation2 + $0x18] sm:$0xff] %v334
      %339 = vrot.lane.b32.xlu0 %v199, 71
      %v340 = vpop.permute.xlu0 %339
      %341 = vrot.lane.b32.xlu0 %v200, 71
      %v342 = vpop.permute.xlu0 %341
      %343 = vrot.lane.b32.xlu0 %v201, 71
      %v344 = vpop.permute.xlu0 %343
      %345 = vrot.lane.b32.xlu0 %v202, 71
      %v346 = vpop.permute.xlu0 %345
      %vm347 = vcmp.lt.s32.totalorder %v216, 71
      %v348 = vsel %vm347, %v344, %v346
      %v349 = vsel %vm347, %v342, %v344
      %v350 = vsel %vm347, %v340, %v342
      %v351 = vsel %vm347, %v346, %v340
      %v352 = vrot.slane %v203, 5
      %v353 = vrot.slane %v204, 5
      %v354 = vrot.slane %v205, 5
      %v355 = vrot.slane %v206, 5
      %v360 = vmul.f32 %v234, %v352
      %v361 = vmul.f32 %v235, %v353
      %v362 = vmul.f32 %v236, %v354
      %v363 = vmul.f32 %v237, %v355
      %v364 = vlaneseq
      %v365 = vshrl.u32 %v364, 7
      %v366 = vsub.s32 0, %v365
      %v367 = vrot.slane %v360, %v366
      %v368 = vlaneseq
      %v369 = vshrl.u32 %v368, 7
      %v370 = vsub.s32 0, %v369
      %v371 = vrot.slane %v361, %v370
      %v372 = vlaneseq
      %v373 = vshrl.u32 %v372, 7
      %v374 = vsub.s32 0, %v373
      %v375 = vrot.slane %v362, %v374
      %v376 = vlaneseq
      %v377 = vshrl.u32 %v376, 7
      %v378 = vsub.s32 0, %v377
      %v379 = vrot.slane %v363, %v378
      %v380 = vmul.f32 %v351, %v367
      %v381 = vmul.f32 %v350, %v371
      %v382 = vmul.f32 %v349, %v375
      %v383 = vmul.f32 %v348, %v379
      %v384 = vpack.c.bf16 %v380, %v380
      %v385 = vpack.c.bf16 %v381, %v381
      %v386 = vpack.c.bf16 %v382, %v382
      %v387 = vpack.c.bf16 %v383, %v383
      %v392 = vunpack.c.l.b16 %v384
      %v393 = vunpack.c.l.b16 %v385
      %v394 = vunpack.c.l.b16 %v386
      %v395 = vunpack.c.l.b16 %v387
      %v396 = vpack.c.b16 %v393, %v392
      %v397 = vpack.c.b16 %v395, %v394
      %400 = vst [vmem:[#allocation2 + $0x20] sm:$0xff] %v396
      %401 = vst [vmem:[#allocation2 + $0x28] sm:$0xff] %v397
      %402 = vrot.lane.b32.xlu0 %v199, 65
      %v403 = vpop.permute.xlu0 %402
      %404 = vrot.lane.b32.xlu0 %v200, 65
      %v405 = vpop.permute.xlu0 %404
      %406 = vrot.lane.b32.xlu0 %v201, 65
      %v407 = vpop.permute.xlu0 %406
      %408 = vrot.lane.b32.xlu0 %v202, 65
      %v409 = vpop.permute.xlu0 %408
      %vm410 = vcmp.lt.s32.totalorder %v216, 65
      %v411 = vsel %vm410, %v407, %v409
      %v412 = vsel %vm410, %v405, %v407
      %v413 = vsel %vm410, %v403, %v405
      %v414 = vsel %vm410, %v409, %v403
      %v415 = vmul.f32 %v203, %v238
      %v416 = vmul.f32 %v204, %v239
      %v417 = vmul.f32 %v205, %v240
      %v418 = vmul.f32 %v206, %v241
      %v419 = vlaneseq
      %v420 = vshrl.u32 %v419, 7
      %v421 = vsub.s32 0, %v420
      %v422 = vrot.slane %v415, %v421
      %v423 = vlaneseq
      %v424 = vshrl.u32 %v423, 7
      %v425 = vsub.s32 0, %v424
      %v426 = vrot.slane %v416, %v425
      %v427 = vlaneseq
      %v428 = vshrl.u32 %v427, 7
      %v429 = vsub.s32 0, %v428
      %v430 = vrot.slane %v417, %v429
      %v431 = vlaneseq
      %v432 = vshrl.u32 %v431, 7
      %v433 = vsub.s32 0, %v432
      %v434 = vrot.slane %v418, %v433
      %v435 = vmul.f32 %v414, %v422
      %v436 = vmul.f32 %v413, %v426
      %v437 = vmul.f32 %v412, %v430
      %v438 = vmul.f32 %v411, %v434
      %v439 = vpack.c.bf16 %v435, %v435
      %v440 = vpack.c.bf16 %v436, %v436
      %v441 = vpack.c.bf16 %v437, %v437
      %v442 = vpack.c.bf16 %v438, %v438
      %v447 = vunpack.c.l.b16 %v439
      %v448 = vunpack.c.l.b16 %v440
      %v449 = vunpack.c.l.b16 %v441
      %v450 = vunpack.c.l.b16 %v442
      %v451 = vpack.c.b16 %v448, %v447
      %v452 = vpack.c.b16 %v450, %v449
      %455 = vst [vmem:[#allocation2 + $0x30] sm:$0xff] %v451
      %456 = vst [vmem:[#allocation2 + $0x38] sm:$0xff] %v452
      %457 = vrot.lane.b32.xlu0 %v199, 64
      %v458 = vpop.permute.xlu0 %457
      %459 = vrot.lane.b32.xlu0 %v200, 64
      %v460 = vpop.permute.xlu0 %459
      %461 = vrot.lane.b32.xlu0 %v201, 64
      %v462 = vpop.permute.xlu0 %461
      %463 = vrot.lane.b32.xlu0 %v202, 64
      %v464 = vpop.permute.xlu0 %463
      %vm465 = vcmp.lt.s32.totalorder %v216, 64
      %v466 = vsel %vm465, %v462, %v464
      %v467 = vsel %vm465, %v460, %v462
      %v468 = vsel %vm465, %v458, %v460
      %v469 = vsel %vm465, %v464, %v458
      %v470 = vlaneseq
      %v471 = vshrl.u32 %v470, 7
      %v472 = vsub.s32 0, %v471
      %v473 = vrot.slane %v203, %v472
      %v474 = vlaneseq
      %v475 = vshrl.u32 %v474, 7
      %v476 = vsub.s32 0, %v475
      %v477 = vrot.slane %v204, %v476
      %v478 = vlaneseq
      %v479 = vshrl.u32 %v478, 7
      %v480 = vsub.s32 0, %v479
      %v481 = vrot.slane %v205, %v480
      %v482 = vlaneseq
      %v483 = vshrl.u32 %v482, 7
      %v484 = vsub.s32 0, %v483
      %v485 = vrot.slane %v206, %v484
      %v486 = vmul.f32 %v469, %v473
      %v487 = vmul.f32 %v468, %v477
      %v488 = vmul.f32 %v467, %v481
      %v489 = vmul.f32 %v466, %v485
      %v490 = vpack.c.bf16 %v486, %v486
      %v491 = vpack.c.bf16 %v487, %v487
      %v492 = vpack.c.bf16 %v488, %v488
      %v493 = vpack.c.bf16 %v489, %v489
      %v498 = vunpack.c.l.b16 %v490
      %v499 = vunpack.c.l.b16 %v491
      %v500 = vunpack.c.l.b16 %v492
      %v501 = vunpack.c.l.b16 %v493
      %v502 = vpack.c.b16 %v499, %v498
      %v503 = vpack.c.b16 %v501, %v500
      %506 = vst [vmem:[#allocation2 + $0x40] sm:$0xff] %v502
      %507 = vst [vmem:[#allocation2 + $0x48] sm:$0xff] %v503
      %508 = vrot.lane.b32.xlu0 %v199, 63
      %v509 = vpop.permute.xlu0 %508
      %510 = vrot.lane.b32.xlu0 %v200, 63
      %v511 = vpop.permute.xlu0 %510
      %512 = vrot.lane.b32.xlu0 %v201, 63
      %v513 = vpop.permute.xlu0 %512
      %514 = vrot.lane.b32.xlu0 %v202, 63
      %v515 = vpop.permute.xlu0 %514
      %vm516 = vcmp.lt.s32.totalorder %v216, 63
      %v517 = vsel %vm516, %v513, %v515
      %v518 = vsel %vm516, %v511, %v513
      %v519 = vsel %vm516, %v509, %v511
      %v520 = vsel %vm516, %v515, %v509
      %v521 = vmul.f32 %v203, %v352
      %v522 = vmul.f32 %v204, %v353
      %v523 = vmul.f32 %v205, %v354
      %v524 = vmul.f32 %v206, %v355
      %v525 = vlaneseq
      %v526 = vshrl.u32 %v525, 7
      %v527 = vsub.s32 0, %v526
      %v528 = vrot.slane %v521, %v527
      %v529 = vlaneseq
      %v530 = vshrl.u32 %v529, 7
      %v531 = vsub.s32 0, %v530
      %v532 = vrot.slane %v522, %v531
      %v533 = vlaneseq
      %v534 = vshrl.u32 %v533, 7
      %v535 = vsub.s32 0, %v534
      %v536 = vrot.slane %v523, %v535
      %v537 = vlaneseq
      %v538 = vshrl.u32 %v537, 7
      %v539 = vsub.s32 0, %v538
      %v540 = vrot.slane %v524, %v539
      %v541 = vmul.f32 %v520, %v528
      %v542 = vmul.f32 %v519, %v532
      %v543 = vmul.f32 %v518, %v536
      %v544 = vmul.f32 %v517, %v540
      %v545 = vpack.c.bf16 %v541, %v541
      %v546 = vpack.c.bf16 %v542, %v542
      %v547 = vpack.c.bf16 %v543, %v543
      %v548 = vpack.c.bf16 %v544, %v544
      %v553 = vunpack.c.l.b16 %v545
      %v554 = vunpack.c.l.b16 %v546
      %v555 = vunpack.c.l.b16 %v547
      %v556 = vunpack.c.l.b16 %v548
      %v557 = vpack.c.b16 %v554, %v553
      %v558 = vpack.c.b16 %v556, %v555
      %561 = vst [vmem:[#allocation2 + $0x50] sm:$0xff] %v557
      %562 = vst [vmem:[#allocation2 + $0x58] sm:$0xff] %v558
      %563 = vrot.lane.b32.xlu0 %v199, 57
      %v564 = vpop.permute.xlu0 %563
      %565 = vrot.lane.b32.xlu0 %v200, 57
      %v566 = vpop.permute.xlu0 %565
      %567 = vrot.lane.b32.xlu0 %v201, 57
      %v568 = vpop.permute.xlu0 %567
      %569 = vrot.lane.b32.xlu0 %v202, 57
      %v570 = vpop.permute.xlu0 %569
      %vm571 = vcmp.lt.s32.totalorder %v216, 57
      %v572 = vsel %vm571, %v568, %v570
      %v573 = vsel %vm571, %v566, %v568
      %v574 = vsel %vm571, %v564, %v566
      %v575 = vsel %vm571, %v570, %v564
      %v576 = vrot.slane %v203, 3
      %v577 = vrot.slane %v204, 3
      %v578 = vrot.slane %v205, 3
      %v579 = vrot.slane %v206, 3
      %v584 = vmul.f32 %v203, %v576
      %v585 = vmul.f32 %v204, %v577
      %v586 = vmul.f32 %v205, %v578
      %v587 = vmul.f32 %v206, %v579
      %v588 = vmul.f32 %v584, %v238
      %v589 = vmul.f32 %v585, %v239
      %v590 = vmul.f32 %v586, %v240
      %v591 = vmul.f32 %v587, %v241
      %v592 = vlaneseq
      %v593 = vshrl.u32 %v592, 7
      %v594 = vsub.s32 0, %v593
      %v595 = vrot.slane %v588, %v594
      %v596 = vlaneseq
      %v597 = vshrl.u32 %v596, 7
      %v598 = vsub.s32 0, %v597
      %v599 = vrot.slane %v589, %v598
      %v600 = vlaneseq
      %v601 = vshrl.u32 %v600, 7
      %v602 = vsub.s32 0, %v601
      %v603 = vrot.slane %v590, %v602
      %v604 = vlaneseq
      %v605 = vshrl.u32 %v604, 7
      %v606 = vsub.s32 0, %v605
      %v607 = vrot.slane %v591, %v606
      %v608 = vmul.f32 %v575, %v595
      %v609 = vmul.f32 %v574, %v599
      %v610 = vmul.f32 %v573, %v603
      %v611 = vmul.f32 %v572, %v607
      %v612 = vpack.c.bf16 %v608, %v608
      %v613 = vpack.c.bf16 %v609, %v609
      %v614 = vpack.c.bf16 %v610, %v610
      %v615 = vpack.c.bf16 %v611, %v611
      %v620 = vunpack.c.l.b16 %v612
      %v621 = vunpack.c.l.b16 %v613
      %v622 = vunpack.c.l.b16 %v614
      %v623 = vunpack.c.l.b16 %v615
      %v624 = vpack.c.b16 %v621, %v620
      %v625 = vpack.c.b16 %v623, %v622
      %628 = vst [vmem:[#allocation2 + $0x60] sm:$0xff] %v624
      %629 = vst [vmem:[#allocation2 + $0x68] sm:$0xff] %v625
      %630 = vrot.lane.b32.xlu0 %v199, 56
      %v631 = vpop.permute.xlu0 %630
      %632 = vrot.lane.b32.xlu0 %v200, 56
      %v633 = vpop.permute.xlu0 %632
      %634 = vrot.lane.b32.xlu0 %v201, 56
      %v635 = vpop.permute.xlu0 %634
      %636 = vrot.lane.b32.xlu0 %v202, 56
      %v637 = vpop.permute.xlu0 %636
      %vm638 = vcmp.lt.s32.totalorder %v216, 56
      %v639 = vsel %vm638, %v635, %v637
      %v640 = vsel %vm638, %v633, %v635
      %v641 = vsel %vm638, %v631, %v633
      %v642 = vsel %vm638, %v637, %v631
      %v643 = vlaneseq
      %v644 = vshrl.u32 %v643, 7
      %v645 = vsub.s32 0, %v644
      %v646 = vrot.slane %v584, %v645
      %v647 = vlaneseq
      %v648 = vshrl.u32 %v647, 7
      %v649 = vsub.s32 0, %v648
      %v650 = vrot.slane %v585, %v649
      %v651 = vlaneseq
      %v652 = vshrl.u32 %v651, 7
      %v653 = vsub.s32 0, %v652
      %v654 = vrot.slane %v586, %v653
      %v655 = vlaneseq
      %v656 = vshrl.u32 %v655, 7
      %v657 = vsub.s32 0, %v656
      %v658 = vrot.slane %v587, %v657
      %v659 = vmul.f32 %v642, %v646
      %v660 = vmul.f32 %v641, %v650
      %v661 = vmul.f32 %v640, %v654
      %v662 = vmul.f32 %v639, %v658
      %v663 = vpack.c.bf16 %v659, %v659
      %v664 = vpack.c.bf16 %v660, %v660
      %v665 = vpack.c.bf16 %v661, %v661
      %v666 = vpack.c.bf16 %v662, %v662
      %v671 = vunpack.c.l.b16 %v663
      %v672 = vunpack.c.l.b16 %v664
      %v673 = vunpack.c.l.b16 %v665
      %v674 = vunpack.c.l.b16 %v666
      %v675 = vpack.c.b16 %v672, %v671
      %v676 = vpack.c.b16 %v674, %v673
      %679 = vst [vmem:[#allocation2 + $0x70] sm:$0xff] %v675
      %680 = vst [vmem:[#allocation2 + $0x78] sm:$0xff] %v676
      %681 = vrot.lane.b32.xlu0 %v199, 55
      %v682 = vpop.permute.xlu0 %681
      %683 = vrot.lane.b32.xlu0 %v200, 55
      %v684 = vpop.permute.xlu0 %683
      %685 = vrot.lane.b32.xlu0 %v201, 55
      %v686 = vpop.permute.xlu0 %685
      %687 = vrot.lane.b32.xlu0 %v202, 55
      %v688 = vpop.permute.xlu0 %687
      %vm689 = vcmp.lt.s32.totalorder %v216, 55
      %v690 = vsel %vm689, %v686, %v688
      %v691 = vsel %vm689, %v684, %v686
      %v692 = vsel %vm689, %v682, %v684
      %v693 = vsel %vm689, %v688, %v682
      %v694 = vmul.f32 %v584, %v352
      %v695 = vmul.f32 %v585, %v353
      %v696 = vmul.f32 %v586, %v354
      %v697 = vmul.f32 %v587, %v355
      %v698 = vlaneseq
      %v699 = vshrl.u32 %v698, 7
      %v700 = vsub.s32 0, %v699
      %v701 = vrot.slane %v694, %v700
      %v702 = vlaneseq
      %v703 = vshrl.u32 %v702, 7
      %v704 = vsub.s32 0, %v703
      %v705 = vrot.slane %v695, %v704
      %v706 = vlaneseq
      %v707 = vshrl.u32 %v706, 7
      %v708 = vsub.s32 0, %v707
      %v709 = vrot.slane %v696, %v708
      %v710 = vlaneseq
      %v711 = vshrl.u32 %v710, 7
      %v712 = vsub.s32 0, %v711
      %v713 = vrot.slane %v697, %v712
      %v714 = vmul.f32 %v693, %v701
      %v715 = vmul.f32 %v692, %v705
      %v716 = vmul.f32 %v691, %v709
      %v717 = vmul.f32 %v690, %v713
      %v718 = vpack.c.bf16 %v714, %v714
      %v719 = vpack.c.bf16 %v715, %v715
      %v720 = vpack.c.bf16 %v716, %v716
      %v721 = vpack.c.bf16 %v717, %v717
      %v726 = vunpack.c.l.b16 %v718
      %v727 = vunpack.c.l.b16 %v719
      %v728 = vunpack.c.l.b16 %v720
      %v729 = vunpack.c.l.b16 %v721
      %v730 = vpack.c.b16 %v727, %v726
      %v731 = vpack.c.b16 %v729, %v728
      %734 = vst [vmem:[#allocation2 + $0x80] sm:$0xff] %v730
      %735 = vst [vmem:[#allocation2 + $0x88] sm:$0xff] %v731
      %736 = vrot.lane.b32.xlu0 %v199, 9
      %v737 = vpop.permute.xlu0 %736
      %738 = vrot.lane.b32.xlu0 %v200, 9
      %v739 = vpop.permute.xlu0 %738
      %740 = vrot.lane.b32.xlu0 %v201, 9
      %v741 = vpop.permute.xlu0 %740
      %742 = vrot.lane.b32.xlu0 %v202, 9
      %v743 = vpop.permute.xlu0 %742
      %vm744 = vcmp.lt.s32.totalorder %v216, 9
      %v745 = vsel %vm744, %v741, %v743
      %v746 = vsel %vm744, %v739, %v741
      %v747 = vsel %vm744, %v737, %v739
      %v748 = vsel %vm744, %v743, %v737
      %v749 = vlaneseq
      %v750 = vshrl.u32 %v749, 7
      %v751 = vsub.s32 2, %v750
      %v752 = vrot.slane %v234, %v751
      %v753 = vlaneseq
      %v754 = vshrl.u32 %v753, 7
      %v755 = vsub.s32 2, %v754
      %v756 = vrot.slane %v235, %v755
      %v757 = vlaneseq
      %v758 = vshrl.u32 %v757, 7
      %v759 = vsub.s32 2, %v758
      %v760 = vrot.slane %v236, %v759
      %v761 = vlaneseq
      %v762 = vshrl.u32 %v761, 7
      %v763 = vsub.s32 2, %v762
      %v764 = vrot.slane %v237, %v763
      %v765 = vmul.f32 %v748, %v752
      %v766 = vmul.f32 %v747, %v756
      %v767 = vmul.f32 %v746, %v760
      %v768 = vmul.f32 %v745, %v764
      %v769 = vpack.c.bf16 %v765, %v765
      %v770 = vpack.c.bf16 %v766, %v766
      %v771 = vpack.c.bf16 %v767, %v767
      %v772 = vpack.c.bf16 %v768, %v768
      %v777 = vunpack.c.l.b16 %v769
      %v778 = vunpack.c.l.b16 %v770
      %v779 = vunpack.c.l.b16 %v771
      %v780 = vunpack.c.l.b16 %v772
      %v781 = vpack.c.b16 %v778, %v777
      %v782 = vpack.c.b16 %v780, %v779
      %785 = vst [vmem:[#allocation2 + $0x90] sm:$0xff] %v781
      %786 = vst [vmem:[#allocation2 + $0x98] sm:$0xff] %v782
      %787 = vrot.lane.b32.xlu0 %v199, 8
      %v788 = vpop.permute.xlu0 %787
      %789 = vrot.lane.b32.xlu0 %v200, 8
      %v790 = vpop.permute.xlu0 %789
      %791 = vrot.lane.b32.xlu0 %v201, 8
      %v792 = vpop.permute.xlu0 %791
      %793 = vrot.lane.b32.xlu0 %v202, 8
      %v794 = vpop.permute.xlu0 %793
      %vm795 = vcmp.lt.s32.totalorder %v216, 8
      %v796 = vsel %vm795, %v792, %v794
      %v797 = vsel %vm795, %v790, %v792
      %v798 = vsel %vm795, %v788, %v790
      %v799 = vsel %vm795, %v794, %v788
      %v800 = vlaneseq
      %v801 = vshrl.u32 %v800, 7
      %v802 = vsub.s32 2, %v801
      %v803 = vrot.slane %v203, %v802
      %v804 = vlaneseq
      %v805 = vshrl.u32 %v804, 7
      %v806 = vsub.s32 2, %v805
      %v807 = vrot.slane %v204, %v806
      %v808 = vlaneseq
      %v809 = vshrl.u32 %v808, 7
      %v810 = vsub.s32 2, %v809
      %v811 = vrot.slane %v205, %v810
      %v812 = vlaneseq
      %v813 = vshrl.u32 %v812, 7
      %v814 = vsub.s32 2, %v813
      %v815 = vrot.slane %v206, %v814
      %v816 = vmul.f32 %v799, %v803
      %v817 = vmul.f32 %v798, %v807
      %v818 = vmul.f32 %v797, %v811
      %v819 = vmul.f32 %v796, %v815
      %v820 = vpack.c.bf16 %v816, %v816
      %v821 = vpack.c.bf16 %v817, %v817
      %v822 = vpack.c.bf16 %v818, %v818
      %v823 = vpack.c.bf16 %v819, %v819
      %v828 = vunpack.c.l.b16 %v820
      %v829 = vunpack.c.l.b16 %v821
      %v830 = vunpack.c.l.b16 %v822
      %v831 = vunpack.c.l.b16 %v823
      %v832 = vpack.c.b16 %v829, %v828
      %v833 = vpack.c.b16 %v831, %v830
      %836 = vst [vmem:[#allocation2 + $0xa0] sm:$0xff] %v832
      %837 = vst [vmem:[#allocation2 + $0xa8] sm:$0xff] %v833
      %838 = vrot.lane.b32.xlu0 %v199, 7
      %v839 = vpop.permute.xlu0 %838
      %840 = vrot.lane.b32.xlu0 %v200, 7
      %v841 = vpop.permute.xlu0 %840
      %842 = vrot.lane.b32.xlu0 %v201, 7
      %v843 = vpop.permute.xlu0 %842
      %844 = vrot.lane.b32.xlu0 %v202, 7
      %v845 = vpop.permute.xlu0 %844
      %vm846 = vcmp.lt.s32.totalorder %v216, 7
      %v847 = vsel %vm846, %v843, %v845
      %v848 = vsel %vm846, %v841, %v843
      %v849 = vsel %vm846, %v839, %v841
      %v850 = vsel %vm846, %v845, %v839
      %v851 = vlaneseq
      %v852 = vshrl.u32 %v851, 7
      %v853 = vsub.s32 2, %v852
      %v854 = vrot.slane %v584, %v853
      %v855 = vlaneseq
      %v856 = vshrl.u32 %v855, 7
      %v857 = vsub.s32 2, %v856
      %v858 = vrot.slane %v585, %v857
      %v859 = vlaneseq
      %v860 = vshrl.u32 %v859, 7
      %v861 = vsub.s32 2, %v860
      %v862 = vrot.slane %v586, %v861
      %v863 = vlaneseq
      %v864 = vshrl.u32 %v863, 7
      %v865 = vsub.s32 2, %v864
      %v866 = vrot.slane %v587, %v865
      %v867 = vmul.f32 %v850, %v854
      %v868 = vmul.f32 %v849, %v858
      %v869 = vmul.f32 %v848, %v862
      %v870 = vmul.f32 %v847, %v866
      %v871 = vpack.c.bf16 %v867, %v867
      %v872 = vpack.c.bf16 %v868, %v868
      %v873 = vpack.c.bf16 %v869, %v869
      %v874 = vpack.c.bf16 %v870, %v870
      %v879 = vunpack.c.l.b16 %v871
      %v880 = vunpack.c.l.b16 %v872
      %v881 = vunpack.c.l.b16 %v873
      %v882 = vunpack.c.l.b16 %v874
      %v883 = vpack.c.b16 %v880, %v879
      %v884 = vpack.c.b16 %v882, %v881
      %887 = vst [vmem:[#allocation2 + $0xb0] sm:$0xff] %v883
      %888 = vst [vmem:[#allocation2 + $0xb8] sm:$0xff] %v884
      %889 = vrot.lane.b32.xlu0 %v199, 1
      %v890 = vpop.permute.xlu0 %889
      %891 = vrot.lane.b32.xlu0 %v200, 1
      %v892 = vpop.permute.xlu0 %891
      %893 = vrot.lane.b32.xlu0 %v201, 1
      %v894 = vpop.permute.xlu0 %893
      %895 = vrot.lane.b32.xlu0 %v202, 1
      %v896 = vpop.permute.xlu0 %895
      %vm897 = vcmp.lt.s32.totalorder %v216, 1
      %v898 = vsel %vm897, %v894, %v896
      %v899 = vsel %vm897, %v892, %v894
      %v900 = vsel %vm897, %v890, %v892
      %v901 = vsel %vm897, %v896, %v890
      %v902 = vlaneseq
      %v903 = vshrl.u32 %v902, 7
      %v904 = vsub.s32 4, %v903
      %v905 = vrot.slane %v203, %v904
      %v906 = vlaneseq
      %v907 = vshrl.u32 %v906, 7
      %v908 = vsub.s32 4, %v907
      %v909 = vrot.slane %v204, %v908
      %v910 = vlaneseq
      %v911 = vshrl.u32 %v910, 7
      %v912 = vsub.s32 4, %v911
      %v913 = vrot.slane %v205, %v912
      %v914 = vlaneseq
      %v915 = vshrl.u32 %v914, 7
      %v916 = vsub.s32 4, %v915
      %v917 = vrot.slane %v206, %v916
      %v918 = vmul.f32 %v901, %v905
      %v919 = vmul.f32 %v900, %v909
      %v920 = vmul.f32 %v899, %v913
      %v921 = vmul.f32 %v898, %v917
      %v922 = vpack.c.bf16 %v918, %v918
      %v923 = vpack.c.bf16 %v919, %v919
      %v924 = vpack.c.bf16 %v920, %v920
      %v925 = vpack.c.bf16 %v921, %v921
      %v930 = vunpack.c.l.b16 %v922
      %v931 = vunpack.c.l.b16 %v923
      %v932 = vunpack.c.l.b16 %v924
      %v933 = vunpack.c.l.b16 %v925
      %v934 = vpack.c.b16 %v931, %v930
      %v935 = vpack.c.b16 %v933, %v932
      %938 = vst [vmem:[#allocation2 + $0xc0] sm:$0xff] %v934
      %939 = vst [vmem:[#allocation2 + $0xc8] sm:$0xff] %v935
      %v940 = vpack.c.bf16 %v199, %v199
      %v941 = vpack.c.bf16 %v200, %v200
      %v942 = vpack.c.bf16 %v201, %v201
      %v943 = vpack.c.bf16 %v202, %v202
      %v948 = vunpack.c.l.b16 %v940
      %v949 = vunpack.c.l.b16 %v941
      %v950 = vunpack.c.l.b16 %v942
      %v951 = vunpack.c.l.b16 %v943
      %v952 = vpack.c.b16 %v949, %v948
      %v953 = vpack.c.b16 %v951, %v950
      %956 = vst [vmem:[#allocation2 + $0xd0] sm:$0xff] %v952
      %957 = vst [vmem:[#allocation2 + $0xd8] sm:$0xff] %v953
      %958 = vrot.lane.b32.xlu0 %v199, 127
      %v959 = vpop.permute.xlu0 %958
      %960 = vrot.lane.b32.xlu0 %v200, 127
      %v961 = vpop.permute.xlu0 %960
      %962 = vrot.lane.b32.xlu0 %v201, 127
      %v963 = vpop.permute.xlu0 %962
      %964 = vrot.lane.b32.xlu0 %v202, 127
      %v965 = vpop.permute.xlu0 %964
      %vm966 = vcmp.lt.s32.totalorder %v216, 127
      %v967 = vsel %vm966, %v963, %v965
      %v968 = vsel %vm966, %v961, %v963
      %v969 = vsel %vm966, %v959, %v961
      %v970 = vsel %vm966, %v965, %v959
      %v971 = vlaneseq
      %v972 = vshrl.u32 %v971, 7
      %v973 = vsub.s32 5, %v972
      %v974 = vrot.slane %v203, %v973
      %v975 = vlaneseq
      %v976 = vshrl.u32 %v975, 7
      %v977 = vsub.s32 5, %v976
      %v978 = vrot.slane %v204, %v977
      %v979 = vlaneseq
      %v980 = vshrl.u32 %v979, 7
      %v981 = vsub.s32 5, %v980
      %v982 = vrot.slane %v205, %v981
      %v983 = vlaneseq
      %v984 = vshrl.u32 %v983, 7
      %v985 = vsub.s32 5, %v984
      %v986 = vrot.slane %v206, %v985
      %v987 = vmul.f32 %v969, %v974
      %v988 = vmul.f32 %v968, %v978
      %v989 = vmul.f32 %v967, %v982
      %v990 = vmul.f32 %v970, %v986
      %v991 = vpack.c.bf16 %v987, %v987
      %v992 = vpack.c.bf16 %v988, %v988
      %v993 = vpack.c.bf16 %v989, %v989
      %v994 = vpack.c.bf16 %v990, %v990
      %v999 = vunpack.c.l.b16 %v991
      %v1000 = vunpack.c.l.b16 %v992
      %v1001 = vunpack.c.l.b16 %v993
      %v1002 = vunpack.c.l.b16 %v994
      %v1003 = vpack.c.b16 %v1000, %v999
      %v1004 = vpack.c.b16 %v1002, %v1001
      %1007 = vst [vmem:[#allocation2 + $0xe0] sm:$0xff] %v1003
      %1008 = vst [vmem:[#allocation2 + $0xe8] sm:$0xff] %v1004
      %1009 = vrot.lane.b32.xlu0 %v199, 121
      %v1010 = vpop.permute.xlu0 %1009
      %1011 = vrot.lane.b32.xlu0 %v200, 121
      %v1012 = vpop.permute.xlu0 %1011
      %1013 = vrot.lane.b32.xlu0 %v201, 121
      %v1014 = vpop.permute.xlu0 %1013
      %1015 = vrot.lane.b32.xlu0 %v202, 121
      %v1016 = vpop.permute.xlu0 %1015
      %vm1017 = vcmp.lt.s32.totalorder %v216, 121
      %v1018 = vsel %vm1017, %v1014, %v1016
      %v1019 = vsel %vm1017, %v1012, %v1014
      %v1020 = vsel %vm1017, %v1010, %v1012
      %v1021 = vsel %vm1017, %v1016, %v1010
      %v1022 = vrot.slane %v203, 1
      %v1023 = vrot.slane %v204, 1
      %v1024 = vrot.slane %v205, 1
      %v1025 = vrot.slane %v206, 1
      %v1030 = vmul.f32 %v203, %v1022
      %v1031 = vmul.f32 %v204, %v1023
      %v1032 = vmul.f32 %v205, %v1024
      %v1033 = vmul.f32 %v206, %v1025
      %v1034 = vlaneseq
      %v1035 = vshrl.u32 %v1034, 7
      %v1036 = vsub.s32 3, %v1035
      %v1037 = vrot.slane %v1030, %v1036
      %v1038 = vlaneseq
      %v1039 = vshrl.u32 %v1038, 7
      %v1040 = vsub.s32 3, %v1039
      %v1041 = vrot.slane %v1031, %v1040
      %v1042 = vlaneseq
      %v1043 = vshrl.u32 %v1042, 7
      %v1044 = vsub.s32 3, %v1043
      %v1045 = vrot.slane %v1032, %v1044
      %v1046 = vlaneseq
      %v1047 = vshrl.u32 %v1046, 7
      %v1048 = vsub.s32 3, %v1047
      %v1049 = vrot.slane %v1033, %v1048
      %v1050 = vmul.f32 %v1020, %v1037
      %v1051 = vmul.f32 %v1019, %v1041
      %v1052 = vmul.f32 %v1018, %v1045
      %v1053 = vmul.f32 %v1021, %v1049
      %v1054 = vpack.c.bf16 %v1050, %v1050
      %v1055 = vpack.c.bf16 %v1051, %v1051
      %v1056 = vpack.c.bf16 %v1052, %v1052
      %v1057 = vpack.c.bf16 %v1053, %v1053
      %v1062 = vunpack.c.l.b16 %v1054
      %v1063 = vunpack.c.l.b16 %v1055
      %v1064 = vunpack.c.l.b16 %v1056
      %v1065 = vunpack.c.l.b16 %v1057
      %v1066 = vpack.c.b16 %v1063, %v1062
      %v1067 = vpack.c.b16 %v1065, %v1064
      %1070 = vst [vmem:[#allocation2 + $0xf0] sm:$0xff] %v1066
      %1071 = vst [vmem:[#allocation2 + $0xf8] sm:$0xff] %v1067
      %1072 = vrot.lane.b32.xlu0 %v199, 120
      %v1073 = vpop.permute.xlu0 %1072
      %1074 = vrot.lane.b32.xlu0 %v200, 120
      %v1075 = vpop.permute.xlu0 %1074
      %1076 = vrot.lane.b32.xlu0 %v201, 120
      %v1077 = vpop.permute.xlu0 %1076
      %1078 = vrot.lane.b32.xlu0 %v202, 120
      %v1079 = vpop.permute.xlu0 %1078
      %vm1080 = vcmp.lt.s32.totalorder %v216, 120
      %v1081 = vsel %vm1080, %v1077, %v1079
      %v1082 = vsel %vm1080, %v1075, %v1077
      %v1083 = vsel %vm1080, %v1073, %v1075
      %v1084 = vsel %vm1080, %v1079, %v1073
      %v1085 = vlaneseq
      %v1086 = vshrl.u32 %v1085, 7
      %v1087 = vsub.s32 3, %v1086
      %v1088 = vrot.slane %v203, %v1087
      %v1089 = vlaneseq
      %v1090 = vshrl.u32 %v1089, 7
      %v1091 = vsub.s32 3, %v1090
      %v1092 = vrot.slane %v204, %v1091
      %v1093 = vlaneseq
      %v1094 = vshrl.u32 %v1093, 7
      %v1095 = vsub.s32 3, %v1094
      %v1096 = vrot.slane %v205, %v1095
      %v1097 = vlaneseq
      %v1098 = vshrl.u32 %v1097, 7
      %v1099 = vsub.s32 3, %v1098
      %v1100 = vrot.slane %v206, %v1099
      %v1101 = vmul.f32 %v1083, %v1088
      %v1102 = vmul.f32 %v1082, %v1092
      %v1103 = vmul.f32 %v1081, %v1096
      %v1104 = vmul.f32 %v1084, %v1100
      %v1105 = vpack.c.bf16 %v1101, %v1101
      %v1106 = vpack.c.bf16 %v1102, %v1102
      %v1107 = vpack.c.bf16 %v1103, %v1103
      %v1108 = vpack.c.bf16 %v1104, %v1104
      %v1113 = vunpack.c.l.b16 %v1105
      %v1114 = vunpack.c.l.b16 %v1106
      %v1115 = vunpack.c.l.b16 %v1107
      %v1116 = vunpack.c.l.b16 %v1108
      %v1117 = vpack.c.b16 %v1114, %v1113
      %v1118 = vpack.c.b16 %v1116, %v1115
      %1121 = vst [vmem:[#allocation2 + $0x100] sm:$0xff] %v1117
      %1122 = vst [vmem:[#allocation2 + $0x108] sm:$0xff] %v1118
      %1123 = vrot.lane.b32.xlu0 %v199, 119
      %v1124 = vpop.permute.xlu0 %1123
      %1125 = vrot.lane.b32.xlu0 %v200, 119
      %v1126 = vpop.permute.xlu0 %1125
      %1127 = vrot.lane.b32.xlu0 %v201, 119
      %v1128 = vpop.permute.xlu0 %1127
      %1129 = vrot.lane.b32.xlu0 %v202, 119
      %v1130 = vpop.permute.xlu0 %1129
      %vm1131 = vcmp.lt.s32.totalorder %v216, 119
      %v1132 = vsel %vm1131, %v1128, %v1130
      %v1133 = vsel %vm1131, %v1126, %v1128
      %v1134 = vsel %vm1131, %v1124, %v1126
      %v1135 = vsel %vm1131, %v1130, %v1124
      %v1136 = vlaneseq
      %v1137 = vshrl.u32 %v1136, 7
      %v1138 = vsub.s32 3, %v1137
      %v1139 = vrot.slane %v234, %v1138
      %v1140 = vlaneseq
      %v1141 = vshrl.u32 %v1140, 7
      %v1142 = vsub.s32 3, %v1141
      %v1143 = vrot.slane %v235, %v1142
      %v1144 = vlaneseq
      %v1145 = vshrl.u32 %v1144, 7
      %v1146 = vsub.s32 3, %v1145
      %v1147 = vrot.slane %v236, %v1146
      %v1148 = vlaneseq
      %v1149 = vshrl.u32 %v1148, 7
      %v1150 = vsub.s32 3, %v1149
      %v1151 = vrot.slane %v237, %v1150
      %v1152 = vmul.f32 %v1134, %v1139
      %v1153 = vmul.f32 %v1133, %v1143
      %v1154 = vmul.f32 %v1132, %v1147
      %v1155 = vmul.f32 %v1135, %v1151
      %v1156 = vpack.c.bf16 %v1152, %v1152
      %v1157 = vpack.c.bf16 %v1153, %v1153
      %v1158 = vpack.c.bf16 %v1154, %v1154
      %v1159 = vpack.c.bf16 %v1155, %v1155
      %v1164 = vunpack.c.l.b16 %v1156
      %v1165 = vunpack.c.l.b16 %v1157
      %v1166 = vunpack.c.l.b16 %v1158
      %v1167 = vunpack.c.l.b16 %v1159
      %v1168 = vpack.c.b16 %v1165, %v1164
      %v1169 = vpack.c.b16 %v1167, %v1166
      %1172 = vst [vmem:[#allocation2 + $0x110] sm:$0xff] %v1168
      %1173 = vst [vmem:[#allocation2 + $0x118] sm:$0xff] %v1169
      %v1174 = vmul.f32 %v1030, %v576
      %v1175 = vmul.f32 %v1031, %v577
      %v1176 = vmul.f32 %v1032, %v578
      %v1177 = vmul.f32 %v1033, %v579
      %v1178 = vlaneseq
      %v1179 = vshrl.u32 %v1178, 7
      %v1180 = vsub.s32 1, %v1179
      %v1181 = vrot.slane %v1174, %v1180
      %v1182 = vlaneseq
      %v1183 = vshrl.u32 %v1182, 7
      %v1184 = vsub.s32 1, %v1183
      %v1185 = vrot.slane %v1175, %v1184
      %v1186 = vlaneseq
      %v1187 = vshrl.u32 %v1186, 7
      %v1188 = vsub.s32 1, %v1187
      %v1189 = vrot.slane %v1176, %v1188
      %v1190 = vlaneseq
      %v1191 = vshrl.u32 %v1190, 7
      %v1192 = vsub.s32 1, %v1191
      %v1193 = vrot.slane %v1177, %v1192
      %v1194 = vmul.f32 %v220, %v1181
      %v1195 = vmul.f32 %v219, %v1185
      %v1196 = vmul.f32 %v218, %v1189
      %v1197 = vmul.f32 %v221, %v1193
      %v1198 = vpack.c.bf16 %v1194, %v1194
      %v1199 = vpack.c.bf16 %v1195, %v1195
      %v1200 = vpack.c.bf16 %v1196, %v1196
      %v1201 = vpack.c.bf16 %v1197, %v1197
      %v1206 = vunpack.c.l.b16 %v1198
      %v1207 = vunpack.c.l.b16 %v1199
      %v1208 = vunpack.c.l.b16 %v1200
      %v1209 = vunpack.c.l.b16 %v1201
      %v1210 = vpack.c.b16 %v1207, %v1206
      %v1211 = vpack.c.b16 %v1209, %v1208
      %1214 = vst [vmem:[#allocation2 + $0x120] sm:$0xff] %v1210
      %1215 = vst [vmem:[#allocation2 + $0x128] sm:$0xff] %v1211
      %v1216 = vlaneseq
      %v1217 = vshrl.u32 %v1216, 7
      %v1218 = vsub.s32 1, %v1217
      %v1219 = vrot.slane %v1030, %v1218
      %v1220 = vlaneseq
      %v1221 = vshrl.u32 %v1220, 7
      %v1222 = vsub.s32 1, %v1221
      %v1223 = vrot.slane %v1031, %v1222
      %v1224 = vlaneseq
      %v1225 = vshrl.u32 %v1224, 7
      %v1226 = vsub.s32 1, %v1225
      %v1227 = vrot.slane %v1032, %v1226
      %v1228 = vlaneseq
      %v1229 = vshrl.u32 %v1228, 7
      %v1230 = vsub.s32 1, %v1229
      %v1231 = vrot.slane %v1033, %v1230
      %v1232 = vmul.f32 %v299, %v1219
      %v1233 = vmul.f32 %v298, %v1223
      %v1234 = vmul.f32 %v297, %v1227
      %v1235 = vmul.f32 %v300, %v1231
      %v1236 = vpack.c.bf16 %v1232, %v1232
      %v1237 = vpack.c.bf16 %v1233, %v1233
      %v1238 = vpack.c.bf16 %v1234, %v1234
      %v1239 = vpack.c.bf16 %v1235, %v1235
      %v1244 = vunpack.c.l.b16 %v1236
      %v1245 = vunpack.c.l.b16 %v1237
      %v1246 = vunpack.c.l.b16 %v1238
      %v1247 = vunpack.c.l.b16 %v1239
      %v1248 = vpack.c.b16 %v1245, %v1244
      %v1249 = vpack.c.b16 %v1247, %v1246
      %1252 = vst [vmem:[#allocation2 + $0x130] sm:$0xff] %v1248
      %1253 = vst [vmem:[#allocation2 + $0x138] sm:$0xff] %v1249
      %v1254 = vmul.f32 %v1030, %v238
      %v1255 = vmul.f32 %v1031, %v239
      %v1256 = vmul.f32 %v1032, %v240
      %v1257 = vmul.f32 %v1033, %v241
      %v1258 = vlaneseq
      %v1259 = vshrl.u32 %v1258, 7
      %v1260 = vsub.s32 1, %v1259
      %v1261 = vrot.slane %v1254, %v1260
      %v1262 = vlaneseq
      %v1263 = vshrl.u32 %v1262, 7
      %v1264 = vsub.s32 1, %v1263
      %v1265 = vrot.slane %v1255, %v1264
      %v1266 = vlaneseq
      %v1267 = vshrl.u32 %v1266, 7
      %v1268 = vsub.s32 1, %v1267
      %v1269 = vrot.slane %v1256, %v1268
      %v1270 = vlaneseq
      %v1271 = vshrl.u32 %v1270, 7
      %v1272 = vsub.s32 1, %v1271
      %v1273 = vrot.slane %v1257, %v1272
      %v1274 = vmul.f32 %v350, %v1261
      %v1275 = vmul.f32 %v349, %v1265
      %v1276 = vmul.f32 %v348, %v1269
      %v1277 = vmul.f32 %v351, %v1273
      %v1278 = vpack.c.bf16 %v1274, %v1274
      %v1279 = vpack.c.bf16 %v1275, %v1275
      %v1280 = vpack.c.bf16 %v1276, %v1276
      %v1281 = vpack.c.bf16 %v1277, %v1277
      %v1286 = vunpack.c.l.b16 %v1278
      %v1287 = vunpack.c.l.b16 %v1279
      %v1288 = vunpack.c.l.b16 %v1280
      %v1289 = vunpack.c.l.b16 %v1281
      %v1290 = vpack.c.b16 %v1287, %v1286
      %v1291 = vpack.c.b16 %v1289, %v1288
      %1294 = vst [vmem:[#allocation2 + $0x140] sm:$0xff] %v1290
      %1295 = vst [vmem:[#allocation2 + $0x148] sm:$0xff] %v1291
      %v1296 = vlaneseq
      %v1297 = vshrl.u32 %v1296, 7
      %v1298 = vsub.s32 1, %v1297
      %v1299 = vrot.slane %v584, %v1298
      %v1300 = vlaneseq
      %v1301 = vshrl.u32 %v1300, 7
      %v1302 = vsub.s32 1, %v1301
      %v1303 = vrot.slane %v585, %v1302
      %v1304 = vlaneseq
      %v1305 = vshrl.u32 %v1304, 7
      %v1306 = vsub.s32 1, %v1305
      %v1307 = vrot.slane %v586, %v1306
      %v1308 = vlaneseq
      %v1309 = vshrl.u32 %v1308, 7
      %v1310 = vsub.s32 1, %v1309
      %v1311 = vrot.slane %v587, %v1310
      %v1312 = vmul.f32 %v413, %v1299
      %v1313 = vmul.f32 %v412, %v1303
      %v1314 = vmul.f32 %v411, %v1307
      %v1315 = vmul.f32 %v414, %v1311
      %v1316 = vpack.c.bf16 %v1312, %v1312
      %v1317 = vpack.c.bf16 %v1313, %v1313
      %v1318 = vpack.c.bf16 %v1314, %v1314
      %v1319 = vpack.c.bf16 %v1315, %v1315
      %v1324 = vunpack.c.l.b16 %v1316
      %v1325 = vunpack.c.l.b16 %v1317
      %v1326 = vunpack.c.l.b16 %v1318
      %v1327 = vunpack.c.l.b16 %v1319
      %v1328 = vpack.c.b16 %v1325, %v1324
      %v1329 = vpack.c.b16 %v1327, %v1326
      %1332 = vst [vmem:[#allocation2 + $0x150] sm:$0xff] %v1328
      %1333 = vst [vmem:[#allocation2 + $0x158] sm:$0xff] %v1329
      %v1334 = vlaneseq
      %v1335 = vshrl.u32 %v1334, 7
      %v1336 = vsub.s32 1, %v1335
      %v1337 = vrot.slane %v203, %v1336
      %v1338 = vlaneseq
      %v1339 = vshrl.u32 %v1338, 7
      %v1340 = vsub.s32 1, %v1339
      %v1341 = vrot.slane %v204, %v1340
      %v1342 = vlaneseq
      %v1343 = vshrl.u32 %v1342, 7
      %v1344 = vsub.s32 1, %v1343
      %v1345 = vrot.slane %v205, %v1344
      %v1346 = vlaneseq
      %v1347 = vshrl.u32 %v1346, 7
      %v1348 = vsub.s32 1, %v1347
      %v1349 = vrot.slane %v206, %v1348
      %v1350 = vmul.f32 %v468, %v1337
      %v1351 = vmul.f32 %v467, %v1341
      %v1352 = vmul.f32 %v466, %v1345
      %v1353 = vmul.f32 %v469, %v1349
      %v1354 = vpack.c.bf16 %v1350, %v1350
      %v1355 = vpack.c.bf16 %v1351, %v1351
      %v1356 = vpack.c.bf16 %v1352, %v1352
      %v1357 = vpack.c.bf16 %v1353, %v1353
      %v1362 = vunpack.c.l.b16 %v1354
      %v1363 = vunpack.c.l.b16 %v1355
      %v1364 = vunpack.c.l.b16 %v1356
      %v1365 = vunpack.c.l.b16 %v1357
      %v1366 = vpack.c.b16 %v1363, %v1362
      %v1367 = vpack.c.b16 %v1365, %v1364
      %1370 = vst [vmem:[#allocation2 + $0x160] sm:$0xff] %v1366
      %1371 = vst [vmem:[#allocation2 + $0x168] sm:$0xff] %v1367
      %v1372 = vlaneseq
      %v1373 = vshrl.u32 %v1372, 7
      %v1374 = vsub.s32 1, %v1373
      %v1375 = vrot.slane %v415, %v1374
      %v1376 = vlaneseq
      %v1377 = vshrl.u32 %v1376, 7
      %v1378 = vsub.s32 1, %v1377
      %v1379 = vrot.slane %v416, %v1378
      %v1380 = vlaneseq
      %v1381 = vshrl.u32 %v1380, 7
      %v1382 = vsub.s32 1, %v1381
      %v1383 = vrot.slane %v417, %v1382
      %v1384 = vlaneseq
      %v1385 = vshrl.u32 %v1384, 7
      %v1386 = vsub.s32 1, %v1385
      %v1387 = vrot.slane %v418, %v1386
      %v1388 = vmul.f32 %v519, %v1375
      %v1389 = vmul.f32 %v518, %v1379
      %v1390 = vmul.f32 %v517, %v1383
      %v1391 = vmul.f32 %v520, %v1387
      %v1392 = vpack.c.bf16 %v1388, %v1388
      %v1393 = vpack.c.bf16 %v1389, %v1389
      %v1394 = vpack.c.bf16 %v1390, %v1390
      %v1395 = vpack.c.bf16 %v1391, %v1391
      %v1400 = vunpack.c.l.b16 %v1392
      %v1401 = vunpack.c.l.b16 %v1393
      %v1402 = vunpack.c.l.b16 %v1394
      %v1403 = vunpack.c.l.b16 %v1395
      %v1404 = vpack.c.b16 %v1401, %v1400
      %v1405 = vpack.c.b16 %v1403, %v1402
      %1408 = vst [vmem:[#allocation2 + $0x170] sm:$0xff] %v1404
      %1409 = vst [vmem:[#allocation2 + $0x178] sm:$0xff] %v1405
      %v1410 = vmul.f32 %v234, %v576
      %v1411 = vmul.f32 %v235, %v577
      %v1412 = vmul.f32 %v236, %v578
      %v1413 = vmul.f32 %v237, %v579
      %v1414 = vlaneseq
      %v1415 = vshrl.u32 %v1414, 7
      %v1416 = vsub.s32 1, %v1415
      %v1417 = vrot.slane %v1410, %v1416
      %v1418 = vlaneseq
      %v1419 = vshrl.u32 %v1418, 7
      %v1420 = vsub.s32 1, %v1419
      %v1421 = vrot.slane %v1411, %v1420
      %v1422 = vlaneseq
      %v1423 = vshrl.u32 %v1422, 7
      %v1424 = vsub.s32 1, %v1423
      %v1425 = vrot.slane %v1412, %v1424
      %v1426 = vlaneseq
      %v1427 = vshrl.u32 %v1426, 7
      %v1428 = vsub.s32 1, %v1427
      %v1429 = vrot.slane %v1413, %v1428
      %v1430 = vmul.f32 %v574, %v1417
      %v1431 = vmul.f32 %v573, %v1421
      %v1432 = vmul.f32 %v572, %v1425
      %v1433 = vmul.f32 %v575, %v1429
      %v1434 = vpack.c.bf16 %v1430, %v1430
      %v1435 = vpack.c.bf16 %v1431, %v1431
      %v1436 = vpack.c.bf16 %v1432, %v1432
      %v1437 = vpack.c.bf16 %v1433, %v1433
      %v1442 = vunpack.c.l.b16 %v1434
      %v1443 = vunpack.c.l.b16 %v1435
      %v1444 = vunpack.c.l.b16 %v1436
      %v1445 = vunpack.c.l.b16 %v1437
      %v1446 = vpack.c.b16 %v1443, %v1442
      %v1447 = vpack.c.b16 %v1445, %v1444
      %1450 = vst [vmem:[#allocation2 + $0x180] sm:$0xff] %v1446
      %1451 = vst [vmem:[#allocation2 + $0x188] sm:$0xff] %v1447
      %v1452 = vlaneseq
      %v1453 = vshrl.u32 %v1452, 7
      %v1454 = vsub.s32 1, %v1453
      %v1455 = vrot.slane %v234, %v1454
      %v1456 = vlaneseq
      %v1457 = vshrl.u32 %v1456, 7
      %v1458 = vsub.s32 1, %v1457
      %v1459 = vrot.slane %v235, %v1458
      %v1460 = vlaneseq
      %v1461 = vshrl.u32 %v1460, 7
      %v1462 = vsub.s32 1, %v1461
      %v1463 = vrot.slane %v236, %v1462
      %v1464 = vlaneseq
      %v1465 = vshrl.u32 %v1464, 7
      %v1466 = vsub.s32 1, %v1465
      %v1467 = vrot.slane %v237, %v1466
      %v1468 = vmul.f32 %v641, %v1455
      %v1469 = vmul.f32 %v640, %v1459
      %v1470 = vmul.f32 %v639, %v1463
      %v1471 = vmul.f32 %v642, %v1467
      %v1472 = vpack.c.bf16 %v1468, %v1468
      %v1473 = vpack.c.bf16 %v1469, %v1469
      %v1474 = vpack.c.bf16 %v1470, %v1470
      %v1475 = vpack.c.bf16 %v1471, %v1471
      %v1480 = vunpack.c.l.b16 %v1472
      %v1481 = vunpack.c.l.b16 %v1473
      %v1482 = vunpack.c.l.b16 %v1474
      %v1483 = vunpack.c.l.b16 %v1475
      %v1484 = vpack.c.b16 %v1481, %v1480
      %v1485 = vpack.c.b16 %v1483, %v1482
      %1488 = vst [vmem:[#allocation2 + $0x190] sm:$0xff] %v1484
      %1489 = vst [vmem:[#allocation2 + $0x198] sm:$0xff] %v1485
      %v1490 = vlaneseq
      %v1491 = vshrl.u32 %v1490, 7
      %v1492 = vsub.s32 1, %v1491
      %v1493 = vrot.slane %v246, %v1492
      %v1494 = vlaneseq
      %v1495 = vshrl.u32 %v1494, 7
      %v1496 = vsub.s32 1, %v1495
      %v1497 = vrot.slane %v247, %v1496
      %v1498 = vlaneseq
      %v1499 = vshrl.u32 %v1498, 7
      %v1500 = vsub.s32 1, %v1499
      %v1501 = vrot.slane %v248, %v1500
      %v1502 = vlaneseq
      %v1503 = vshrl.u32 %v1502, 7
      %v1504 = vsub.s32 1, %v1503
      %v1505 = vrot.slane %v249, %v1504
      %v1506 = vmul.f32 %v692, %v1493
      %v1507 = vmul.f32 %v691, %v1497
      %v1508 = vmul.f32 %v690, %v1501
      %v1509 = vmul.f32 %v693, %v1505
      %v1510 = vpack.c.bf16 %v1506, %v1506
      %v1511 = vpack.c.bf16 %v1507, %v1507
      %v1512 = vpack.c.bf16 %v1508, %v1508
      %v1513 = vpack.c.bf16 %v1509, %v1509
      %v1518 = vunpack.c.l.b16 %v1510
      %v1519 = vunpack.c.l.b16 %v1511
      %v1520 = vunpack.c.l.b16 %v1512
      %v1521 = vunpack.c.l.b16 %v1513
      %v1522 = vpack.c.b16 %v1519, %v1518
      %v1523 = vpack.c.b16 %v1521, %v1520
      %1526 = vst [vmem:[#allocation2 + $0x1a0] sm:$0xff] %v1522
      %1527 = vst [vmem:[#allocation2 + $0x1a8] sm:$0xff] %v1523
      %v1528 = vld [vmem:[%s1] sm:$0xff]
      %v1529 = vld [vmem:[#allocation2] sm:$0xff]
      %v1530 = vld [vmem:[#allocation2 + $0x8] sm:$0xff]
      %v1531 = vld [vmem:[#allocation2 + $0x10] sm:$0xff]
      %v1532 = vld [vmem:[#allocation2 + $0x18] sm:$0xff]
      %v1533 = vld [vmem:[#allocation2 + $0x20] sm:$0xff]
      %v1534 = vld [vmem:[#allocation2 + $0x28] sm:$0xff]
      %v1535 = vld [vmem:[#allocation2 + $0x30] sm:$0xff]
      %v1536 = vld [vmem:[#allocation2 + $0x38] sm:$0xff]
      %v1537 = vld [vmem:[#allocation2 + $0x40] sm:$0xff]
      %v1538 = vld [vmem:[#allocation2 + $0x48] sm:$0xff]
      %v1539 = vld [vmem:[#allocation2 + $0x50] sm:$0xff]
      %v1540 = vld [vmem:[#allocation2 + $0x58] sm:$0xff]
      %v1541 = vld [vmem:[#allocation2 + $0x60] sm:$0xff]
      %v1542 = vld [vmem:[#allocation2 + $0x68] sm:$0xff]
      %v1543 = vld [vmem:[#allocation2 + $0x70] sm:$0xff]
      %v1544 = vld [vmem:[#allocation2 + $0x78] sm:$0xff]
      %v1545 = vld [vmem:[#allocation2 + $0x80] sm:$0xff]
      %v1546 = vld [vmem:[#allocation2 + $0x88] sm:$0xff]
      %v1547 = vld [vmem:[#allocation2 + $0x90] sm:$0xff]
      %v1548 = vld [vmem:[#allocation2 + $0x98] sm:$0xff]
      %v1549 = vld [vmem:[#allocation2 + $0xa0] sm:$0xff]
      %v1550 = vld [vmem:[#allocation2 + $0xa8] sm:$0xff]
      %v1551 = vld [vmem:[#allocation2 + $0xb0] sm:$0xff]
      %v1552 = vld [vmem:[#allocation2 + $0xb8] sm:$0xff]
      %v1553 = vld [vmem:[#allocation2 + $0xc0] sm:$0xff]
      %v1554 = vld [vmem:[#allocation2 + $0xc8] sm:$0xff]
      %v1555 = vld [vmem:[#allocation2 + $0xd0] sm:$0xff]
      %v1556 = vld [vmem:[#allocation2 + $0xd8] sm:$0xff]
      %v1557 = vld [vmem:[#allocation2 + $0xe0] sm:$0xff]
      %v1558 = vld [vmem:[#allocation2 + $0xe8] sm:$0xff]
      %v1559 = vld [vmem:[#allocation2 + $0xf0] sm:$0xff]
      %v1560 = vld [vmem:[#allocation2 + $0xf8] sm:$0xff]
      %v1561 = vld [vmem:[#allocation2 + $0x100] sm:$0xff]
      %v1562 = vld [vmem:[#allocation2 + $0x108] sm:$0xff]
      %v1563 = vld [vmem:[#allocation2 + $0x110] sm:$0xff]
      %v1564 = vld [vmem:[#allocation2 + $0x118] sm:$0xff]
      %v1565 = vld [vmem:[#allocation2 + $0x120] sm:$0xff]
      %v1566 = vld [vmem:[#allocation2 + $0x128] sm:$0xff]
      %v1567 = vld [vmem:[#allocation2 + $0x130] sm:$0xff]
      %v1568 = vld [vmem:[#allocation2 + $0x138] sm:$0xff]
      %v1569 = vld [vmem:[#allocation2 + $0x140] sm:$0xff]
      %v1570 = vld [vmem:[#allocation2 + $0x148] sm:$0xff]
      %v1571 = vld [vmem:[#allocation2 + $0x150] sm:$0xff]
      %v1572 = vld [vmem:[#allocation2 + $0x158] sm:$0xff]
      %v1573 = vld [vmem:[#allocation2 + $0x160] sm:$0xff]
      %v1574 = vld [vmem:[#allocation2 + $0x168] sm:$0xff]
      %v1575 = vld [vmem:[#allocation2 + $0x170] sm:$0xff]
      %v1576 = vld [vmem:[#allocation2 + $0x178] sm:$0xff]
      %v1577 = vld [vmem:[#allocation2 + $0x180] sm:$0xff]
      %v1578 = vld [vmem:[#allocation2 + $0x188] sm:$0xff]
      %v1579 = vld [vmem:[#allocation2 + $0x190] sm:$0xff]
      %v1580 = vld [vmem:[#allocation2 + $0x198] sm:$0xff]
      %v1581 = vld [vmem:[#allocation2 + $0x1a0] sm:$0xff]
      %v1582 = vld [vmem:[#allocation2 + $0x1a8] sm:$0xff]
      %v1583 = vld [vmem:[%s2] sm:$0xff]
      %1585 = vset.pattern.permute.xlu0 0
      %1586 = vperm.xlu0 %1585, %v1583
      %v1587 = vpop.permute.xlu0 %1586
      %v1590 = vunpack.c.l.b16 %v1528
      %v1591 = vunpack.c.h.b16 %v1528
      %v1592 = vpack.c.b16 %v1590, %v1590
      %v1593 = vpack.c.b16 %v1591, %v1591
      %v1649 = vunpack.c.l.b16 %v1529
      %v1650 = vunpack.c.h.b16 %v1529
      %v1651 = vunpack.c.l.b16 %v1530
      %v1652 = vunpack.c.h.b16 %v1530
      %v1653 = vunpack.c.l.b16 %v1531
      %v1654 = vunpack.c.h.b16 %v1531
      %v1655 = vunpack.c.l.b16 %v1532
      %v1656 = vunpack.c.h.b16 %v1532
      %v1657 = vunpack.c.l.b16 %v1533
      %v1658 = vunpack.c.h.b16 %v1533
      %v1659 = vunpack.c.l.b16 %v1534
      %v1660 = vunpack.c.h.b16 %v1534
      %v1661 = vunpack.c.l.b16 %v1535
      %v1662 = vunpack.c.h.b16 %v1535
      %v1663 = vunpack.c.l.b16 %v1536
      %v1664 = vunpack.c.h.b16 %v1536
      %v1665 = vunpack.c.l.b16 %v1537
      %v1666 = vunpack.c.h.b16 %v1537
      %v1667 = vunpack.c.l.b16 %v1538
      %v1668 = vunpack.c.h.b16 %v1538
      %v1669 = vunpack.c.l.b16 %v1539
      %v1670 = vunpack.c.h.b16 %v1539
      %v1671 = vunpack.c.l.b16 %v1540
      %v1672 = vunpack.c.h.b16 %v1540
      %v1673 = vunpack.c.l.b16 %v1541
      %v1674 = vunpack.c.h.b16 %v1541
      %v1675 = vunpack.c.l.b16 %v1542
      %v1676 = vunpack.c.h.b16 %v1542
      %v1677 = vunpack.c.l.b16 %v1543
      %v1678 = vunpack.c.h.b16 %v1543
      %v1679 = vunpack.c.l.b16 %v1544
      %v1680 = vunpack.c.h.b16 %v1544
      %v1681 = vunpack.c.l.b16 %v1545
      %v1682 = vunpack.c.h.b16 %v1545
      %v1683 = vunpack.c.l.b16 %v1546
      %v1684 = vunpack.c.h.b16 %v1546
      %v1685 = vunpack.c.l.b16 %v1547
      %v1686 = vunpack.c.h.b16 %v1547
      %v1687 = vunpack.c.l.b16 %v1548
      %v1688 = vunpack.c.h.b16 %v1548
      %v1689 = vunpack.c.l.b16 %v1549
      %v1690 = vunpack.c.h.b16 %v1549
      %v1691 = vunpack.c.l.b16 %v1550
      %v1692 = vunpack.c.h.b16 %v1550
      %v1693 = vunpack.c.l.b16 %v1551
      %v1694 = vunpack.c.h.b16 %v1551
      %v1695 = vunpack.c.l.b16 %v1552
      %v1696 = vunpack.c.h.b16 %v1552
      %v1697 = vunpack.c.l.b16 %v1553
      %v1698 = vunpack.c.h.b16 %v1553
      %v1699 = vunpack.c.l.b16 %v1554
      %v1700 = vunpack.c.h.b16 %v1554
      %v1701 = vunpack.c.l.b16 %v1555
      %v1702 = vunpack.c.h.b16 %v1555
      %v1703 = vunpack.c.l.b16 %v1556
      %v1704 = vunpack.c.h.b16 %v1556
      %v1705 = vunpack.c.l.b16 %v1557
      %v1706 = vunpack.c.h.b16 %v1557
      %v1707 = vunpack.c.l.b16 %v1558
      %v1708 = vunpack.c.h.b16 %v1558
      %v1709 = vunpack.c.l.b16 %v1559
      %v1710 = vunpack.c.h.b16 %v1559
      %v1711 = vunpack.c.l.b16 %v1560
      %v1712 = vunpack.c.h.b16 %v1560
      %v1713 = vunpack.c.l.b16 %v1561
      %v1714 = vunpack.c.h.b16 %v1561
      %v1715 = vunpack.c.l.b16 %v1562
      %v1716 = vunpack.c.h.b16 %v1562
      %v1717 = vunpack.c.l.b16 %v1563
      %v1718 = vunpack.c.h.b16 %v1563
      %v1719 = vunpack.c.l.b16 %v1564
      %v1720 = vunpack.c.h.b16 %v1564
      %v1721 = vunpack.c.l.b16 %v1565
      %v1722 = vunpack.c.h.b16 %v1565
      %v1723 = vunpack.c.l.b16 %v1566
      %v1724 = vunpack.c.h.b16 %v1566
      %v1725 = vunpack.c.l.b16 %v1567
      %v1726 = vunpack.c.h.b16 %v1567
      %v1727 = vunpack.c.l.b16 %v1568
      %v1728 = vunpack.c.h.b16 %v1568
      %v1729 = vunpack.c.l.b16 %v1569
      %v1730 = vunpack.c.h.b16 %v1569
      %v1731 = vunpack.c.l.b16 %v1570
      %v1732 = vunpack.c.h.b16 %v1570
      %v1733 = vunpack.c.l.b16 %v1571
      %v1734 = vunpack.c.h.b16 %v1571
      %v1735 = vunpack.c.l.b16 %v1572
      %v1736 = vunpack.c.h.b16 %v1572
      %v1737 = vunpack.c.l.b16 %v1573
      %v1738 = vunpack.c.h.b16 %v1573
      %v1739 = vunpack.c.l.b16 %v1574
      %v1740 = vunpack.c.h.b16 %v1574
      %v1741 = vunpack.c.l.b16 %v1575
      %v1742 = vunpack.c.h.b16 %v1575
      %v1743 = vunpack.c.l.b16 %v1576
      %v1744 = vunpack.c.h.b16 %v1576
      %v1745 = vunpack.c.l.b16 %v1577
      %v1746 = vunpack.c.h.b16 %v1577
      %v1747 = vunpack.c.l.b16 %v1578
      %v1748 = vunpack.c.h.b16 %v1578
      %v1749 = vunpack.c.l.b16 %v1579
      %v1750 = vunpack.c.h.b16 %v1579
      %v1751 = vunpack.c.l.b16 %v1580
      %v1752 = vunpack.c.h.b16 %v1580
      %v1753 = vunpack.c.l.b16 %v1581
      %v1754 = vunpack.c.h.b16 %v1581
      %v1755 = vunpack.c.l.b16 %v1582
      %v1756 = vunpack.c.h.b16 %v1582
      %v1757 = vpack.c.b16 %v1653, %v1649
      %v1758 = vpack.c.b16 %v1654, %v1650
      %v1759 = vpack.c.b16 %v1655, %v1651
      %v1760 = vpack.c.b16 %v1656, %v1652
      %v1761 = vpack.c.b16 %v1661, %v1657
      %v1762 = vpack.c.b16 %v1662, %v1658
      %v1763 = vpack.c.b16 %v1663, %v1659
      %v1764 = vpack.c.b16 %v1664, %v1660
      %v1765 = vpack.c.b16 %v1669, %v1665
      %v1766 = vpack.c.b16 %v1670, %v1666
      %v1767 = vpack.c.b16 %v1671, %v1667
      %v1768 = vpack.c.b16 %v1672, %v1668
      %v1769 = vpack.c.b16 %v1677, %v1673
      %v1770 = vpack.c.b16 %v1678, %v1674
      %v1771 = vpack.c.b16 %v1679, %v1675
      %v1772 = vpack.c.b16 %v1680, %v1676
      %v1773 = vpack.c.b16 %v1685, %v1681
      %v1774 = vpack.c.b16 %v1686, %v1682
      %v1775 = vpack.c.b16 %v1687, %v1683
      %v1776 = vpack.c.b16 %v1688, %v1684
      %v1777 = vpack.c.b16 %v1693, %v1689
      %v1778 = vpack.c.b16 %v1694, %v1690
      %v1779 = vpack.c.b16 %v1695, %v1691
      %v1780 = vpack.c.b16 %v1696, %v1692
      %v1781 = vpack.c.b16 %v1701, %v1697
      %v1782 = vpack.c.b16 %v1702, %v1698
      %v1783 = vpack.c.b16 %v1703, %v1699
      %v1784 = vpack.c.b16 %v1704, %v1700
      %v1785 = vpack.c.b16 %v1709, %v1705
      %v1786 = vpack.c.b16 %v1710, %v1706
      %v1787 = vpack.c.b16 %v1711, %v1707
      %v1788 = vpack.c.b16 %v1712, %v1708
      %v1789 = vpack.c.b16 %v1717, %v1713
      %v1790 = vpack.c.b16 %v1718, %v1714
      %v1791 = vpack.c.b16 %v1719, %v1715
      %v1792 = vpack.c.b16 %v1720, %v1716
      %v1793 = vpack.c.b16 %v1725, %v1721
      %v1794 = vpack.c.b16 %v1726, %v1722
      %v1795 = vpack.c.b16 %v1727, %v1723
      %v1796 = vpack.c.b16 %v1728, %v1724
      %v1797 = vpack.c.b16 %v1733, %v1729
      %v1798 = vpack.c.b16 %v1734, %v1730
      %v1799 = vpack.c.b16 %v1735, %v1731
      %v1800 = vpack.c.b16 %v1736, %v1732
      %v1801 = vpack.c.b16 %v1741, %v1737
      %v1802 = vpack.c.b16 %v1742, %v1738
      %v1803 = vpack.c.b16 %v1743, %v1739
      %v1804 = vpack.c.b16 %v1744, %v1740
      %v1805 = vpack.c.b16 %v1749, %v1745
      %v1806 = vpack.c.b16 %v1750, %v1746
      %v1807 = vpack.c.b16 %v1751, %v1747
      %v1808 = vpack.c.b16 %v1752, %v1748
      %v1809 = vpack.c.b16 %v1753, %v1753
      %v1810 = vpack.c.b16 %v1754, %v1754
      %v1811 = vpack.c.b16 %v1755, %v1755
      %v1812 = vpack.c.b16 %v1756, %v1756
      %vm1865 = vcmask 719872
      %v1867 = vsel %vm1865, %v1593, 0
      %vm1869 = vcmask 1043456
      %v1871 = vsel %vm1869, %v1809, 0
      %v1874 = vsel %vm1869, %v1810, 0
      %v1877 = vsel %vm1869, %v1811, 0
      %v1880 = vsel %vm1869, %v1812, 0
      %1882 = vmatprep.subr.bf16.mxu0 %v1786
      %1883 = vmatpush1.bf16.msra.mxu0 %v1785
      %1884 = vmatprep.subr.bf16.mxu0 %v1782
      %1885 = vmatpush1.bf16.msra.mxu0 %v1781
      %1886 = vmatprep.subr.bf16.mxu0 %v1778
      %1887 = vmatpush1.bf16.msra.mxu0 %v1777
      %1888 = vmatprep.subr.bf16.mxu0 %v1774
      %1889 = vmatpush1.bf16.msra.mxu0 %v1773
      %1890 = vmatprep.subr.bf16.mxu0 %v1770
      %1891 = vmatpush1.bf16.msra.mxu0 %v1769
      %1892 = vmatprep.subr.bf16.mxu0 %v1766
      %1893 = vmatpush1.bf16.msra.mxu0 %v1765
      %1894 = vmatprep.subr.bf16.mxu0 %v1762
      %1895 = vmatpush1.bf16.msra.mxu0 %v1761
      %1896 = vmatprep.subr.bf16.mxu0 %v1758
      %1897 = vmatpush1.bf16.msra.mxu0 %v1757
      %1898 = vmatprep.subr.bf16.mxu0 0
      %1899 = vmatpush2.bf16.msra.mxu0 0
      %1900 = vmatprep.subr.bf16.mxu0 0
      %1901 = vmatpush2.bf16.msra.mxu0 0
      %1902 = vmatprep.subr.bf16.mxu0 %v1874
      %1903 = vmatpush2.bf16.msra.mxu0 %v1871
      %1904 = vmatprep.subr.bf16.mxu0 %v1806
      %1905 = vmatpush2.bf16.msra.mxu0 %v1805
      %1906 = vmatprep.subr.bf16.mxu0 %v1802
      %1907 = vmatpush2.bf16.msra.mxu0 %v1801
      %1908 = vmatprep.subr.bf16.mxu0 %v1798
      %1909 = vmatpush2.bf16.msra.mxu0 %v1797
      %1910 = vmatprep.subr.bf16.mxu0 %v1794
      %1911 = vmatpush2.bf16.msra.mxu0 %v1793
      %1912 = vmatprep.subr.bf16.mxu0 %v1790
      %1913 = vmatpush2.bf16.msra.mxu0 %v1789
      %1914 = vmatprep.mubr.bf16.mxu0 %v1867
      %1915 = vmatmul.mubr.bf16.gmra.mxu0 %v1592
      %v1916 = vpop.f32.mrf.mxu0
      %v1917 = vadd.f32 %v1587, %v1916
      %v1918 = vpop.f32.mrf.mxu0
      %v1919 = vadd.f32 %v1587, %v1918
      %v1920 = vpop.f32.mrf.mxu0
      %v1921 = vpop.f32.mrf.mxu0
      %1922 = vdwg.mxu0
      %1923 = vmatprep.subr.bf16.mxu0 %v1788
      %1924 = vmatpush1.bf16.msra.mxu0 %v1787
      %1925 = vmatprep.subr.bf16.mxu0 %v1784
      %1926 = vmatpush1.bf16.msra.mxu0 %v1783
      %1927 = vmatprep.subr.bf16.mxu0 %v1780
      %1928 = vmatpush1.bf16.msra.mxu0 %v1779
      %1929 = vmatprep.subr.bf16.mxu0 %v1776
      %1930 = vmatpush1.bf16.msra.mxu0 %v1775
      %1931 = vmatprep.subr.bf16.mxu0 %v1772
      %1932 = vmatpush1.bf16.msra.mxu0 %v1771
      %1933 = vmatprep.subr.bf16.mxu0 %v1768
      %1934 = vmatpush1.bf16.msra.mxu0 %v1767
      %1935 = vmatprep.subr.bf16.mxu0 %v1764
      %1936 = vmatpush1.bf16.msra.mxu0 %v1763
      %1937 = vmatprep.subr.bf16.mxu0 %v1760
      %1938 = vmatpush1.bf16.msra.mxu0 %v1759
      %1939 = vmatprep.subr.bf16.mxu0 0
      %1940 = vmatpush2.bf16.msra.mxu0 0
      %1941 = vmatprep.subr.bf16.mxu0 0
      %1942 = vmatpush2.bf16.msra.mxu0 0
      %1943 = vmatprep.subr.bf16.mxu0 %v1880
      %1944 = vmatpush2.bf16.msra.mxu0 %v1877
      %1945 = vmatprep.subr.bf16.mxu0 %v1808
      %1946 = vmatpush2.bf16.msra.mxu0 %v1807
      %1947 = vmatprep.subr.bf16.mxu0 %v1804
      %1948 = vmatpush2.bf16.msra.mxu0 %v1803
      %1949 = vmatprep.subr.bf16.mxu0 %v1800
      %1950 = vmatpush2.bf16.msra.mxu0 %v1799
      %1951 = vmatprep.subr.bf16.mxu0 %v1796
      %1952 = vmatpush2.bf16.msra.mxu0 %v1795
      %1953 = vmatprep.subr.bf16.mxu0 %v1792
      %1954 = vmatpush2.bf16.msra.mxu0 %v1791
      %1955 = vmatprep.mubr.bf16.mxu0 %v1867
      %1956 = vmatmul.mubr.bf16.gmra.mxu0 %v1592
      %v1957 = vpop.f32.mrf.mxu0
      %v1958 = vadd.f32 %v1587, %v1957
      %v1959 = vpop.f32.mrf.mxu0
      %v1960 = vadd.f32 %v1587, %v1959
      %v1961 = vpop.f32.mrf.mxu0
      %v1962 = vpop.f32.mrf.mxu0
      %1963 = vdwg.mxu0
      %v1964 = vmax.f32 %v1917, 0.0
      %v1965 = vmax.f32 %v1919, 0.0
      %v1966 = vmax.f32 %v1958, 0.0
      %v1967 = vmax.f32 %v1960, 0.0
      %1968 = vst [vmem:[#allocation3] sm:$0xff] %v1964
      %1969 = vst [vmem:[#allocation3 + $0x8] sm:$0xff] %v1965
      %1970 = vst [vmem:[#allocation3 + $0x10] sm:$0xff] %v1966
      %1971 = vst [vmem:[#allocation3 + $0x18] sm:$0xff] %v1967
      %v1972 = vld [vmem:[#allocation3] sm:$0xff]
      %v1973 = vld [vmem:[#allocation3 + $0x8] sm:$0xff]
      %v1974 = vld [vmem:[#allocation3 + $0x10] sm:$0xff]
      %v1975 = vld [vmem:[#allocation3 + $0x18] sm:$0xff]
      %1976 = vrot.lane.b32.xlu0 %v1972, 73
      %v1977 = vpop.permute.xlu0 %1976
      %1978 = vrot.lane.b32.xlu0 %v1973, 73
      %v1979 = vpop.permute.xlu0 %1978
      %1980 = vrot.lane.b32.xlu0 %v1974, 73
      %v1981 = vpop.permute.xlu0 %1980
      %1982 = vrot.lane.b32.xlu0 %v1975, 73
      %v1983 = vpop.permute.xlu0 %1982
      %v1984 = vsel %vm217, %v1981, %v1983
      %v1985 = vsel %vm217, %v1979, %v1981
      %v1986 = vsel %vm217, %v1977, %v1979
      %v1987 = vsel %vm217, %v1983, %v1977
      %v1988 = vmul.f32 %v1987, %v253
      %v1989 = vmul.f32 %v1986, %v257
      %v1990 = vmul.f32 %v1985, %v261
      %v1991 = vmul.f32 %v1984, %v265
      %v1992 = vpack.c.bf16 %v1988, %v1988
      %v1993 = vpack.c.bf16 %v1989, %v1989
      %v1994 = vpack.c.bf16 %v1990, %v1990
      %v1995 = vpack.c.bf16 %v1991, %v1991
      %v2000 = vunpack.c.l.b16 %v1992
      %v2001 = vunpack.c.l.b16 %v1993
      %v2002 = vunpack.c.l.b16 %v1994
      %v2003 = vunpack.c.l.b16 %v1995
      %v2004 = vpack.c.b16 %v2001, %v2000
      %v2005 = vpack.c.b16 %v2003, %v2002
      %2008 = vst [vmem:[#allocation2] sm:$0xff] %v2004
      %2009 = vst [vmem:[#allocation2 + $0x8] sm:$0xff] %v2005
      %2010 = vrot.lane.b32.xlu0 %v1972, 72
      %v2011 = vpop.permute.xlu0 %2010
      %2012 = vrot.lane.b32.xlu0 %v1973, 72
      %v2013 = vpop.permute.xlu0 %2012
      %2014 = vrot.lane.b32.xlu0 %v1974, 72
      %v2015 = vpop.permute.xlu0 %2014
      %2016 = vrot.lane.b32.xlu0 %v1975, 72
      %v2017 = vpop.permute.xlu0 %2016
      %v2018 = vsel %vm296, %v2015, %v2017
      %v2019 = vsel %vm296, %v2013, %v2015
      %v2020 = vsel %vm296, %v2011, %v2013
      %v2021 = vsel %vm296, %v2017, %v2011
      %v2022 = vmul.f32 %v2021, %v304
      %v2023 = vmul.f32 %v2020, %v308
      %v2024 = vmul.f32 %v2019, %v312
      %v2025 = vmul.f32 %v2018, %v316
      %v2026 = vpack.c.bf16 %v2022, %v2022
      %v2027 = vpack.c.bf16 %v2023, %v2023
      %v2028 = vpack.c.bf16 %v2024, %v2024
      %v2029 = vpack.c.bf16 %v2025, %v2025
      %v2034 = vunpack.c.l.b16 %v2026
      %v2035 = vunpack.c.l.b16 %v2027
      %v2036 = vunpack.c.l.b16 %v2028
      %v2037 = vunpack.c.l.b16 %v2029
      %v2038 = vpack.c.b16 %v2035, %v2034
      %v2039 = vpack.c.b16 %v2037, %v2036
      %2042 = vst [vmem:[#allocation2 + $0x10] sm:$0xff] %v2038
      %2043 = vst [vmem:[#allocation2 + $0x18] sm:$0xff] %v2039
      %2044 = vrot.lane.b32.xlu0 %v1972, 71
      %v2045 = vpop.permute.xlu0 %2044
      %2046 = vrot.lane.b32.xlu0 %v1973, 71
      %v2047 = vpop.permute.xlu0 %2046
      %2048 = vrot.lane.b32.xlu0 %v1974, 71
      %v2049 = vpop.permute.xlu0 %2048
      %2050 = vrot.lane.b32.xlu0 %v1975, 71
      %v2051 = vpop.permute.xlu0 %2050
      %v2052 = vsel %vm347, %v2049, %v2051
      %v2053 = vsel %vm347, %v2047, %v2049
      %v2054 = vsel %vm347, %v2045, %v2047
      %v2055 = vsel %vm347, %v2051, %v2045
      %v2056 = vmul.f32 %v2055, %v367
      %v2057 = vmul.f32 %v2054, %v371
      %v2058 = vmul.f32 %v2053, %v375
      %v2059 = vmul.f32 %v2052, %v379
      %v2060 = vpack.c.bf16 %v2056, %v2056
      %v2061 = vpack.c.bf16 %v2057, %v2057
      %v2062 = vpack.c.bf16 %v2058, %v2058
      %v2063 = vpack.c.bf16 %v2059, %v2059
      %v2068 = vunpack.c.l.b16 %v2060
      %v2069 = vunpack.c.l.b16 %v2061
      %v2070 = vunpack.c.l.b16 %v2062
      %v2071 = vunpack.c.l.b16 %v2063
      %v2072 = vpack.c.b16 %v2069, %v2068
      %v2073 = vpack.c.b16 %v2071, %v2070
      %2076 = vst [vmem:[#allocation2 + $0x20] sm:$0xff] %v2072
      %2077 = vst [vmem:[#allocation2 + $0x28] sm:$0xff] %v2073
      %2078 = vrot.lane.b32.xlu0 %v1972, 65
      %v2079 = vpop.permute.xlu0 %2078
      %2080 = vrot.lane.b32.xlu0 %v1973, 65
      %v2081 = vpop.permute.xlu0 %2080
      %2082 = vrot.lane.b32.xlu0 %v1974, 65
      %v2083 = vpop.permute.xlu0 %2082
      %2084 = vrot.lane.b32.xlu0 %v1975, 65
      %v2085 = vpop.permute.xlu0 %2084
      %v2086 = vsel %vm410, %v2083, %v2085
      %v2087 = vsel %vm410, %v2081, %v2083
      %v2088 = vsel %vm410, %v2079, %v2081
      %v2089 = vsel %vm410, %v2085, %v2079
      %v2090 = vmul.f32 %v2089, %v422
      %v2091 = vmul.f32 %v2088, %v426
      %v2092 = vmul.f32 %v2087, %v430
      %v2093 = vmul.f32 %v2086, %v434
      %v2094 = vpack.c.bf16 %v2090, %v2090
      %v2095 = vpack.c.bf16 %v2091, %v2091
      %v2096 = vpack.c.bf16 %v2092, %v2092
      %v2097 = vpack.c.bf16 %v2093, %v2093
      %v2102 = vunpack.c.l.b16 %v2094
      %v2103 = vunpack.c.l.b16 %v2095
      %v2104 = vunpack.c.l.b16 %v2096
      %v2105 = vunpack.c.l.b16 %v2097
      %v2106 = vpack.c.b16 %v2103, %v2102
      %v2107 = vpack.c.b16 %v2105, %v2104
      %2110 = vst [vmem:[#allocation2 + $0x30] sm:$0xff] %v2106
      %2111 = vst [vmem:[#allocation2 + $0x38] sm:$0xff] %v2107
      %2112 = vrot.lane.b32.xlu0 %v1972, 64
      %v2113 = vpop.permute.xlu0 %2112
      %2114 = vrot.lane.b32.xlu0 %v1973, 64
      %v2115 = vpop.permute.xlu0 %2114
      %2116 = vrot.lane.b32.xlu0 %v1974, 64
      %v2117 = vpop.permute.xlu0 %2116
      %2118 = vrot.lane.b32.xlu0 %v1975, 64
      %v2119 = vpop.permute.xlu0 %2118
      %v2120 = vsel %vm465, %v2117, %v2119
      %v2121 = vsel %vm465, %v2115, %v2117
      %v2122 = vsel %vm465, %v2113, %v2115
      %v2123 = vsel %vm465, %v2119, %v2113
      %v2124 = vmul.f32 %v2123, %v473
      %v2125 = vmul.f32 %v2122, %v477
      %v2126 = vmul.f32 %v2121, %v481
      %v2127 = vmul.f32 %v2120, %v485
      %v2128 = vpack.c.bf16 %v2124, %v2124
      %v2129 = vpack.c.bf16 %v2125, %v2125
      %v2130 = vpack.c.bf16 %v2126, %v2126
      %v2131 = vpack.c.bf16 %v2127, %v2127
      %v2136 = vunpack.c.l.b16 %v2128
      %v2137 = vunpack.c.l.b16 %v2129
      %v2138 = vunpack.c.l.b16 %v2130
      %v2139 = vunpack.c.l.b16 %v2131
      %v2140 = vpack.c.b16 %v2137, %v2136
      %v2141 = vpack.c.b16 %v2139, %v2138
      %2144 = vst [vmem:[#allocation2 + $0x40] sm:$0xff] %v2140
      %2145 = vst [vmem:[#allocation2 + $0x48] sm:$0xff] %v2141
      %2146 = vrot.lane.b32.xlu0 %v1972, 63
      %v2147 = vpop.permute.xlu0 %2146
      %2148 = vrot.lane.b32.xlu0 %v1973, 63
      %v2149 = vpop.permute.xlu0 %2148
      %2150 = vrot.lane.b32.xlu0 %v1974, 63
      %v2151 = vpop.permute.xlu0 %2150
      %2152 = vrot.lane.b32.xlu0 %v1975, 63
      %v2153 = vpop.permute.xlu0 %2152
      %v2154 = vsel %vm516, %v2151, %v2153
      %v2155 = vsel %vm516, %v2149, %v2151
      %v2156 = vsel %vm516, %v2147, %v2149
      %v2157 = vsel %vm516, %v2153, %v2147
      %v2158 = vmul.f32 %v2157, %v528
      %v2159 = vmul.f32 %v2156, %v532
      %v2160 = vmul.f32 %v2155, %v536
      %v2161 = vmul.f32 %v2154, %v540
      %v2162 = vpack.c.bf16 %v2158, %v2158
      %v2163 = vpack.c.bf16 %v2159, %v2159
      %v2164 = vpack.c.bf16 %v2160, %v2160
      %v2165 = vpack.c.bf16 %v2161, %v2161
      %v2170 = vunpack.c.l.b16 %v2162
      %v2171 = vunpack.c.l.b16 %v2163
      %v2172 = vunpack.c.l.b16 %v2164
      %v2173 = vunpack.c.l.b16 %v2165
      %v2174 = vpack.c.b16 %v2171, %v2170
      %v2175 = vpack.c.b16 %v2173, %v2172
      %2178 = vst [vmem:[#allocation2 + $0x50] sm:$0xff] %v2174
      %2179 = vst [vmem:[#allocation2 + $0x58] sm:$0xff] %v2175
      %2180 = vrot.lane.b32.xlu0 %v1972, 57
      %v2181 = vpop.permute.xlu0 %2180
      %2182 = vrot.lane.b32.xlu0 %v1973, 57
      %v2183 = vpop.permute.xlu0 %2182
      %2184 = vrot.lane.b32.xlu0 %v1974, 57
      %v2185 = vpop.permute.xlu0 %2184
      %2186 = vrot.lane.b32.xlu0 %v1975, 57
      %v2187 = vpop.permute.xlu0 %2186
      %v2188 = vsel %vm571, %v2185, %v2187
      %v2189 = vsel %vm571, %v2183, %v2185
      %v2190 = vsel %vm571, %v2181, %v2183
      %v2191 = vsel %vm571, %v2187, %v2181
      %v2192 = vmul.f32 %v2191, %v595
      %v2193 = vmul.f32 %v2190, %v599
      %v2194 = vmul.f32 %v2189, %v603
      %v2195 = vmul.f32 %v2188, %v607
      %v2196 = vpack.c.bf16 %v2192, %v2192
      %v2197 = vpack.c.bf16 %v2193, %v2193
      %v2198 = vpack.c.bf16 %v2194, %v2194
      %v2199 = vpack.c.bf16 %v2195, %v2195
      %v2204 = vunpack.c.l.b16 %v2196
      %v2205 = vunpack.c.l.b16 %v2197
      %v2206 = vunpack.c.l.b16 %v2198
      %v2207 = vunpack.c.l.b16 %v2199
      %v2208 = vpack.c.b16 %v2205, %v2204
      %v2209 = vpack.c.b16 %v2207, %v2206
      %2212 = vst [vmem:[#allocation2 + $0x60] sm:$0xff] %v2208
      %2213 = vst [vmem:[#allocation2 + $0x68] sm:$0xff] %v2209
      %2214 = vrot.lane.b32.xlu0 %v1972, 56
      %v2215 = vpop.permute.xlu0 %2214
      %2216 = vrot.lane.b32.xlu0 %v1973, 56
      %v2217 = vpop.permute.xlu0 %2216
      %2218 = vrot.lane.b32.xlu0 %v1974, 56
      %v2219 = vpop.permute.xlu0 %2218
      %2220 = vrot.lane.b32.xlu0 %v1975, 56
      %v2221 = vpop.permute.xlu0 %2220
      %v2222 = vsel %vm638, %v2219, %v2221
      %v2223 = vsel %vm638, %v2217, %v2219
      %v2224 = vsel %vm638, %v2215, %v2217
      %v2225 = vsel %vm638, %v2221, %v2215
      %v2226 = vmul.f32 %v2225, %v646
      %v2227 = vmul.f32 %v2224, %v650
      %v2228 = vmul.f32 %v2223, %v654
      %v2229 = vmul.f32 %v2222, %v658
      %v2230 = vpack.c.bf16 %v2226, %v2226
      %v2231 = vpack.c.bf16 %v2227, %v2227
      %v2232 = vpack.c.bf16 %v2228, %v2228
      %v2233 = vpack.c.bf16 %v2229, %v2229
      %v2238 = vunpack.c.l.b16 %v2230
      %v2239 = vunpack.c.l.b16 %v2231
      %v2240 = vunpack.c.l.b16 %v2232
      %v2241 = vunpack.c.l.b16 %v2233
      %v2242 = vpack.c.b16 %v2239, %v2238
      %v2243 = vpack.c.b16 %v2241, %v2240
      %2246 = vst [vmem:[#allocation2 + $0x70] sm:$0xff] %v2242
      %2247 = vst [vmem:[#allocation2 + $0x78] sm:$0xff] %v2243
      %2248 = vrot.lane.b32.xlu0 %v1972, 55
      %v2249 = vpop.permute.xlu0 %2248
      %2250 = vrot.lane.b32.xlu0 %v1973, 55
      %v2251 = vpop.permute.xlu0 %2250
      %2252 = vrot.lane.b32.xlu0 %v1974, 55
      %v2253 = vpop.permute.xlu0 %2252
      %2254 = vrot.lane.b32.xlu0 %v1975, 55
      %v2255 = vpop.permute.xlu0 %2254
      %v2256 = vsel %vm689, %v2253, %v2255
      %v2257 = vsel %vm689, %v2251, %v2253
      %v2258 = vsel %vm689, %v2249, %v2251
      %v2259 = vsel %vm689, %v2255, %v2249
      %v2260 = vmul.f32 %v2259, %v701
      %v2261 = vmul.f32 %v2258, %v705
      %v2262 = vmul.f32 %v2257, %v709
      %v2263 = vmul.f32 %v2256, %v713
      %v2264 = vpack.c.bf16 %v2260, %v2260
      %v2265 = vpack.c.bf16 %v2261, %v2261
      %v2266 = vpack.c.bf16 %v2262, %v2262
      %v2267 = vpack.c.bf16 %v2263, %v2263
      %v2272 = vunpack.c.l.b16 %v2264
      %v2273 = vunpack.c.l.b16 %v2265
      %v2274 = vunpack.c.l.b16 %v2266
      %v2275 = vunpack.c.l.b16 %v2267
      %v2276 = vpack.c.b16 %v2273, %v2272
      %v2277 = vpack.c.b16 %v2275, %v2274
      %2280 = vst [vmem:[#allocation2 + $0x80] sm:$0xff] %v2276
      %2281 = vst [vmem:[#allocation2 + $0x88] sm:$0xff] %v2277
      %2282 = vrot.lane.b32.xlu0 %v1972, 9
      %v2283 = vpop.permute.xlu0 %2282
      %2284 = vrot.lane.b32.xlu0 %v1973, 9
      %v2285 = vpop.permute.xlu0 %2284
      %2286 = vrot.lane.b32.xlu0 %v1974, 9
      %v2287 = vpop.permute.xlu0 %2286
      %2288 = vrot.lane.b32.xlu0 %v1975, 9
      %v2289 = vpop.permute.xlu0 %2288
      %v2290 = vsel %vm744, %v2287, %v2289
      %v2291 = vsel %vm744, %v2285, %v2287
      %v2292 = vsel %vm744, %v2283, %v2285
      %v2293 = vsel %vm744, %v2289, %v2283
      %v2294 = vmul.f32 %v2293, %v752
      %v2295 = vmul.f32 %v2292, %v756
      %v2296 = vmul.f32 %v2291, %v760
      %v2297 = vmul.f32 %v2290, %v764
      %v2298 = vpack.c.bf16 %v2294, %v2294
      %v2299 = vpack.c.bf16 %v2295, %v2295
      %v2300 = vpack.c.bf16 %v2296, %v2296
      %v2301 = vpack.c.bf16 %v2297, %v2297
      %v2306 = vunpack.c.l.b16 %v2298
      %v2307 = vunpack.c.l.b16 %v2299
      %v2308 = vunpack.c.l.b16 %v2300
      %v2309 = vunpack.c.l.b16 %v2301
      %v2310 = vpack.c.b16 %v2307, %v2306
      %v2311 = vpack.c.b16 %v2309, %v2308
      %2314 = vst [vmem:[#allocation2 + $0x90] sm:$0xff] %v2310
      %2315 = vst [vmem:[#allocation2 + $0x98] sm:$0xff] %v2311
      %2316 = vrot.lane.b32.xlu0 %v1972, 8
      %v2317 = vpop.permute.xlu0 %2316
      %2318 = vrot.lane.b32.xlu0 %v1973, 8
      %v2319 = vpop.permute.xlu0 %2318
      %2320 = vrot.lane.b32.xlu0 %v1974, 8
      %v2321 = vpop.permute.xlu0 %2320
      %2322 = vrot.lane.b32.xlu0 %v1975, 8
      %v2323 = vpop.permute.xlu0 %2322
      %v2324 = vsel %vm795, %v2321, %v2323
      %v2325 = vsel %vm795, %v2319, %v2321
      %v2326 = vsel %vm795, %v2317, %v2319
      %v2327 = vsel %vm795, %v2323, %v2317
      %v2328 = vmul.f32 %v2327, %v803
      %v2329 = vmul.f32 %v2326, %v807
      %v2330 = vmul.f32 %v2325, %v811
      %v2331 = vmul.f32 %v2324, %v815
      %v2332 = vpack.c.bf16 %v2328, %v2328
      %v2333 = vpack.c.bf16 %v2329, %v2329
      %v2334 = vpack.c.bf16 %v2330, %v2330
      %v2335 = vpack.c.bf16 %v2331, %v2331
      %v2340 = vunpack.c.l.b16 %v2332
      %v2341 = vunpack.c.l.b16 %v2333
      %v2342 = vunpack.c.l.b16 %v2334
      %v2343 = vunpack.c.l.b16 %v2335
      %v2344 = vpack.c.b16 %v2341, %v2340
      %v2345 = vpack.c.b16 %v2343, %v2342
      %2348 = vst [vmem:[#allocation2 + $0xa0] sm:$0xff] %v2344
      %2349 = vst [vmem:[#allocation2 + $0xa8] sm:$0xff] %v2345
      %2350 = vrot.lane.b32.xlu0 %v1972, 7
      %v2351 = vpop.permute.xlu0 %2350
      %2352 = vrot.lane.b32.xlu0 %v1973, 7
      %v2353 = vpop.permute.xlu0 %2352
      %2354 = vrot.lane.b32.xlu0 %v1974, 7
      %v2355 = vpop.permute.xlu0 %2354
      %2356 = vrot.lane.b32.xlu0 %v1975, 7
      %v2357 = vpop.permute.xlu0 %2356
      %v2358 = vsel %vm846, %v2355, %v2357
      %v2359 = vsel %vm846, %v2353, %v2355
      %v2360 = vsel %vm846, %v2351, %v2353
      %v2361 = vsel %vm846, %v2357, %v2351
      %v2362 = vmul.f32 %v2361, %v854
      %v2363 = vmul.f32 %v2360, %v858
      %v2364 = vmul.f32 %v2359, %v862
      %v2365 = vmul.f32 %v2358, %v866
      %v2366 = vpack.c.bf16 %v2362, %v2362
      %v2367 = vpack.c.bf16 %v2363, %v2363
      %v2368 = vpack.c.bf16 %v2364, %v2364
      %v2369 = vpack.c.bf16 %v2365, %v2365
      %v2374 = vunpack.c.l.b16 %v2366
      %v2375 = vunpack.c.l.b16 %v2367
      %v2376 = vunpack.c.l.b16 %v2368
      %v2377 = vunpack.c.l.b16 %v2369
      %v2378 = vpack.c.b16 %v2375, %v2374
      %v2379 = vpack.c.b16 %v2377, %v2376
      %2382 = vst [vmem:[#allocation2 + $0xb0] sm:$0xff] %v2378
      %2383 = vst [vmem:[#allocation2 + $0xb8] sm:$0xff] %v2379
      %2384 = vrot.lane.b32.xlu0 %v1972, 1
      %v2385 = vpop.permute.xlu0 %2384
      %2386 = vrot.lane.b32.xlu0 %v1973, 1
      %v2387 = vpop.permute.xlu0 %2386
      %2388 = vrot.lane.b32.xlu0 %v1974, 1
      %v2389 = vpop.permute.xlu0 %2388
      %2390 = vrot.lane.b32.xlu0 %v1975, 1
      %v2391 = vpop.permute.xlu0 %2390
      %v2392 = vsel %vm897, %v2389, %v2391
      %v2393 = vsel %vm897, %v2387, %v2389
      %v2394 = vsel %vm897, %v2385, %v2387
      %v2395 = vsel %vm897, %v2391, %v2385
      %v2396 = vmul.f32 %v2395, %v905
      %v2397 = vmul.f32 %v2394, %v909
      %v2398 = vmul.f32 %v2393, %v913
      %v2399 = vmul.f32 %v2392, %v917
      %v2400 = vpack.c.bf16 %v2396, %v2396
      %v2401 = vpack.c.bf16 %v2397, %v2397
      %v2402 = vpack.c.bf16 %v2398, %v2398
      %v2403 = vpack.c.bf16 %v2399, %v2399
      %v2408 = vunpack.c.l.b16 %v2400
      %v2409 = vunpack.c.l.b16 %v2401
      %v2410 = vunpack.c.l.b16 %v2402
      %v2411 = vunpack.c.l.b16 %v2403
      %v2412 = vpack.c.b16 %v2409, %v2408
      %v2413 = vpack.c.b16 %v2411, %v2410
      %2416 = vst [vmem:[#allocation2 + $0xc0] sm:$0xff] %v2412
      %2417 = vst [vmem:[#allocation2 + $0xc8] sm:$0xff] %v2413
      %v2418 = vpack.c.bf16 %v1972, %v1972
      %v2419 = vpack.c.bf16 %v1973, %v1973
      %v2420 = vpack.c.bf16 %v1974, %v1974
      %v2421 = vpack.c.bf16 %v1975, %v1975
      %v2426 = vunpack.c.l.b16 %v2418
      %v2427 = vunpack.c.l.b16 %v2419
      %v2428 = vunpack.c.l.b16 %v2420
      %v2429 = vunpack.c.l.b16 %v2421
      %v2430 = vpack.c.b16 %v2427, %v2426
      %v2431 = vpack.c.b16 %v2429, %v2428
      %2434 = vst [vmem:[#allocation2 + $0xd0] sm:$0xff] %v2430
      %2435 = vst [vmem:[#allocation2 + $0xd8] sm:$0xff] %v2431
      %2436 = vrot.lane.b32.xlu0 %v1972, 127
      %v2437 = vpop.permute.xlu0 %2436
      %2438 = vrot.lane.b32.xlu0 %v1973, 127
      %v2439 = vpop.permute.xlu0 %2438
      %2440 = vrot.lane.b32.xlu0 %v1974, 127
      %v2441 = vpop.permute.xlu0 %2440
      %2442 = vrot.lane.b32.xlu0 %v1975, 127
      %v2443 = vpop.permute.xlu0 %2442
      %v2444 = vsel %vm966, %v2441, %v2443
      %v2445 = vsel %vm966, %v2439, %v2441
      %v2446 = vsel %vm966, %v2437, %v2439
      %v2447 = vsel %vm966, %v2443, %v2437
      %v2448 = vmul.f32 %v2446, %v974
      %v2449 = vmul.f32 %v2445, %v978
      %v2450 = vmul.f32 %v2444, %v982
      %v2451 = vmul.f32 %v2447, %v986
      %v2452 = vpack.c.bf16 %v2448, %v2448
      %v2453 = vpack.c.bf16 %v2449, %v2449
      %v2454 = vpack.c.bf16 %v2450, %v2450
      %v2455 = vpack.c.bf16 %v2451, %v2451
      %v2460 = vunpack.c.l.b16 %v2452
      %v2461 = vunpack.c.l.b16 %v2453
      %v2462 = vunpack.c.l.b16 %v2454
      %v2463 = vunpack.c.l.b16 %v2455
      %v2464 = vpack.c.b16 %v2461, %v2460
      %v2465 = vpack.c.b16 %v2463, %v2462
      %2468 = vst [vmem:[#allocation2 + $0xe0] sm:$0xff] %v2464
      %2469 = vst [vmem:[#allocation2 + $0xe8] sm:$0xff] %v2465
      %2470 = vrot.lane.b32.xlu0 %v1972, 121
      %v2471 = vpop.permute.xlu0 %2470
      %2472 = vrot.lane.b32.xlu0 %v1973, 121
      %v2473 = vpop.permute.xlu0 %2472
      %2474 = vrot.lane.b32.xlu0 %v1974, 121
      %v2475 = vpop.permute.xlu0 %2474
      %2476 = vrot.lane.b32.xlu0 %v1975, 121
      %v2477 = vpop.permute.xlu0 %2476
      %v2478 = vsel %vm1017, %v2475, %v2477
      %v2479 = vsel %vm1017, %v2473, %v2475
      %v2480 = vsel %vm1017, %v2471, %v2473
      %v2481 = vsel %vm1017, %v2477, %v2471
      %v2482 = vmul.f32 %v2480, %v1037
      %v2483 = vmul.f32 %v2479, %v1041
      %v2484 = vmul.f32 %v2478, %v1045
      %v2485 = vmul.f32 %v2481, %v1049
      %v2486 = vpack.c.bf16 %v2482, %v2482
      %v2487 = vpack.c.bf16 %v2483, %v2483
      %v2488 = vpack.c.bf16 %v2484, %v2484
      %v2489 = vpack.c.bf16 %v2485, %v2485
      %v2494 = vunpack.c.l.b16 %v2486
      %v2495 = vunpack.c.l.b16 %v2487
      %v2496 = vunpack.c.l.b16 %v2488
      %v2497 = vunpack.c.l.b16 %v2489
      %v2498 = vpack.c.b16 %v2495, %v2494
      %v2499 = vpack.c.b16 %v2497, %v2496
      %2502 = vst [vmem:[#allocation2 + $0xf0] sm:$0xff] %v2498
      %2503 = vst [vmem:[#allocation2 + $0xf8] sm:$0xff] %v2499
      %2504 = vrot.lane.b32.xlu0 %v1972, 120
      %v2505 = vpop.permute.xlu0 %2504
      %2506 = vrot.lane.b32.xlu0 %v1973, 120
      %v2507 = vpop.permute.xlu0 %2506
      %2508 = vrot.lane.b32.xlu0 %v1974, 120
      %v2509 = vpop.permute.xlu0 %2508
      %2510 = vrot.lane.b32.xlu0 %v1975, 120
      %v2511 = vpop.permute.xlu0 %2510
      %v2512 = vsel %vm1080, %v2509, %v2511
      %v2513 = vsel %vm1080, %v2507, %v2509
      %v2514 = vsel %vm1080, %v2505, %v2507
      %v2515 = vsel %vm1080, %v2511, %v2505
      %v2516 = vmul.f32 %v2514, %v1088
      %v2517 = vmul.f32 %v2513, %v1092
      %v2518 = vmul.f32 %v2512, %v1096
      %v2519 = vmul.f32 %v2515, %v1100
      %v2520 = vpack.c.bf16 %v2516, %v2516
      %v2521 = vpack.c.bf16 %v2517, %v2517
      %v2522 = vpack.c.bf16 %v2518, %v2518
      %v2523 = vpack.c.bf16 %v2519, %v2519
      %v2528 = vunpack.c.l.b16 %v2520
      %v2529 = vunpack.c.l.b16 %v2521
      %v2530 = vunpack.c.l.b16 %v2522
      %v2531 = vunpack.c.l.b16 %v2523
      %v2532 = vpack.c.b16 %v2529, %v2528
      %v2533 = vpack.c.b16 %v2531, %v2530
      %2536 = vst [vmem:[#allocation2 + $0x100] sm:$0xff] %v2532
      %2537 = vst [vmem:[#allocation2 + $0x108] sm:$0xff] %v2533
      %2538 = vrot.lane.b32.xlu0 %v1972, 119
      %v2539 = vpop.permute.xlu0 %2538
      %2540 = vrot.lane.b32.xlu0 %v1973, 119
      %v2541 = vpop.permute.xlu0 %2540
      %2542 = vrot.lane.b32.xlu0 %v1974, 119
      %v2543 = vpop.permute.xlu0 %2542
      %2544 = vrot.lane.b32.xlu0 %v1975, 119
      %v2545 = vpop.permute.xlu0 %2544
      %v2546 = vsel %vm1131, %v2543, %v2545
      %v2547 = vsel %vm1131, %v2541, %v2543
      %v2548 = vsel %vm1131, %v2539, %v2541
      %v2549 = vsel %vm1131, %v2545, %v2539
      %v2550 = vmul.f32 %v2548, %v1139
      %v2551 = vmul.f32 %v2547, %v1143
      %v2552 = vmul.f32 %v2546, %v1147
      %v2553 = vmul.f32 %v2549, %v1151
      %v2554 = vpack.c.bf16 %v2550, %v2550
      %v2555 = vpack.c.bf16 %v2551, %v2551
      %v2556 = vpack.c.bf16 %v2552, %v2552
      %v2557 = vpack.c.bf16 %v2553, %v2553
      %v2562 = vunpack.c.l.b16 %v2554
      %v2563 = vunpack.c.l.b16 %v2555
      %v2564 = vunpack.c.l.b16 %v2556
      %v2565 = vunpack.c.l.b16 %v2557
      %v2566 = vpack.c.b16 %v2563, %v2562
      %v2567 = vpack.c.b16 %v2565, %v2564
      %2570 = vst [vmem:[#allocation2 + $0x110] sm:$0xff] %v2566
      %2571 = vst [vmem:[#allocation2 + $0x118] sm:$0xff] %v2567
      %v2572 = vmul.f32 %v1986, %v1181
      %v2573 = vmul.f32 %v1985, %v1185
      %v2574 = vmul.f32 %v1984, %v1189
      %v2575 = vmul.f32 %v1987, %v1193
      %v2576 = vpack.c.bf16 %v2572, %v2572
      %v2577 = vpack.c.bf16 %v2573, %v2573
      %v2578 = vpack.c.bf16 %v2574, %v2574
      %v2579 = vpack.c.bf16 %v2575, %v2575
      %v2584 = vunpack.c.l.b16 %v2576
      %v2585 = vunpack.c.l.b16 %v2577
      %v2586 = vunpack.c.l.b16 %v2578
      %v2587 = vunpack.c.l.b16 %v2579
      %v2588 = vpack.c.b16 %v2585, %v2584
      %v2589 = vpack.c.b16 %v2587, %v2586
      %2592 = vst [vmem:[#allocation2 + $0x120] sm:$0xff] %v2588
      %2593 = vst [vmem:[#allocation2 + $0x128] sm:$0xff] %v2589
      %v2594 = vmul.f32 %v2020, %v1219
      %v2595 = vmul.f32 %v2019, %v1223
      %v2596 = vmul.f32 %v2018, %v1227
      %v2597 = vmul.f32 %v2021, %v1231
      %v2598 = vpack.c.bf16 %v2594, %v2594
      %v2599 = vpack.c.bf16 %v2595, %v2595
      %v2600 = vpack.c.bf16 %v2596, %v2596
      %v2601 = vpack.c.bf16 %v2597, %v2597
      %v2606 = vunpack.c.l.b16 %v2598
      %v2607 = vunpack.c.l.b16 %v2599
      %v2608 = vunpack.c.l.b16 %v2600
      %v2609 = vunpack.c.l.b16 %v2601
      %v2610 = vpack.c.b16 %v2607, %v2606
      %v2611 = vpack.c.b16 %v2609, %v2608
      %2614 = vst [vmem:[#allocation2 + $0x130] sm:$0xff] %v2610
      %2615 = vst [vmem:[#allocation2 + $0x138] sm:$0xff] %v2611
      %v2616 = vmul.f32 %v2054, %v1261
      %v2617 = vmul.f32 %v2053, %v1265
      %v2618 = vmul.f32 %v2052, %v1269
      %v2619 = vmul.f32 %v2055, %v1273
      %v2620 = vpack.c.bf16 %v2616, %v2616
      %v2621 = vpack.c.bf16 %v2617, %v2617
      %v2622 = vpack.c.bf16 %v2618, %v2618
      %v2623 = vpack.c.bf16 %v2619, %v2619
      %v2628 = vunpack.c.l.b16 %v2620
      %v2629 = vunpack.c.l.b16 %v2621
      %v2630 = vunpack.c.l.b16 %v2622
      %v2631 = vunpack.c.l.b16 %v2623
      %v2632 = vpack.c.b16 %v2629, %v2628
      %v2633 = vpack.c.b16 %v2631, %v2630
      %2636 = vst [vmem:[#allocation2 + $0x140] sm:$0xff] %v2632
      %2637 = vst [vmem:[#allocation2 + $0x148] sm:$0xff] %v2633
      %v2638 = vmul.f32 %v2088, %v1299
      %v2639 = vmul.f32 %v2087, %v1303
      %v2640 = vmul.f32 %v2086, %v1307
      %v2641 = vmul.f32 %v2089, %v1311
      %v2642 = vpack.c.bf16 %v2638, %v2638
      %v2643 = vpack.c.bf16 %v2639, %v2639
      %v2644 = vpack.c.bf16 %v2640, %v2640
      %v2645 = vpack.c.bf16 %v2641, %v2641
      %v2650 = vunpack.c.l.b16 %v2642
      %v2651 = vunpack.c.l.b16 %v2643
      %v2652 = vunpack.c.l.b16 %v2644
      %v2653 = vunpack.c.l.b16 %v2645
      %v2654 = vpack.c.b16 %v2651, %v2650
      %v2655 = vpack.c.b16 %v2653, %v2652
      %2658 = vst [vmem:[#allocation2 + $0x150] sm:$0xff] %v2654
      %2659 = vst [vmem:[#allocation2 + $0x158] sm:$0xff] %v2655
      %v2660 = vmul.f32 %v2122, %v1337
      %v2661 = vmul.f32 %v2121, %v1341
      %v2662 = vmul.f32 %v2120, %v1345
      %v2663 = vmul.f32 %v2123, %v1349
      %v2664 = vpack.c.bf16 %v2660, %v2660
      %v2665 = vpack.c.bf16 %v2661, %v2661
      %v2666 = vpack.c.bf16 %v2662, %v2662
      %v2667 = vpack.c.bf16 %v2663, %v2663
      %v2672 = vunpack.c.l.b16 %v2664
      %v2673 = vunpack.c.l.b16 %v2665
      %v2674 = vunpack.c.l.b16 %v2666
      %v2675 = vunpack.c.l.b16 %v2667
      %v2676 = vpack.c.b16 %v2673, %v2672
      %v2677 = vpack.c.b16 %v2675, %v2674
      %2680 = vst [vmem:[#allocation2 + $0x160] sm:$0xff] %v2676
      %2681 = vst [vmem:[#allocation2 + $0x168] sm:$0xff] %v2677
      %v2682 = vmul.f32 %v2156, %v1375
      %v2683 = vmul.f32 %v2155, %v1379
      %v2684 = vmul.f32 %v2154, %v1383
      %v2685 = vmul.f32 %v2157, %v1387
      %v2686 = vpack.c.bf16 %v2682, %v2682
      %v2687 = vpack.c.bf16 %v2683, %v2683
      %v2688 = vpack.c.bf16 %v2684, %v2684
      %v2689 = vpack.c.bf16 %v2685, %v2685
      %v2694 = vunpack.c.l.b16 %v2686
      %v2695 = vunpack.c.l.b16 %v2687
      %v2696 = vunpack.c.l.b16 %v2688
      %v2697 = vunpack.c.l.b16 %v2689
      %v2698 = vpack.c.b16 %v2695, %v2694
      %v2699 = vpack.c.b16 %v2697, %v2696
      %2702 = vst [vmem:[#allocation2 + $0x170] sm:$0xff] %v2698
      %2703 = vst [vmem:[#allocation2 + $0x178] sm:$0xff] %v2699
      %v2704 = vmul.f32 %v2190, %v1417
      %v2705 = vmul.f32 %v2189, %v1421
      %v2706 = vmul.f32 %v2188, %v1425
      %v2707 = vmul.f32 %v2191, %v1429
      %v2708 = vpack.c.bf16 %v2704, %v2704
      %v2709 = vpack.c.bf16 %v2705, %v2705
      %v2710 = vpack.c.bf16 %v2706, %v2706
      %v2711 = vpack.c.bf16 %v2707, %v2707
      %v2716 = vunpack.c.l.b16 %v2708
      %v2717 = vunpack.c.l.b16 %v2709
      %v2718 = vunpack.c.l.b16 %v2710
      %v2719 = vunpack.c.l.b16 %v2711
      %v2720 = vpack.c.b16 %v2717, %v2716
      %v2721 = vpack.c.b16 %v2719, %v2718
      %2724 = vst [vmem:[#allocation2 + $0x180] sm:$0xff] %v2720
      %2725 = vst [vmem:[#allocation2 + $0x188] sm:$0xff] %v2721
      %v2726 = vmul.f32 %v2224, %v1455
      %v2727 = vmul.f32 %v2223, %v1459
      %v2728 = vmul.f32 %v2222, %v1463
      %v2729 = vmul.f32 %v2225, %v1467
      %v2730 = vpack.c.bf16 %v2726, %v2726
      %v2731 = vpack.c.bf16 %v2727, %v2727
      %v2732 = vpack.c.bf16 %v2728, %v2728
      %v2733 = vpack.c.bf16 %v2729, %v2729
      %v2738 = vunpack.c.l.b16 %v2730
      %v2739 = vunpack.c.l.b16 %v2731
      %v2740 = vunpack.c.l.b16 %v2732
      %v2741 = vunpack.c.l.b16 %v2733
      %v2742 = vpack.c.b16 %v2739, %v2738
      %v2743 = vpack.c.b16 %v2741, %v2740
      %2746 = vst [vmem:[#allocation2 + $0x190] sm:$0xff] %v2742
      %2747 = vst [vmem:[#allocation2 + $0x198] sm:$0xff] %v2743
      %v2748 = vmul.f32 %v2258, %v1493
      %v2749 = vmul.f32 %v2257, %v1497
      %v2750 = vmul.f32 %v2256, %v1501
      %v2751 = vmul.f32 %v2259, %v1505
      %v2752 = vpack.c.bf16 %v2748, %v2748
      %v2753 = vpack.c.bf16 %v2749, %v2749
      %v2754 = vpack.c.bf16 %v2750, %v2750
      %v2755 = vpack.c.bf16 %v2751, %v2751
      %v2760 = vunpack.c.l.b16 %v2752
      %v2761 = vunpack.c.l.b16 %v2753
      %v2762 = vunpack.c.l.b16 %v2754
      %v2763 = vunpack.c.l.b16 %v2755
      %v2764 = vpack.c.b16 %v2761, %v2760
      %v2765 = vpack.c.b16 %v2763, %v2762
      %2768 = vst [vmem:[#allocation2 + $0x1a0] sm:$0xff] %v2764
      %2769 = vst [vmem:[#allocation2 + $0x1a8] sm:$0xff] %v2765
      %s2770 = scalar_lea.vmem %s1, 8
      %v2771 = vld [vmem:[%s2770] sm:$0xff]
      %v2772 = vld [vmem:[#allocation2] sm:$0xff]
      %v2773 = vld [vmem:[#allocation2 + $0x8] sm:$0xff]
      %v2774 = vld [vmem:[#allocation2 + $0x10] sm:$0xff]
      %v2775 = vld [vmem:[#allocation2 + $0x18] sm:$0xff]
      %v2776 = vld [vmem:[#allocation2 + $0x20] sm:$0xff]
      %v2777 = vld [vmem:[#allocation2 + $0x28] sm:$0xff]
      %v2778 = vld [vmem:[#allocation2 + $0x30] sm:$0xff]
      %v2779 = vld [vmem:[#allocation2 + $0x38] sm:$0xff]
      %v2780 = vld [vmem:[#allocation2 + $0x40] sm:$0xff]
      %v2781 = vld [vmem:[#allocation2 + $0x48] sm:$0xff]
      %v2782 = vld [vmem:[#allocation2 + $0x50] sm:$0xff]
      %v2783 = vld [vmem:[#allocation2 + $0x58] sm:$0xff]
      %v2784 = vld [vmem:[#allocation2 + $0x60] sm:$0xff]
      %v2785 = vld [vmem:[#allocation2 + $0x68] sm:$0xff]
      %v2786 = vld [vmem:[#allocation2 + $0x70] sm:$0xff]
      %v2787 = vld [vmem:[#allocation2 + $0x78] sm:$0xff]
      %v2788 = vld [vmem:[#allocation2 + $0x80] sm:$0xff]
      %v2789 = vld [vmem:[#allocation2 + $0x88] sm:$0xff]
      %v2790 = vld [vmem:[#allocation2 + $0x90] sm:$0xff]
      %v2791 = vld [vmem:[#allocation2 + $0x98] sm:$0xff]
      %v2792 = vld [vmem:[#allocation2 + $0xa0] sm:$0xff]
      %v2793 = vld [vmem:[#allocation2 + $0xa8] sm:$0xff]
      %v2794 = vld [vmem:[#allocation2 + $0xb0] sm:$0xff]
      %v2795 = vld [vmem:[#allocation2 + $0xb8] sm:$0xff]
      %v2796 = vld [vmem:[#allocation2 + $0xc0] sm:$0xff]
      %v2797 = vld [vmem:[#allocation2 + $0xc8] sm:$0xff]
      %v2798 = vld [vmem:[#allocation2 + $0xd0] sm:$0xff]
      %v2799 = vld [vmem:[#allocation2 + $0xd8] sm:$0xff]
      %v2800 = vld [vmem:[#allocation2 + $0xe0] sm:$0xff]
      %v2801 = vld [vmem:[#allocation2 + $0xe8] sm:$0xff]
      %v2802 = vld [vmem:[#allocation2 + $0xf0] sm:$0xff]
      %v2803 = vld [vmem:[#allocation2 + $0xf8] sm:$0xff]
      %v2804 = vld [vmem:[#allocation2 + $0x100] sm:$0xff]
      %v2805 = vld [vmem:[#allocation2 + $0x108] sm:$0xff]
      %v2806 = vld [vmem:[#allocation2 + $0x110] sm:$0xff]
      %v2807 = vld [vmem:[#allocation2 + $0x118] sm:$0xff]
      %v2808 = vld [vmem:[#allocation2 + $0x120] sm:$0xff]
      %v2809 = vld [vmem:[#allocation2 + $0x128] sm:$0xff]
      %v2810 = vld [vmem:[#allocation2 + $0x130] sm:$0xff]
      %v2811 = vld [vmem:[#allocation2 + $0x138] sm:$0xff]
      %v2812 = vld [vmem:[#allocation2 + $0x140] sm:$0xff]
      %v2813 = vld [vmem:[#allocation2 + $0x148] sm:$0xff]
      %v2814 = vld [vmem:[#allocation2 + $0x150] sm:$0xff]
      %v2815 = vld [vmem:[#allocation2 + $0x158] sm:$0xff]
      %v2816 = vld [vmem:[#allocation2 + $0x160] sm:$0xff]
      %v2817 = vld [vmem:[#allocation2 + $0x168] sm:$0xff]
      %v2818 = vld [vmem:[#allocation2 + $0x170] sm:$0xff]
      %v2819 = vld [vmem:[#allocation2 + $0x178] sm:$0xff]
      %v2820 = vld [vmem:[#allocation2 + $0x180] sm:$0xff]
      %v2821 = vld [vmem:[#allocation2 + $0x188] sm:$0xff]
      %v2822 = vld [vmem:[#allocation2 + $0x190] sm:$0xff]
      %v2823 = vld [vmem:[#allocation2 + $0x198] sm:$0xff]
      %v2824 = vld [vmem:[#allocation2 + $0x1a0] sm:$0xff]
      %v2825 = vld [vmem:[#allocation2 + $0x1a8] sm:$0xff]
      %s2826 = scalar_lea.vmem %s2, 8
      %v2827 = vld [vmem:[%s2826] sm:$0xff]
      %2829 = vset.pattern.permute.xlu0 0
      %2830 = vperm.xlu0 %2829, %v2827
      %v2831 = vpop.permute.xlu0 %2830
      %v2834 = vunpack.c.l.b16 %v2771
      %v2835 = vunpack.c.h.b16 %v2771
      %v2836 = vpack.c.b16 %v2834, %v2834
      %v2837 = vpack.c.b16 %v2835, %v2835
      %v2893 = vunpack.c.l.b16 %v2772
      %v2894 = vunpack.c.h.b16 %v2772
      %v2895 = vunpack.c.l.b16 %v2773
      %v2896 = vunpack.c.h.b16 %v2773
      %v2897 = vunpack.c.l.b16 %v2774
      %v2898 = vunpack.c.h.b16 %v2774
      %v2899 = vunpack.c.l.b16 %v2775
      %v2900 = vunpack.c.h.b16 %v2775
      %v2901 = vunpack.c.l.b16 %v2776
      %v2902 = vunpack.c.h.b16 %v2776
      %v2903 = vunpack.c.l.b16 %v2777
      %v2904 = vunpack.c.h.b16 %v2777
      %v2905 = vunpack.c.l.b16 %v2778
      %v2906 = vunpack.c.h.b16 %v2778
      %v2907 = vunpack.c.l.b16 %v2779
      %v2908 = vunpack.c.h.b16 %v2779
      %v2909 = vunpack.c.l.b16 %v2780
      %v2910 = vunpack.c.h.b16 %v2780
      %v2911 = vunpack.c.l.b16 %v2781
      %v2912 = vunpack.c.h.b16 %v2781
      %v2913 = vunpack.c.l.b16 %v2782
      %v2914 = vunpack.c.h.b16 %v2782
      %v2915 = vunpack.c.l.b16 %v2783
      %v2916 = vunpack.c.h.b16 %v2783
      %v2917 = vunpack.c.l.b16 %v2784
      %v2918 = vunpack.c.h.b16 %v2784
      %v2919 = vunpack.c.l.b16 %v2785
      %v2920 = vunpack.c.h.b16 %v2785
      %v2921 = vunpack.c.l.b16 %v2786
      %v2922 = vunpack.c.h.b16 %v2786
      %v2923 = vunpack.c.l.b16 %v2787
      %v2924 = vunpack.c.h.b16 %v2787
      %v2925 = vunpack.c.l.b16 %v2788
      %v2926 = vunpack.c.h.b16 %v2788
      %v2927 = vunpack.c.l.b16 %v2789
      %v2928 = vunpack.c.h.b16 %v2789
      %v2929 = vunpack.c.l.b16 %v2790
      %v2930 = vunpack.c.h.b16 %v2790
      %v2931 = vunpack.c.l.b16 %v2791
      %v2932 = vunpack.c.h.b16 %v2791
      %v2933 = vunpack.c.l.b16 %v2792
      %v2934 = vunpack.c.h.b16 %v2792
      %v2935 = vunpack.c.l.b16 %v2793
      %v2936 = vunpack.c.h.b16 %v2793
      %v2937 = vunpack.c.l.b16 %v2794
      %v2938 = vunpack.c.h.b16 %v2794
      %v2939 = vunpack.c.l.b16 %v2795
      %v2940 = vunpack.c.h.b16 %v2795
      %v2941 = vunpack.c.l.b16 %v2796
      %v2942 = vunpack.c.h.b16 %v2796
      %v2943 = vunpack.c.l.b16 %v2797
      %v2944 = vunpack.c.h.b16 %v2797
      %v2945 = vunpack.c.l.b16 %v2798
      %v2946 = vunpack.c.h.b16 %v2798
      %v2947 = vunpack.c.l.b16 %v2799
      %v2948 = vunpack.c.h.b16 %v2799
      %v2949 = vunpack.c.l.b16 %v2800
      %v2950 = vunpack.c.h.b16 %v2800
      %v2951 = vunpack.c.l.b16 %v2801
      %v2952 = vunpack.c.h.b16 %v2801
      %v2953 = vunpack.c.l.b16 %v2802
      %v2954 = vunpack.c.h.b16 %v2802
      %v2955 = vunpack.c.l.b16 %v2803
      %v2956 = vunpack.c.h.b16 %v2803
      %v2957 = vunpack.c.l.b16 %v2804
      %v2958 = vunpack.c.h.b16 %v2804
      %v2959 = vunpack.c.l.b16 %v2805
      %v2960 = vunpack.c.h.b16 %v2805
      %v2961 = vunpack.c.l.b16 %v2806
      %v2962 = vunpack.c.h.b16 %v2806
      %v2963 = vunpack.c.l.b16 %v2807
      %v2964 = vunpack.c.h.b16 %v2807
      %v2965 = vunpack.c.l.b16 %v2808
      %v2966 = vunpack.c.h.b16 %v2808
      %v2967 = vunpack.c.l.b16 %v2809
      %v2968 = vunpack.c.h.b16 %v2809
      %v2969 = vunpack.c.l.b16 %v2810
      %v2970 = vunpack.c.h.b16 %v2810
      %v2971 = vunpack.c.l.b16 %v2811
      %v2972 = vunpack.c.h.b16 %v2811
      %v2973 = vunpack.c.l.b16 %v2812
      %v2974 = vunpack.c.h.b16 %v2812
      %v2975 = vunpack.c.l.b16 %v2813
      %v2976 = vunpack.c.h.b16 %v2813
      %v2977 = vunpack.c.l.b16 %v2814
      %v2978 = vunpack.c.h.b16 %v2814
      %v2979 = vunpack.c.l.b16 %v2815
      %v2980 = vunpack.c.h.b16 %v2815
      %v2981 = vunpack.c.l.b16 %v2816
      %v2982 = vunpack.c.h.b16 %v2816
      %v2983 = vunpack.c.l.b16 %v2817
      %v2984 = vunpack.c.h.b16 %v2817
      %v2985 = vunpack.c.l.b16 %v2818
      %v2986 = vunpack.c.h.b16 %v2818
      %v2987 = vunpack.c.l.b16 %v2819
      %v2988 = vunpack.c.h.b16 %v2819
      %v2989 = vunpack.c.l.b16 %v2820
      %v2990 = vunpack.c.h.b16 %v2820
      %v2991 = vunpack.c.l.b16 %v2821
      %v2992 = vunpack.c.h.b16 %v2821
      %v2993 = vunpack.c.l.b16 %v2822
      %v2994 = vunpack.c.h.b16 %v2822
      %v2995 = vunpack.c.l.b16 %v2823
      %v2996 = vunpack.c.h.b16 %v2823
      %v2997 = vunpack.c.l.b16 %v2824
      %v2998 = vunpack.c.h.b16 %v2824
      %v2999 = vunpack.c.l.b16 %v2825
      %v3000 = vunpack.c.h.b16 %v2825
      %v3001 = vpack.c.b16 %v2897, %v2893
      %v3002 = vpack.c.b16 %v2898, %v2894
      %v3003 = vpack.c.b16 %v2899, %v2895
      %v3004 = vpack.c.b16 %v2900, %v2896
      %v3005 = vpack.c.b16 %v2905, %v2901
      %v3006 = vpack.c.b16 %v2906, %v2902
      %v3007 = vpack.c.b16 %v2907, %v2903
      %v3008 = vpack.c.b16 %v2908, %v2904
      %v3009 = vpack.c.b16 %v2913, %v2909
      %v3010 = vpack.c.b16 %v2914, %v2910
      %v3011 = vpack.c.b16 %v2915, %v2911
      %v3012 = vpack.c.b16 %v2916, %v2912
      %v3013 = vpack.c.b16 %v2921, %v2917
      %v3014 = vpack.c.b16 %v2922, %v2918
      %v3015 = vpack.c.b16 %v2923, %v2919
      %v3016 = vpack.c.b16 %v2924, %v2920
      %v3017 = vpack.c.b16 %v2929, %v2925
      %v3018 = vpack.c.b16 %v2930, %v2926
      %v3019 = vpack.c.b16 %v2931, %v2927
      %v3020 = vpack.c.b16 %v2932, %v2928
      %v3021 = vpack.c.b16 %v2937, %v2933
      %v3022 = vpack.c.b16 %v2938, %v2934
      %v3023 = vpack.c.b16 %v2939, %v2935
      %v3024 = vpack.c.b16 %v2940, %v2936
      %v3025 = vpack.c.b16 %v2945, %v2941
      %v3026 = vpack.c.b16 %v2946, %v2942
      %v3027 = vpack.c.b16 %v2947, %v2943
      %v3028 = vpack.c.b16 %v2948, %v2944
      %v3029 = vpack.c.b16 %v2953, %v2949
      %v3030 = vpack.c.b16 %v2954, %v2950
      %v3031 = vpack.c.b16 %v2955, %v2951
      %v3032 = vpack.c.b16 %v2956, %v2952
      %v3033 = vpack.c.b16 %v2961, %v2957
      %v3034 = vpack.c.b16 %v2962, %v2958
      %v3035 = vpack.c.b16 %v2963, %v2959
      %v3036 = vpack.c.b16 %v2964, %v2960
      %v3037 = vpack.c.b16 %v2969, %v2965
      %v3038 = vpack.c.b16 %v2970, %v2966
      %v3039 = vpack.c.b16 %v2971, %v2967
      %v3040 = vpack.c.b16 %v2972, %v2968
      %v3041 = vpack.c.b16 %v2977, %v2973
      %v3042 = vpack.c.b16 %v2978, %v2974
      %v3043 = vpack.c.b16 %v2979, %v2975
      %v3044 = vpack.c.b16 %v2980, %v2976
      %v3045 = vpack.c.b16 %v2985, %v2981
      %v3046 = vpack.c.b16 %v2986, %v2982
      %v3047 = vpack.c.b16 %v2987, %v2983
      %v3048 = vpack.c.b16 %v2988, %v2984
      %v3049 = vpack.c.b16 %v2993, %v2989
      %v3050 = vpack.c.b16 %v2994, %v2990
      %v3051 = vpack.c.b16 %v2995, %v2991
      %v3052 = vpack.c.b16 %v2996, %v2992
      %v3053 = vpack.c.b16 %v2997, %v2997
      %v3054 = vpack.c.b16 %v2998, %v2998
      %v3055 = vpack.c.b16 %v2999, %v2999
      %v3056 = vpack.c.b16 %v3000, %v3000
      %v3110 = vsel %vm1865, %v2837, 0
      %v3113 = vsel %vm1869, %v3053, 0
      %v3116 = vsel %vm1869, %v3054, 0
      %v3119 = vsel %vm1869, %v3055, 0
      %v3122 = vsel %vm1869, %v3056, 0
      %3124 = vmatprep.subr.bf16.mxu0 %v3030
      %3125 = vmatpush1.bf16.msra.mxu0 %v3029
      %3126 = vmatprep.subr.bf16.mxu0 %v3026
      %3127 = vmatpush1.bf16.msra.mxu0 %v3025
      %3128 = vmatprep.subr.bf16.mxu0 %v3022
      %3129 = vmatpush1.bf16.msra.mxu0 %v3021
      %3130 = vmatprep.subr.bf16.mxu0 %v3018
      %3131 = vmatpush1.bf16.msra.mxu0 %v3017
      %3132 = vmatprep.subr.bf16.mxu0 %v3014
      %3133 = vmatpush1.bf16.msra.mxu0 %v3013
      %3134 = vmatprep.subr.bf16.mxu0 %v3010
      %3135 = vmatpush1.bf16.msra.mxu0 %v3009
      %3136 = vmatprep.subr.bf16.mxu0 %v3006
      %3137 = vmatpush1.bf16.msra.mxu0 %v3005
      %3138 = vmatprep.subr.bf16.mxu0 %v3002
      %3139 = vmatpush1.bf16.msra.mxu0 %v3001
      %3140 = vmatprep.subr.bf16.mxu0 0
      %3141 = vmatpush2.bf16.msra.mxu0 0
      %3142 = vmatprep.subr.bf16.mxu0 0
      %3143 = vmatpush2.bf16.msra.mxu0 0
      %3144 = vmatprep.subr.bf16.mxu0 %v3116
      %3145 = vmatpush2.bf16.msra.mxu0 %v3113
      %3146 = vmatprep.subr.bf16.mxu0 %v3050
      %3147 = vmatpush2.bf16.msra.mxu0 %v3049
      %3148 = vmatprep.subr.bf16.mxu0 %v3046
      %3149 = vmatpush2.bf16.msra.mxu0 %v3045
      %3150 = vmatprep.subr.bf16.mxu0 %v3042
      %3151 = vmatpush2.bf16.msra.mxu0 %v3041
      %3152 = vmatprep.subr.bf16.mxu0 %v3038
      %3153 = vmatpush2.bf16.msra.mxu0 %v3037
      %3154 = vmatprep.subr.bf16.mxu0 %v3034
      %3155 = vmatpush2.bf16.msra.mxu0 %v3033
      %3156 = vmatprep.mubr.bf16.mxu0 %v3110
      %3157 = vmatmul.mubr.bf16.gmra.mxu0 %v2836
      %v3158 = vpop.f32.mrf.mxu0
      %v3159 = vadd.f32 %v2831, %v3158
      %v3160 = vpop.f32.mrf.mxu0
      %v3161 = vadd.f32 %v2831, %v3160
      %v3162 = vpop.f32.mrf.mxu0
      %v3163 = vpop.f32.mrf.mxu0
      %3164 = vdwg.mxu0
      %3165 = vmatprep.subr.bf16.mxu0 %v3032
      %3166 = vmatpush1.bf16.msra.mxu0 %v3031
      %3167 = vmatprep.subr.bf16.mxu0 %v3028
      %3168 = vmatpush1.bf16.msra.mxu0 %v3027
      %3169 = vmatprep.subr.bf16.mxu0 %v3024
      %3170 = vmatpush1.bf16.msra.mxu0 %v3023
      %3171 = vmatprep.subr.bf16.mxu0 %v3020
      %3172 = vmatpush1.bf16.msra.mxu0 %v3019
      %3173 = vmatprep.subr.bf16.mxu0 %v3016
      %3174 = vmatpush1.bf16.msra.mxu0 %v3015
      %3175 = vmatprep.subr.bf16.mxu0 %v3012
      %3176 = vmatpush1.bf16.msra.mxu0 %v3011
      %3177 = vmatprep.subr.bf16.mxu0 %v3008
      %3178 = vmatpush1.bf16.msra.mxu0 %v3007
      %3179 = vmatprep.subr.bf16.mxu0 %v3004
      %3180 = vmatpush1.bf16.msra.mxu0 %v3003
      %3181 = vmatprep.subr.bf16.mxu0 0
      %3182 = vmatpush2.bf16.msra.mxu0 0
      %3183 = vmatprep.subr.bf16.mxu0 0
      %3184 = vmatpush2.bf16.msra.mxu0 0
      %3185 = vmatprep.subr.bf16.mxu0 %v3122
      %3186 = vmatpush2.bf16.msra.mxu0 %v3119
      %3187 = vmatprep.subr.bf16.mxu0 %v3052
      %3188 = vmatpush2.bf16.msra.mxu0 %v3051
      %3189 = vmatprep.subr.bf16.mxu0 %v3048
      %3190 = vmatpush2.bf16.msra.mxu0 %v3047
      %3191 = vmatprep.subr.bf16.mxu0 %v3044
      %3192 = vmatpush2.bf16.msra.mxu0 %v3043
      %3193 = vmatprep.subr.bf16.mxu0 %v3040
      %3194 = vmatpush2.bf16.msra.mxu0 %v3039
      %3195 = vmatprep.subr.bf16.mxu0 %v3036
      %3196 = vmatpush2.bf16.msra.mxu0 %v3035
      %3197 = vmatprep.mubr.bf16.mxu0 %v3110
      %3198 = vmatmul.mubr.bf16.gmra.mxu0 %v2836
      %v3199 = vpop.f32.mrf.mxu0
      %v3200 = vadd.f32 %v2831, %v3199
      %v3201 = vpop.f32.mrf.mxu0
      %v3202 = vadd.f32 %v2831, %v3201
      %v3203 = vpop.f32.mrf.mxu0
      %v3204 = vpop.f32.mrf.mxu0
      %3205 = vdwg.mxu0
      %v3206 = vadd.f32 %v3159, %v199
      %v3207 = vadd.f32 %v3161, %v200
      %v3208 = vadd.f32 %v3200, %v201
      %v3209 = vadd.f32 %v3202, %v202
      %v3210 = vmax.f32 %v3206, 0.0
      %v3211 = vmax.f32 %v3207, 0.0
      %v3212 = vmax.f32 %v3208, 0.0
      %v3213 = vmax.f32 %v3209, 0.0
      %3214 = vst [vmem:[%s197] sm:$0xff] %v3210
      %3215 = vst [vmem:[%s197 + $0x8] sm:$0xff] %v3211
      %3216 = vst [vmem:[%s197 + $0x10] sm:$0xff] %v3212
      %3217 = vst [vmem:[%s197 + $0x18] sm:$0xff] %v3213
      %p3218 = scmp.lt.s32.totalorder %s15, 3
      %s3219 = scalar_select %p3218, %s15, 3
      %s3220 = smul.addr %s3219, 4
      %s3221 = smul.addr %s3220, 8
      %s3222 = scalar_lea.vmem %s4, %s3221
      // Predicated region
      $region37: #{residual_conv_block_forward.1} parent=35 // pred_check
        %p3223 = pneg %p122
      $region38: #{residual_conv_block_forward.1} parent=35 // pred_check_branch
        %3225 = sbr.rel (%p3223) target = $region40
      $region39: #{residual_conv_block_forward.1} parent=35 // pred_region
        _
      $region40: #{residual_conv_block_forward.1} parent=35 // pred_fallthru
        _
    $region36: #{residual_conv_block_forward.1} parent=5 // pred_fallthru
      _
    %p3226 = scmp.le.s32.totalorder 2, %s10
    // Predicated region
    $region41: #{residual_conv_block_forward.1} parent=5 // pred_check
      %p3227 = pneg %p3226
    $region42: #{residual_conv_block_forward.1} parent=5 // pred_check_branch
      %3229 = sbr.rel (%p3227) target = $region44
    $region43: #{residual_conv_block_forward.1} parent=5 // pred_region
      %s3230 = ssub.s32 %s10, 2
      // Predicated region
      $region45: #{residual_conv_block_forward.1} parent=43 // pred_check
        %p3231 = pneg %p128
      $region46: #{residual_conv_block_forward.1} parent=43 // pred_check_branch
        %3233 = sbr.rel (%p3231) target = $region48
      $region47: #{residual_conv_block_forward.1} parent=43 // pred_region
        %p3234 = scmp.lt.s32.totalorder %s16, 3
        %s3235 = scalar_select %p3234, %s16, 3
        %s3236 = smul.addr %s3235, 4
        %s3237 = smul.addr %s3236, 8
        %s3238 = scalar_lea.vmem %s4, %s3237
      $region48: #{residual_conv_block_forward.1} parent=43 // pred_fallthru
        _
    $region44: #{residual_conv_block_forward.1} parent=5 // pred_fallthru
      _
  $region6: #{residual_conv_block_forward.1} parent=0 // loop_footer
    %s14 = sadd.s32 1, %s10
  $region7: #{residual_conv_block_forward.1} parent=0 // loop_footer_branch
    %9 = sbr.rel target = $region3
  $region8: #{residual_conv_block_forward.1} parent=0 // loop_exit
    _

</llo_original>
